<compile_context>
chip_gen: v7x
topology: tpu7x:2x2x1
jax: 0.10.0
libtpu: 0.0.40
codegen_flags: <defaults>
</compile_context>

<pallas_src>
import math

import jax
import jax.numpy as jnp
from jax.experimental import pallas as pl
from jax.experimental.pallas import tpu as pltpu

# ----------------------- small synthetic configuration -----------------------
B = 2                        # batch
H_IMG, W_IMG = 18, 18        # image size (GeneralizedRCNNTransform resize skipped)
C_IN = 3
C_FEAT = 32                  # "out_channels" (128 in the module; kept small)
KSIZE = 3
H_FEAT, W_FEAT = H_IMG - 2, W_IMG - 2          # valid 3x3 conv -> 16 x 16 features
HW = H_FEAT * W_FEAT                           # 256 valid positions per image
H_PAD, W_PAD = H_FEAT + 2, W_FEAT + 2          # zero-halo grid for the RPN 3x3 conv
HW_PAD = H_PAD * W_PAD                         # 324
HW_PAD_ALIGN = ((HW_PAD + 127) // 128) * 128   # 384 (lane-aligned)
K_STEM = KSIZE * KSIZE * C_IN                  # 27
POOL = 7                     # MultiScaleRoIAlign output_size
REPR = 128                   # TwoMLPHead representation_size (1024 in the module)
N_ANCHOR = 15                # 5 sizes x 3 aspect ratios
RPN_OUT = 5 * N_ANCHOR       # 15 objectness + 60 bbox deltas (merged 1x1 heads)
PROPOSALS_PER_IMG = 8        # rpn_post_nms_top_n / detections_per_img, kept small
R_TOT = B * PROPOSALS_PER_IMG
R_COLS = R_TOT * POOL * POOL                   # 784 ROI-major pooled columns
R_COLS_PAD = ((R_COLS + 127) // 128) * 128     # 896 (lane-aligned)
BOX_OUT_PAD = 128            # lane-dense padded box-predictor output


# ------------------------------- Pallas kernels -------------------------------
def _stem_rpn_kernel(p_ref, mask_ref, swT_ref, sbT_ref, rwT_ref, rbT_ref,
                     hwT_ref, hbT_ref, featT_ref, rpnT_ref, cat_ref):
    # Backbone stem conv (ImageNet normalization folded into the weights) + ReLU6,
    # computed over the zero-padded 18x18 grid; the halo ring / alignment pad is
    # zeroed with a single mask multiply so the rolls below read zeros at borders.
    x = jnp.dot(swT_ref[...], p_ref[...], preferred_element_type=jnp.float32) + sbT_ref[...]
    x = jnp.clip(x, 0.0, 6.0) * mask_ref[...]
    featT_ref[...] = x                               # (C_FEAT, 384) lane-dense

    # RPN shared 3x3 "same" conv: 9 lane rotations written into one (288, 384)
    # VMEM scratch, contracted with a single K=288 MXU matmul.
    for t in range(KSIZE * KSIZE):
        off = (t // KSIZE - 1) * W_PAD + (t % KSIZE - 1)
        shifted = x if off == 0 else pltpu.roll(x, shift=(-off) % HW_PAD_ALIGN, axis=1)
        cat_ref[t * C_FEAT:(t + 1) * C_FEAT, :] = shifted
    h = jnp.maximum(jnp.dot(rwT_ref[...], cat_ref[...],
                            preferred_element_type=jnp.float32) + rbT_ref[...], 0.0)

    # Merged 1x1 objectness (15) + bbox (60) heads; (75, 384) output is lane-dense.
    rpnT_ref[...] = jnp.dot(hwT_ref[...], h, preferred_element_type=jnp.float32) + hbT_ref[...]


def stem_rpn(patches_T, mask, swT, sbT, rwT, rbT, hwT, hbT):
    return pl.pallas_call(
        _stem_rpn_kernel,
        out_shape=(jax.ShapeDtypeStruct((C_FEAT, B * HW_PAD_ALIGN), jnp.float32),
                   jax.ShapeDtypeStruct((RPN_OUT, B * HW_PAD_ALIGN), jnp.float32)),
        grid=(B,),
        in_specs=[
            pl.BlockSpec((K_STEM, HW_PAD_ALIGN), lambda b: (0, b)),
            pl.BlockSpec((1, HW_PAD_ALIGN), lambda b: (0, 0)),
            pl.BlockSpec((C_FEAT, K_STEM), lambda b: (0, 0)),
            pl.BlockSpec((C_FEAT, 1), lambda b: (0, 0)),
            pl.BlockSpec((C_FEAT, KSIZE * KSIZE * C_FEAT), lambda b: (0, 0)),
            pl.BlockSpec((C_FEAT, 1), lambda b: (0, 0)),
            pl.BlockSpec((RPN_OUT, C_FEAT), lambda b: (0, 0)),
            pl.BlockSpec((RPN_OUT, 1), lambda b: (0, 0)),
        ],
        out_specs=[
            pl.BlockSpec((C_FEAT, HW_PAD_ALIGN), lambda b: (0, b)),
            pl.BlockSpec((RPN_OUT, HW_PAD_ALIGN), lambda b: (0, b)),
        ],
        scratch_shapes=[pltpu.VMEM((KSIZE * KSIZE * C_FEAT, HW_PAD_ALIGN), jnp.float32)],
        compiler_params=pltpu.CompilerParams(dimension_semantics=("parallel",)),
    )(patches_T, mask, swT, sbT, rwT, rbT, hwT, hbT)


def _roi_pool_kernel(feat_ref, wmat_ref, out_ref):
    # RoIAlign as one MXU matmul against the dense bilinear-interpolation matrix.
    out_ref[...] = jnp.dot(feat_ref[...], wmat_ref[...], preferred_element_type=jnp.float32)


def roi_pool(featT, wmatT):
    # Pipelined over 7 lane chunks: wmat DMA overlaps the matmul and on v7x the
    # chunks shard across both TensorCores.
    return pl.pallas_call(
        _roi_pool_kernel,
        out_shape=jax.ShapeDtypeStruct((C_FEAT, R_COLS_PAD), jnp.float32),
        grid=(R_COLS_PAD // 128,),
        in_specs=[
            pl.BlockSpec((C_FEAT, B * HW), lambda j: (0, 0)),
            pl.BlockSpec((B * HW, 128), lambda j: (0, j)),
        ],
        out_specs=pl.BlockSpec((C_FEAT, 128), lambda j: (0, j)),
        compiler_params=pltpu.CompilerParams(dimension_semantics=("parallel",)),
    )(featT, wmatT)


def _mlp_head_kernel(x_ref, w6_ref, b6_ref, w7_ref, b7_ref, wp_ref, bp_ref,
                     ent_ref, box_ref):
    # TwoMLPHead (fc6 + fc7, ReLU) + box predictor, one kernel, 3 MXU matmuls.
    h = jnp.maximum(jnp.dot(x_ref[...], w6_ref[...],
                            preferred_element_type=jnp.float32) + b6_ref[...], 0.0)
    h = jnp.maximum(jnp.dot(h, w7_ref[...],
                            preferred_element_type=jnp.float32) + b7_ref[...], 0.0)
    ent_ref[...] = h
    box_ref[...] = jnp.dot(h, wp_ref[...], preferred_element_type=jnp.float32) + bp_ref[...]


def mlp_head(pooled_r, w6, b6, w7, b7, wp_pad, bp_pad):
    # TODO(synk): at production sizes (C_FEAT=128, REPR=1024) fc6_w (~26 MB f32)
    # should be K-chunked over a grid axis (scratch accumulator + pl.when) and
    # stored bf16 to stay inside v7x's 64 MiB VMEM; at this toy size (~1 MB of
    # operands) a single resident block is fastest.
    return pl.pallas_call(
        _mlp_head_kernel,
        out_shape=(jax.ShapeDtypeStruct((R_TOT, REPR), jnp.float32),
                   jax.ShapeDtypeStruct((R_TOT, BOX_OUT_PAD), jnp.float32)),
        grid=(1,),
        in_specs=[
            pl.BlockSpec((R_TOT, POOL * POOL * C_FEAT), lambda i: (0, 0)),
            pl.BlockSpec((POOL * POOL * C_FEAT, REPR), lambda i: (0, 0)),
            pl.BlockSpec((1, REPR), lambda i: (0, 0)),
            pl.BlockSpec((REPR, REPR), lambda i: (0, 0)),
            pl.BlockSpec((1, REPR), lambda i: (0, 0)),
            pl.BlockSpec((REPR, BOX_OUT_PAD), lambda i: (0, 0)),
            pl.BlockSpec((1, BOX_OUT_PAD), lambda i: (0, 0)),
        ],
        out_specs=[
            pl.BlockSpec((R_TOT, REPR), lambda i: (0, 0)),
            pl.BlockSpec((R_TOT, BOX_OUT_PAD), lambda i: (0, 0)),
        ],
    )(pooled_r, w6, b6, w7, b7, wp_pad, bp_pad)


# ---------------------------------- glue (JAX) ----------------------------------
def im2col_3x3(x):
    # x: (B, H, W, C) -> (B, H-2, W-2, 9*C), tap-major / channel-minor ordering
    B_, H_, W_, _ = x.shape
    Ho, Wo = H_ - 2, W_ - 2
    cols = []
    for kh in range(3):
        for kw in range(3):
            cols.append(x[:, kh:kh + Ho, kw:kw + Wo, :])
    return jnp.concatenate(cols, axis=-1)


def make_anchors(hf, wf, h_img, w_img):
    # AnchorGenerator(sizes, aspect_ratios) on a single feature level (sizes shrunk to image)
    sizes = jnp.array([2.0, 4.0, 6.0, 8.0, 10.0], jnp.float32)
    ratios = jnp.array([0.5, 1.0, 2.0], jnp.float32)
    h_ratios = jnp.sqrt(ratios)
    w_ratios = 1.0 / h_ratios
    ws = (sizes[:, None] * w_ratios[None, :]).reshape(-1)
    hs = (sizes[:, None] * h_ratios[None, :]).reshape(-1)
    base = jnp.stack([-ws / 2, -hs / 2, ws / 2, hs / 2], axis=-1)     # (A, 4)
    stride_y = h_img / hf
    stride_x = w_img / wf
    ys = (jnp.arange(hf, dtype=jnp.float32) + 0.5) * stride_y
    xs = (jnp.arange(wf, dtype=jnp.float32) + 0.5) * stride_x
    cy, cx = jnp.meshgrid(ys, xs, indexing="ij")
    shifts = jnp.stack([cx, cy, cx, cy], axis=-1).reshape(-1, 4)      # (hf*wf, 4)
    anchors = shifts[:, None, :] + base[None, :, :]
    return anchors.reshape(-1, 4)                                     # (hf*wf*A, 4)


def decode_boxes(deltas, anchors):
    # torchvision BoxCoder.decode with weights (1, 1, 1, 1)
    wa = anchors[:, 2] - anchors[:, 0]
    ha = anchors[:, 3] - anchors[:, 1]
    cxa = anchors[:, 0] + 0.5 * wa
    cya = anchors[:, 1] + 0.5 * ha
    dx, dy, dw, dh = deltas[..., 0], deltas[..., 1], deltas[..., 2], deltas[..., 3]
    clamp = math.log(1000.0 / 16.0)
    dw = jnp.minimum(dw, clamp)
    dh = jnp.minimum(dh, clamp)
    cx = dx * wa[None, :] + cxa[None, :]
    cy = dy * ha[None, :] + cya[None, :]
    w = jnp.exp(dw) * wa[None, :]
    h = jnp.exp(dh) * ha[None, :]
    return jnp.stack([cx - 0.5 * w, cy - 0.5 * h, cx + 0.5 * w, cy + 0.5 * h], axis=-1)


def clip_boxes(boxes, h_img, w_img):
    x1 = jnp.clip(boxes[..., 0], 0.0, float(w_img))
    y1 = jnp.clip(boxes[..., 1], 0.0, float(h_img))
    x2 = jnp.clip(boxes[..., 2], 0.0, float(w_img))
    y2 = jnp.clip(boxes[..., 3], 0.0, float(h_img))
    return jnp.stack([x1, y1, x2, y2], axis=-1)


def build_roi_interp_matrix_T(proposals, spatial_scale):
    # proposals: (B, P, 4) x1,y1,x2,y2 in image coords. Returns the dense bilinear
    # interpolation matrix (B*HW, R_COLS_PAD) with columns in ROI-major order
    # (b, p, bin_y, bin_x) and the 4 bilinear weights scattered via one-hot rows.
    # TODO(synk): at production feature-map sizes this should become a
    # scalar-prefetched gather (PrefetchScalarGridSpec) instead of a dense matrix.
    Bp, P, _ = proposals.shape
    px1 = proposals[..., 0] * spatial_scale
    py1 = proposals[..., 1] * spatial_scale
    px2 = proposals[..., 2] * spatial_scale
    py2 = proposals[..., 3] * spatial_scale
    w = jnp.maximum(px2 - px1, 1e-3)
    h = jnp.maximum(py2 - py1, 1e-3)
    steps = (jnp.arange(POOL, dtype=jnp.float32) + 0.5) / POOL
    ys = py1[..., None, None] + steps[None, None, :, None] * h[..., None, None]   # (B,P,POOL,1)
    xs = px1[..., None, None] + steps[None, None, None, :] * w[..., None, None]   # (B,P,1,POOL)
    y = jnp.broadcast_to(jnp.clip(ys, 0.0, H_FEAT - 1.0), (Bp, P, POOL, POOL))
    x = jnp.broadcast_to(jnp.clip(xs, 0.0, W_FEAT - 1.0), (Bp, P, POOL, POOL))
    y0f = jnp.floor(y)
    x0f = jnp.floor(x)
    y0 = y0f.astype(jnp.int32)
    x0 = x0f.astype(jnp.int32)
    y1i = jnp.minimum(y0 + 1, H_FEAT - 1)
    x1i = jnp.minimum(x0 + 1, W_FEAT - 1)
    ly = y - y0f
    lx = x - x0f

    b_off = (jnp.arange(Bp, dtype=jnp.int32) * HW)[:, None, None, None]
    idxs = (b_off + y0 * W_FEAT + x0,  b_off + y0 * W_FEAT + x1i,
            b_off + y1i * W_FEAT + x0, b_off + y1i * W_FEAT + x1i)
    wts = ((1.0 - ly) * (1.0 - lx), (1.0 - ly) * lx, ly * (1.0 - lx), ly * lx)

    total = Bp * HW
    wmat = jnp.zeros((Bp * P * POOL * POOL, total), jnp.float32)       # ROI-major rows
    for idx, wt in zip(idxs, wts):
        wmat = wmat + (jax.nn.one_hot(idx.reshape(-1), total, dtype=jnp.float32)
                       * wt.reshape(-1)[:, None])
    wmatT = wmat.T                                                     # (B*HW, R_COLS)
    return jnp.pad(wmatT, ((0, 0), (0, R_COLS_PAD - Bp * P * POOL * POOL)))


def init_params(key):
    ks = jax.random.split(key, 14)
    s = 0.1
    f32 = jnp.float32
    return {
        "stem_w": jax.random.normal(ks[0], (KSIZE, KSIZE, C_IN, C_FEAT), f32) * s,
        "stem_b": jax.random.normal(ks[1], (1, C_FEAT), f32) * s,
        "rpn_conv_w": jax.random.normal(ks[2], (KSIZE, KSIZE, C_FEAT, C_FEAT), f32) * s,
        "rpn_conv_b": jax.random.normal(ks[3], (1, C_FEAT), f32) * s,
        "rpn_cls_w": jax.random.normal(ks[4], (C_FEAT, N_ANCHOR), f32) * s,
        "rpn_cls_b": jax.random.normal(ks[5], (1, N_ANCHOR), f32) * s,
        "rpn_box_w": jax.random.normal(ks[6], (C_FEAT, 4 * N_ANCHOR), f32) * s,
        "rpn_box_b": jax.random.normal(ks[7], (1, 4 * N_ANCHOR), f32) * s,
        "fc6_w": jax.random.normal(ks[8], (C_FEAT * POOL * POOL, REPR), f32) * s,
        "fc6_b": jax.random.normal(ks[9], (1, REPR), f32) * s,
        "fc7_w": jax.random.normal(ks[10], (REPR, REPR), f32) * s,
        "fc7_b": jax.random.normal(ks[11], (1, REPR), f32) * s,
        "pred_w": jax.random.normal(ks[12], (REPR, 4), f32) * s,
        "pred_b": jax.random.normal(ks[13], (1, 4), f32) * s,
    }


def entity_rcnn_forward(params, images_nchw):
    """Inference-mode EntityRCNN.forward -> (losses, detections)."""
    imgs = jnp.transpose(images_nchw, (0, 2, 3, 1)).astype(jnp.float32)   # NCHW -> NHWC
    B_, H_, W_, _ = imgs.shape

    # GeneralizedRCNNTransform normalization folded into the stem conv weights.
    # TODO(synk): min_size/max_size image resizing of GeneralizedRCNNTransform not implemented.
    mean = jnp.array([0.485, 0.456, 0.406], jnp.float32)
    std = jnp.array([0.229, 0.224, 0.225], jnp.float32)
    mean_k = jnp.tile(mean, KSIZE * KSIZE)[None, :]                       # (1, 27) tap-major
    std_k = jnp.tile(std, KSIZE * KSIZE)[None, :]
    stem_w = params["stem_w"].reshape(K_STEM, C_FEAT)
    stem_w_eff = stem_w / std_k.T                                         # (27, C_FEAT)
    stem_b_eff = params["stem_b"] - (mean_k / std_k) @ stem_w             # (1, C_FEAT)

    # Channels-on-sublanes (transposed) weights for the fused stem + RPN kernel.
    swT = stem_w_eff.T                                                    # (C_FEAT, 27)
    sbT = stem_b_eff.T                                                    # (C_FEAT, 1)
    rwT = params["rpn_conv_w"].reshape(KSIZE * KSIZE * C_FEAT, C_FEAT).T  # (C_FEAT, 288)
    rbT = params["rpn_conv_b"].T                                          # (C_FEAT, 1)
    head_w = jnp.concatenate([params["rpn_cls_w"], params["rpn_box_w"]], axis=1)
    head_b = jnp.concatenate([params["rpn_cls_b"], params["rpn_box_b"]], axis=1)
    hwT = head_w.T                                                        # (75, C_FEAT)
    hbT = head_b.T                                                        # (75, 1)

    # im2col over a zero-padded 20x20 image -> 18x18 "same"-grid patches; the halo
    # ring is zeroed in-kernel so the RPN 3x3 conv sees true zero padding.
    # TODO(synk): pretrained MobileNetV2 feature stack replaced by a single conv stem.
    imgs_pad = jnp.pad(imgs, ((0, 0), (1, 1), (1, 1), (0, 0)))
    patches = im2col_3x3(imgs_pad).reshape(B_, HW_PAD, K_STEM)
    patches = jnp.pad(patches, ((0, 0), (0, HW_PAD_ALIGN - HW_PAD), (0, 0)))
    patches_T = jnp.transpose(patches, (2, 0, 1)).reshape(K_STEM, B_ * HW_PAD_ALIGN)

    interior = jnp.zeros((H_PAD, W_PAD), jnp.float32)
    interior = interior.at[1:1 + H_FEAT, 1:1 + W_FEAT].set(1.0)
    interior = jnp.pad(interior.reshape(1, HW_PAD),
                       ((0, 0), (0, HW_PAD_ALIGN - HW_PAD)))              # (1, 384)

    # Fused backbone stem + RPN (single Pallas kernel; feature map stays in VMEM).
    featT, rpnT = stem_rpn(patches_T, interior, swT, sbT, rwT, rbT, hwT, hbT)

    # Extract the interior (valid 16x16) positions from the padded grids (glue).
    featT = featT.reshape(C_FEAT, B_, HW_PAD_ALIGN)[:, :, :HW_PAD]
    featT = featT.reshape(C_FEAT, B_, H_PAD, W_PAD)[:, :, 1:1 + H_FEAT, 1:1 + W_FEAT]
    featT_valid = featT.reshape(C_FEAT, B_ * HW)                          # (32, 512)

    rpn_v = rpnT.reshape(RPN_OUT, B_, HW_PAD_ALIGN)[:, :, :HW_PAD]
    rpn_v = rpn_v.reshape(RPN_OUT, B_, H_PAD, W_PAD)[:, :, 1:1 + H_FEAT, 1:1 + W_FEAT]
    rpn_v = rpn_v.reshape(RPN_OUT, B_, HW)                                # (75, B, 256)

    M = HW * N_ANCHOR
    obj = jnp.transpose(rpn_v[:N_ANCHOR], (1, 2, 0)).reshape(B_, M)       # (B, 3840)
    deltas = jnp.transpose(rpn_v[N_ANCHOR:], (1, 2, 0)).reshape(B_, M, 4)

    # Proposal generation (glue): anchor decode + top-k by objectness.
    # TODO(synk): NMS, score thresholding and min-size filtering of RegionProposalNetwork not implemented.
    anchors = make_anchors(H_FEAT, W_FEAT, H_, W_)
    boxes_all = clip_boxes(decode_boxes(deltas, anchors), H_, W_)         # (B, M, 4)
    _, top_idx = jax.lax.top_k(obj, PROPOSALS_PER_IMG)                    # (B, P)
    proposals = jnp.take_along_axis(boxes_all, top_idx[..., None], axis=1)  # (B, P, 4)

    # MultiScaleRoIAlign (single level) as one bilinear-interpolation matmul.
    # TODO(synk): sampling_ratio=2 sub-bin sampling not implemented (one bilinear sample per bin).
    spatial_scale = H_FEAT / H_
    wmatT = build_roi_interp_matrix_T(proposals, spatial_scale)           # (B*HW, 896)
    pooledT = roi_pool(featT_valid, wmatT)                                # (C_FEAT, 896)

    # Relayout pooled (C, R*49) -> (R, 49*C): matches torchvision's (R, C, 7, 7)
    # flatten when combined with the fc6 weight row permutation (tiny XLA op).
    pooled_r = (pooledT[:, :R_COLS].reshape(C_FEAT, R_TOT, POOL * POOL)
                .transpose(1, 2, 0).reshape(R_TOT, POOL * POOL * C_FEAT))

    w6_perm = (params["fc6_w"].reshape(C_FEAT, POOL * POOL, REPR)
               .transpose(1, 0, 2).reshape(POOL * POOL * C_FEAT, REPR))
    wp_pad = jnp.pad(params["pred_w"], ((0, 0), (0, BOX_OUT_PAD - 4)))
    bp_pad = jnp.pad(params["pred_b"], ((0, 0), (0, BOX_OUT_PAD - 4)))

    # EntityHeads: TwoMLPHead + box_predictor (fused Pallas kernel).
    entity_features, box_pad = mlp_head(pooled_r, w6_perm, params["fc6_b"],
                                        params["fc7_w"], params["fc7_b"],
                                        wp_pad, bp_pad)
    boxes = box_pad[:, :4]

    losses = {}  # inference mode: no classifier / box-reg / RPN losses
    detections = {"boxes": boxes, "entity_features": entity_features}
    return losses, detections


if __name__ == "__main__":
    key = jax.random.PRNGKey(0)
    pkey, ikey = jax.random.split(key)
    params = init_params(pkey)
    images = jax.random.uniform(ikey, (B, C_IN, H_IMG, W_IMG), jnp.float32)

    losses, detections = jax.jit(entity_rcnn_forward)(params, images)
    jax.block_until_ready(detections)

    assert detections["boxes"].shape == (R_TOT, 4)
    assert detections["entity_features"].shape == (R_TOT, REPR)
    assert losses == {}
    print("KERNEL_OK")
</pallas_src>

<mosaic_0001>
module attributes {stable_mosaic.version = 11 : i64} {
  func.func @_stem_rpn_kernel(%arg0: i32, %arg1: memref<27x384xf32, #tpu.memory_space<vmem>>, %arg2: memref<1x384xf32, #tpu.memory_space<vmem>>, %arg3: memref<32x27xf32, #tpu.memory_space<vmem>>, %arg4: memref<32x1xf32, #tpu.memory_space<vmem>>, %arg5: memref<32x288xf32, #tpu.memory_space<vmem>>, %arg6: memref<32x1xf32, #tpu.memory_space<vmem>>, %arg7: memref<75x32xf32, #tpu.memory_space<vmem>>, %arg8: memref<75x1xf32, #tpu.memory_space<vmem>>, %arg9: memref<32x384xf32, #tpu.memory_space<vmem>>, %arg10: memref<75x384xf32, #tpu.memory_space<vmem>>, %arg11: memref<288x384xf32, #tpu.memory_space<vmem>>) attributes {dimension_semantics = [#tpu.dimension_semantics<parallel>], iteration_bounds = array<i64: 2>, scalar_prefetch = 0 : i64, scratch_operands = 1 : i64, tpu.core_type = #tpu.core_type<tc>, window_params = [{transform_indices = @transform_0, window_bounds = array<i64: 27, 384>}, {pipeline_mode = #tpu.pipeline_mode<synchronous>, transform_indices = @transform_1, window_bounds = array<i64: 1, 384>}, {pipeline_mode = #tpu.pipeline_mode<synchronous>, transform_indices = @transform_2, window_bounds = array<i64: 32, 27>}, {pipeline_mode = #tpu.pipeline_mode<synchronous>, transform_indices = @transform_3, window_bounds = array<i64: 32, 1>}, {pipeline_mode = #tpu.pipeline_mode<synchronous>, transform_indices = @transform_4, window_bounds = array<i64: 32, 288>}, {pipeline_mode = #tpu.pipeline_mode<synchronous>, transform_indices = @transform_5, window_bounds = array<i64: 32, 1>}, {pipeline_mode = #tpu.pipeline_mode<synchronous>, transform_indices = @transform_6, window_bounds = array<i64: 75, 32>}, {pipeline_mode = #tpu.pipeline_mode<synchronous>, transform_indices = @transform_7, window_bounds = array<i64: 75, 1>}, {transform_indices = @transform_8, window_bounds = array<i64: 32, 384>}, {transform_indices = @transform_9, window_bounds = array<i64: 75, 384>}]} {
    %c0 = arith.constant 0 : index
    %c0_0 = arith.constant 0 : index
    %0 = vector.load %arg3[%c0, %c0_0] : memref<32x27xf32, #tpu.memory_space<vmem>>, vector<32x27xf32>
    %c0_1 = arith.constant 0 : index
    %c0_2 = arith.constant 0 : index
    %1 = vector.load %arg1[%c0_1, %c0_2] : memref<27x384xf32, #tpu.memory_space<vmem>>, vector<27x384xf32>
    %cst = arith.constant dense<0.000000e+00> : vector<32x384xf32>
    %2 = tpu.matmul %0, %1, %cst {dimension_numbers = #tpu.dot_dimension_numbers<[1], [0], [0], [1], [0, 0, 1, 1], [], []>} : vector<32x27xf32>, vector<27x384xf32>, vector<32x384xf32> -> vector<32x384xf32>
    %c0_3 = arith.constant 0 : index
    %c0_4 = arith.constant 0 : index
    %3 = vector.load %arg4[%c0_3, %c0_4] : memref<32x1xf32, #tpu.memory_space<vmem>>, vector<32x1xf32>
    %4 = vector.broadcast %3 : vector<32x1xf32> to vector<32x384xf32>
    %5 = arith.addf %2, %4 : vector<32x384xf32>
    %cst_5 = arith.constant 0.000000e+00 : f32
    %cst_6 = arith.constant 6.000000e+00 : f32
    %6 = vector.broadcast %cst_5 : f32 to vector<32x384xf32>
    %7 = arith.maximumf %6, %5 : vector<32x384xf32>
    %8 = vector.broadcast %cst_6 : f32 to vector<32x384xf32>
    %9 = arith.minimumf %8, %7 : vector<32x384xf32>
    %c0_7 = arith.constant 0 : index
    %c0_8 = arith.constant 0 : index
    %10 = vector.load %arg2[%c0_7, %c0_8] : memref<1x384xf32, #tpu.memory_space<vmem>>, vector<1x384xf32>
    %11 = vector.broadcast %10 : vector<1x384xf32> to vector<32x384xf32>
    %12 = arith.mulf %9, %11 : vector<32x384xf32>
    %c0_9 = arith.constant 0 : index
    %c0_10 = arith.constant 0 : index
    %13 = vector.load %arg9[%c0_9, %c0_10] : memref<32x384xf32, #tpu.memory_space<vmem>>, vector<32x384xf32>
    tpu.vector_store %arg9[%c0_9, %c0_10], %12 {strides = array<i32>} : memref<32x384xf32, #tpu.memory_space<vmem>>, vector<32x384xf32>,
    %c19_i32 = arith.constant 19 : i32
    %14 = tpu.dynamic_rotate %12 by %c19_i32 dim 1 : vector<32x384xf32>, i32 -> vector<32x384xf32>
    %c0_11 = arith.constant 0 : index
    %c0_12 = arith.constant 0 : index
    %15 = vector.load %arg11[%c0_11, %c0_12] : memref<288x384xf32, #tpu.memory_space<vmem>>, vector<32x384xf32>
    tpu.vector_store %arg11[%c0_11, %c0_12], %14 {strides = array<i32>} : memref<288x384xf32, #tpu.memory_space<vmem>>, vector<32x384xf32>,
    %c18_i32 = arith.constant 18 : i32
    %16 = tpu.dynamic_rotate %12 by %c18_i32 dim 1 : vector<32x384xf32>, i32 -> vector<32x384xf32>
    %c32 = arith.constant 32 : index
    %c0_13 = arith.constant 0 : index
    %17 = vector.load %arg11[%c32, %c0_13] : memref<288x384xf32, #tpu.memory_space<vmem>>, vector<32x384xf32>
    tpu.vector_store %arg11[%c32, %c0_13], %16 {strides = array<i32>} : memref<288x384xf32, #tpu.memory_space<vmem>>, vector<32x384xf32>,
    %c17_i32 = arith.constant 17 : i32
    %18 = tpu.dynamic_rotate %12 by %c17_i32 dim 1 : vector<32x384xf32>, i32 -> vector<32x384xf32>
    %c64 = arith.constant 64 : index
    %c0_14 = arith.constant 0 : index
    %19 = vector.load %arg11[%c64, %c0_14] : memref<288x384xf32, #tpu.memory_space<vmem>>, vector<32x384xf32>
    tpu.vector_store %arg11[%c64, %c0_14], %18 {strides = array<i32>} : memref<288x384xf32, #tpu.memory_space<vmem>>, vector<32x384xf32>,
    %c1_i32 = arith.constant 1 : i32
    %20 = tpu.dynamic_rotate %12 by %c1_i32 dim 1 : vector<32x384xf32>, i32 -> vector<32x384xf32>
    %c96 = arith.constant 96 : index
    %c0_15 = arith.constant 0 : index
    %21 = vector.load %arg11[%c96, %c0_15] : memref<288x384xf32, #tpu.memory_space<vmem>>, vector<32x384xf32>
    tpu.vector_store %arg11[%c96, %c0_15], %20 {strides = array<i32>} : memref<288x384xf32, #tpu.memory_space<vmem>>, vector<32x384xf32>,
    %c128 = arith.constant 128 : index
    %c0_16 = arith.constant 0 : index
    %22 = vector.load %arg11[%c128, %c0_16] : memref<288x384xf32, #tpu.memory_space<vmem>>, vector<32x384xf32>
    tpu.vector_store %arg11[%c128, %c0_16], %12 {strides = array<i32>} : memref<288x384xf32, #tpu.memory_space<vmem>>, vector<32x384xf32>,
    %c383_i32 = arith.constant 383 : i32
    %23 = tpu.dynamic_rotate %12 by %c383_i32 dim 1 : vector<32x384xf32>, i32 -> vector<32x384xf32>
    %c160 = arith.constant 160 : index
    %c0_17 = arith.constant 0 : index
    %24 = vector.load %arg11[%c160, %c0_17] : memref<288x384xf32, #tpu.memory_space<vmem>>, vector<32x384xf32>
    tpu.vector_store %arg11[%c160, %c0_17], %23 {strides = array<i32>} : memref<288x384xf32, #tpu.memory_space<vmem>>, vector<32x384xf32>,
    %c367_i32 = arith.constant 367 : i32
    %25 = tpu.dynamic_rotate %12 by %c367_i32 dim 1 : vector<32x384xf32>, i32 -> vector<32x384xf32>
    %c192 = arith.constant 192 : index
    %c0_18 = arith.constant 0 : index
    %26 = vector.load %arg11[%c192, %c0_18] : memref<288x384xf32, #tpu.memory_space<vmem>>, vector<32x384xf32>
    tpu.vector_store %arg11[%c192, %c0_18], %25 {strides = array<i32>} : memref<288x384xf32, #tpu.memory_space<vmem>>, vector<32x384xf32>,
    %c366_i32 = arith.constant 366 : i32
    %27 = tpu.dynamic_rotate %12 by %c366_i32 dim 1 : vector<32x384xf32>, i32 -> vector<32x384xf32>
    %c224 = arith.constant 224 : index
    %c0_19 = arith.constant 0 : index
    %28 = vector.load %arg11[%c224, %c0_19] : memref<288x384xf32, #tpu.memory_space<vmem>>, vector<32x384xf32>
    tpu.vector_store %arg11[%c224, %c0_19], %27 {strides = array<i32>} : memref<288x384xf32, #tpu.memory_space<vmem>>, vector<32x384xf32>,
    %c365_i32 = arith.constant 365 : i32
    %29 = tpu.dynamic_rotate %12 by %c365_i32 dim 1 : vector<32x384xf32>, i32 -> vector<32x384xf32>
    %c256 = arith.constant 256 : index
    %c0_20 = arith.constant 0 : index
    %30 = vector.load %arg11[%c256, %c0_20] : memref<288x384xf32, #tpu.memory_space<vmem>>, vector<32x384xf32>
    tpu.vector_store %arg11[%c256, %c0_20], %29 {strides = array<i32>} : memref<288x384xf32, #tpu.memory_space<vmem>>, vector<32x384xf32>,
    %c0_21 = arith.constant 0 : index
    %c0_22 = arith.constant 0 : index
    %31 = vector.load %arg5[%c0_21, %c0_22] : memref<32x288xf32, #tpu.memory_space<vmem>>, vector<32x288xf32>
    %c0_23 = arith.constant 0 : index
    %c0_24 = arith.constant 0 : index
    %32 = vector.load %arg11[%c0_23, %c0_24] : memref<288x384xf32, #tpu.memory_space<vmem>>, vector<288x384xf32>
    %cst_25 = arith.constant dense<0.000000e+00> : vector<32x384xf32>
    %33 = tpu.matmul %31, %32, %cst_25 {dimension_numbers = #tpu.dot_dimension_numbers<[1], [0], [0], [1], [0, 0, 1, 1], [], []>} : vector<32x288xf32>, vector<288x384xf32>, vector<32x384xf32> -> vector<32x384xf32>
    %c0_26 = arith.constant 0 : index
    %c0_27 = arith.constant 0 : index
    %34 = vector.load %arg6[%c0_26, %c0_27] : memref<32x1xf32, #tpu.memory_space<vmem>>, vector<32x1xf32>
    %35 = vector.broadcast %34 : vector<32x1xf32> to vector<32x384xf32>
    %36 = arith.addf %33, %35 : vector<32x384xf32>
    %cst_28 = arith.constant 0.000000e+00 : f32
    %37 = vector.broadcast %cst_28 : f32 to vector<32x384xf32>
    %38 = arith.maximumf %36, %37 : vector<32x384xf32>
    %c0_29 = arith.constant 0 : index
    %c0_30 = arith.constant 0 : index
    %39 = vector.load %arg7[%c0_29, %c0_30] : memref<75x32xf32, #tpu.memory_space<vmem>>, vector<75x32xf32>
    %cst_31 = arith.constant dense<0.000000e+00> : vector<75x384xf32>
    %40 = tpu.matmul %39, %38, %cst_31 {dimension_numbers = #tpu.dot_dimension_numbers<[1], [0], [0], [1], [0, 0, 1, 1], [], []>} : vector<75x32xf32>, vector<32x384xf32>, vector<75x384xf32> -> vector<75x384xf32>
    %c0_32 = arith.constant 0 : index
    %c0_33 = arith.constant 0 : index
    %41 = vector.load %arg8[%c0_32, %c0_33] : memref<75x1xf32, #tpu.memory_space<vmem>>, vector<75x1xf32>
    %42 = vector.broadcast %41 : vector<75x1xf32> to vector<75x384xf32>
    %43 = arith.addf %40, %42 : vector<75x384xf32>
    %c0_34 = arith.constant 0 : index
    %c0_35 = arith.constant 0 : index
    %44 = vector.load %arg10[%c0_34, %c0_35] : memref<75x384xf32, #tpu.memory_space<vmem>>, vector<75x384xf32>
    tpu.vector_store %arg10[%c0_34, %c0_35], %43 {strides = array<i32>} : memref<75x384xf32, #tpu.memory_space<vmem>>, vector<75x384xf32>,
    return
  }
  func.func @transform_0(%arg0: i32) -> (i32, i32) {
    %c0_i32 = arith.constant 0 : i32
    %c0_i32_0 = arith.constant 0 : i32
    return %c0_i32, %arg0 : i32, i32
  }
  func.func @transform_1(%arg0: i32) -> (i32, i32) {
    %c0_i32 = arith.constant 0 : i32
    %c0_i32_0 = arith.constant 0 : i32
    %c0_i32_1 = arith.constant 0 : i32
    return %c0_i32, %c0_i32_0 : i32, i32
  }
  func.func @transform_2(%arg0: i32) -> (i32, i32) {
    %c0_i32 = arith.constant 0 : i32
    %c0_i32_0 = arith.constant 0 : i32
    %c0_i32_1 = arith.constant 0 : i32
    return %c0_i32, %c0_i32_0 : i32, i32
  }
  func.func @transform_3(%arg0: i32) -> (i32, i32) {
    %c0_i32 = arith.constant 0 : i32
    %c0_i32_0 = arith.constant 0 : i32
    %c0_i32_1 = arith.constant 0 : i32
    return %c0_i32, %c0_i32_0 : i32, i32
  }
  func.func @transform_4(%arg0: i32) -> (i32, i32) {
    %c0_i32 = arith.constant 0 : i32
    %c0_i32_0 = arith.constant 0 : i32
    %c0_i32_1 = arith.constant 0 : i32
    return %c0_i32, %c0_i32_0 : i32, i32
  }
  func.func @transform_5(%arg0: i32) -> (i32, i32) {
    %c0_i32 = arith.constant 0 : i32
    %c0_i32_0 = arith.constant 0 : i32
    %c0_i32_1 = arith.constant 0 : i32
    return %c0_i32, %c0_i32_0 : i32, i32
  }
  func.func @transform_6(%arg0: i32) -> (i32, i32) {
    %c0_i32 = arith.constant 0 : i32
    %c0_i32_0 = arith.constant 0 : i32
    %c0_i32_1 = arith.constant 0 : i32
    return %c0_i32, %c0_i32_0 : i32, i32
  }
  func.func @transform_7(%arg0: i32) -> (i32, i32) {
    %c0_i32 = arith.constant 0 : i32
    %c0_i32_0 = arith.constant 0 : i32
    %c0_i32_1 = arith.constant 0 : i32
    return %c0_i32, %c0_i32_0 : i32, i32
  }
  func.func @transform_8(%arg0: i32) -> (i32, i32) {
    %c0_i32 = arith.constant 0 : i32
    %c0_i32_0 = arith.constant 0 : i32
    return %c0_i32, %arg0 : i32, i32
  }
  func.func @transform_9(%arg0: i32) -> (i32, i32) {
    %c0_i32 = arith.constant 0 : i32
    %c0_i32_0 = arith.constant 0 : i32
    return %c0_i32, %arg0 : i32, i32
  }
}

module attributes {stable_mosaic.version = 11 : i64} {
  func.func @_roi_pool_kernel(%arg0: i32, %arg1: memref<32x512xf32, #tpu.memory_space<vmem>>, %arg2: memref<512x128xf32, #tpu.memory_space<vmem>>, %arg3: memref<32x128xf32, #tpu.memory_space<vmem>>) attributes {dimension_semantics = [#tpu.dimension_semantics<parallel>], iteration_bounds = array<i64: 7>, scalar_prefetch = 0 : i64, scratch_operands = 0 : i64, tpu.core_type = #tpu.core_type<tc>, window_params = [{pipeline_mode = #tpu.pipeline_mode<synchronous>, transform_indices = @transform_0, window_bounds = array<i64: 32, 512>}, {transform_indices = @transform_1, window_bounds = array<i64: 512, 128>}, {transform_indices = @transform_2, window_bounds = array<i64: 32, 128>}]} {
    %c0 = arith.constant 0 : index
    %c0_0 = arith.constant 0 : index
    %0 = vector.load %arg1[%c0, %c0_0] : memref<32x512xf32, #tpu.memory_space<vmem>>, vector<32x512xf32>
    %c0_1 = arith.constant 0 : index
    %c0_2 = arith.constant 0 : index
    %1 = vector.load %arg2[%c0_1, %c0_2] : memref<512x128xf32, #tpu.memory_space<vmem>>, vector<512x128xf32>
    %cst = arith.constant dense<0.000000e+00> : vector<32x128xf32>
    %2 = tpu.matmul %0, %1, %cst {dimension_numbers = #tpu.dot_dimension_numbers<[1], [0], [0], [1], [0, 0, 1, 1], [], []>} : vector<32x512xf32>, vector<512x128xf32>, vector<32x128xf32> -> vector<32x128xf32>
    %c0_3 = arith.constant 0 : index
    %c0_4 = arith.constant 0 : index
    %3 = vector.load %arg3[%c0_3, %c0_4] : memref<32x128xf32, #tpu.memory_space<vmem>>, vector<32x128xf32>
    tpu.vector_store %arg3[%c0_3, %c0_4], %2 {strides = array<i32>} : memref<32x128xf32, #tpu.memory_space<vmem>>, vector<32x128xf32>,
    return
  }
  func.func @transform_0(%arg0: i32) -> (i32, i32) {
    %c0_i32 = arith.constant 0 : i32
    %c0_i32_0 = arith.constant 0 : i32
    %c0_i32_1 = arith.constant 0 : i32
    return %c0_i32, %c0_i32_0 : i32, i32
  }
  func.func @transform_1(%arg0: i32) -> (i32, i32) {
    %c0_i32 = arith.constant 0 : i32
    %c0_i32_0 = arith.constant 0 : i32
    return %c0_i32, %arg0 : i32, i32
  }
  func.func @transform_2(%arg0: i32) -> (i32, i32) {
    %c0_i32 = arith.constant 0 : i32
    %c0_i32_0 = arith.constant 0 : i32
    return %c0_i32, %arg0 : i32, i32
  }
}

module attributes {stable_mosaic.version = 11 : i64} {
  func.func @_mlp_head_kernel(%arg0: i32, %arg1: memref<16x1568xf32, #tpu.memory_space<vmem>>, %arg2: memref<1568x128xf32, #tpu.memory_space<vmem>>, %arg3: memref<1x128xf32, #tpu.memory_space<vmem>>, %arg4: memref<128x128xf32, #tpu.memory_space<vmem>>, %arg5: memref<1x128xf32, #tpu.memory_space<vmem>>, %arg6: memref<128x128xf32, #tpu.memory_space<vmem>>, %arg7: memref<1x128xf32, #tpu.memory_space<vmem>>, %arg8: memref<16x128xf32, #tpu.memory_space<vmem>>, %arg9: memref<16x128xf32, #tpu.memory_space<vmem>>) attributes {dimension_semantics = [#tpu.dimension_semantics<arbitrary>], iteration_bounds = array<i64: 1>, scalar_prefetch = 0 : i64, scratch_operands = 0 : i64, tpu.core_type = #tpu.core_type<tc>, window_params = [{pipeline_mode = #tpu.pipeline_mode<synchronous>, transform_indices = @transform_0, window_bounds = array<i64: 16, 1568>}, {pipeline_mode = #tpu.pipeline_mode<synchronous>, transform_indices = @transform_1, window_bounds = array<i64: 1568, 128>}, {pipeline_mode = #tpu.pipeline_mode<synchronous>, transform_indices = @transform_2, window_bounds = array<i64: 1, 128>}, {pipeline_mode = #tpu.pipeline_mode<synchronous>, transform_indices = @transform_3, window_bounds = array<i64: 128, 128>}, {pipeline_mode = #tpu.pipeline_mode<synchronous>, transform_indices = @transform_4, window_bounds = array<i64: 1, 128>}, {pipeline_mode = #tpu.pipeline_mode<synchronous>, transform_indices = @transform_5, window_bounds = array<i64: 128, 128>}, {pipeline_mode = #tpu.pipeline_mode<synchronous>, transform_indices = @transform_6, window_bounds = array<i64: 1, 128>}, {pipeline_mode = #tpu.pipeline_mode<synchronous>, transform_indices = @transform_7, window_bounds = array<i64: 16, 128>}, {pipeline_mode = #tpu.pipeline_mode<synchronous>, transform_indices = @transform_8, window_bounds = array<i64: 16, 128>}]} {
    %c0 = arith.constant 0 : index
    %c0_0 = arith.constant 0 : index
    %0 = vector.load %arg1[%c0, %c0_0] : memref<16x1568xf32, #tpu.memory_space<vmem>>, vector<16x1568xf32>
    %c0_1 = arith.constant 0 : index
    %c0_2 = arith.constant 0 : index
    %1 = vector.load %arg2[%c0_1, %c0_2] : memref<1568x128xf32, #tpu.memory_space<vmem>>, vector<1568x128xf32>
    %cst = arith.constant dense<0.000000e+00> : vector<16x128xf32>
    %2 = tpu.matmul %0, %1, %cst {dimension_numbers = #tpu.dot_dimension_numbers<[1], [0], [0], [1], [0, 0, 1, 1], [], []>} : vector<16x1568xf32>, vector<1568x128xf32>, vector<16x128xf32> -> vector<16x128xf32>
    %c0_3 = arith.constant 0 : index
    %c0_4 = arith.constant 0 : index
    %3 = vector.load %arg3[%c0_3, %c0_4] : memref<1x128xf32, #tpu.memory_space<vmem>>, vector<1x128xf32>
    %4 = vector.broadcast %3 : vector<1x128xf32> to vector<16x128xf32>
    %5 = arith.addf %2, %4 : vector<16x128xf32>
    %cst_5 = arith.constant 0.000000e+00 : f32
    %6 = vector.broadcast %cst_5 : f32 to vector<16x128xf32>
    %7 = arith.maximumf %5, %6 : vector<16x128xf32>
    %c0_6 = arith.constant 0 : index
    %c0_7 = arith.constant 0 : index
    %8 = vector.load %arg4[%c0_6, %c0_7] : memref<128x128xf32, #tpu.memory_space<vmem>>, vector<128x128xf32>
    %cst_8 = arith.constant dense<0.000000e+00> : vector<16x128xf32>
    %9 = tpu.matmul %7, %8, %cst_8 {dimension_numbers = #tpu.dot_dimension_numbers<[1], [0], [0], [1], [0, 0, 1, 1], [], []>} : vector<16x128xf32>, vector<128x128xf32>, vector<16x128xf32> -> vector<16x128xf32>
    %c0_9 = arith.constant 0 : index
    %c0_10 = arith.constant 0 : index
    %10 = vector.load %arg5[%c0_9, %c0_10] : memref<1x128xf32, #tpu.memory_space<vmem>>, vector<1x128xf32>
    %11 = vector.broadcast %10 : vector<1x128xf32> to vector<16x128xf32>
    %12 = arith.addf %9, %11 : vector<16x128xf32>
    %cst_11 = arith.constant 0.000000e+00 : f32
    %13 = vector.broadcast %cst_11 : f32 to vector<16x128xf32>
    %14 = arith.maximumf %12, %13 : vector<16x128xf32>
    %c0_12 = arith.constant 0 : index
    %c0_13 = arith.constant 0 : index
    %15 = vector.load %arg8[%c0_12, %c0_13] : memref<16x128xf32, #tpu.memory_space<vmem>>, vector<16x128xf32>
    tpu.vector_store %arg8[%c0_12, %c0_13], %14 {strides = array<i32>} : memref<16x128xf32, #tpu.memory_space<vmem>>, vector<16x128xf32>,
    %c0_14 = arith.constant 0 : index
    %c0_15 = arith.constant 0 : index
    %16 = vector.load %arg6[%c0_14, %c0_15] : memref<128x128xf32, #tpu.memory_space<vmem>>, vector<128x128xf32>
    %cst_16 = arith.constant dense<0.000000e+00> : vector<16x128xf32>
    %17 = tpu.matmul %14, %16, %cst_16 {dimension_numbers = #tpu.dot_dimension_numbers<[1], [0], [0], [1], [0, 0, 1, 1], [], []>} : vector<16x128xf32>, vector<128x128xf32>, vector<16x128xf32> -> vector<16x128xf32>
    %c0_17 = arith.constant 0 : index
    %c0_18 = arith.constant 0 : index
    %18 = vector.load %arg7[%c0_17, %c0_18] : memref<1x128xf32, #tpu.memory_space<vmem>>, vector<1x128xf32>
    %19 = vector.broadcast %18 : vector<1x128xf32> to vector<16x128xf32>
    %20 = arith.addf %17, %19 : vector<16x128xf32>
    %c0_19 = arith.constant 0 : index
    %c0_20 = arith.constant 0 : index
    %21 = vector.load %arg9[%c0_19, %c0_20] : memref<16x128xf32, #tpu.memory_space<vmem>>, vector<16x128xf32>
    tpu.vector_store %arg9[%c0_19, %c0_20], %20 {strides = array<i32>} : memref<16x128xf32, #tpu.memory_space<vmem>>, vector<16x128xf32>,
    return
  }
  func.func @transform_0(%arg0: i32) -> (i32, i32) {
    %c0_i32 = arith.constant 0 : i32
    %c0_i32_0 = arith.constant 0 : i32
    %c0_i32_1 = arith.constant 0 : i32
    return %c0_i32, %c0_i32_0 : i32, i32
  }
  func.func @transform_1(%arg0: i32) -> (i32, i32) {
    %c0_i32 = arith.constant 0 : i32
    %c0_i32_0 = arith.constant 0 : i32
    %c0_i32_1 = arith.constant 0 : i32
    return %c0_i32, %c0_i32_0 : i32, i32
  }
  func.func @transform_2(%arg0: i32) -> (i32, i32) {
    %c0_i32 = arith.constant 0 : i32
    %c0_i32_0 = arith.constant 0 : i32
    %c0_i32_1 = arith.constant 0 : i32
    return %c0_i32, %c0_i32_0 : i32, i32
  }
  func.func @transform_3(%arg0: i32) -> (i32, i32) {
    %c0_i32 = arith.constant 0 : i32
    %c0_i32_0 = arith.constant 0 : i32
    %c0_i32_1 = arith.constant 0 : i32
    return %c0_i32, %c0_i32_0 : i32, i32
  }
  func.func @transform_4(%arg0: i32) -> (i32, i32) {
    %c0_i32 = arith.constant 0 : i32
    %c0_i32_0 = arith.constant 0 : i32
    %c0_i32_1 = arith.constant 0 : i32
    return %c0_i32, %c0_i32_0 : i32, i32
  }
  func.func @transform_5(%arg0: i32) -> (i32, i32) {
    %c0_i32 = arith.constant 0 : i32
    %c0_i32_0 = arith.constant 0 : i32
    %c0_i32_1 = arith.constant 0 : i32
    return %c0_i32, %c0_i32_0 : i32, i32
  }
  func.func @transform_6(%arg0: i32) -> (i32, i32) {
    %c0_i32 = arith.constant 0 : i32
    %c0_i32_0 = arith.constant 0 : i32
    %c0_i32_1 = arith.constant 0 : i32
    return %c0_i32, %c0_i32_0 : i32, i32
  }
  func.func @transform_7(%arg0: i32) -> (i32, i32) {
    %c0_i32 = arith.constant 0 : i32
    %c0_i32_0 = arith.constant 0 : i32
    %c0_i32_1 = arith.constant 0 : i32
    return %c0_i32, %c0_i32_0 : i32, i32
  }
  func.func @transform_8(%arg0: i32) -> (i32, i32) {
    %c0_i32 = arith.constant 0 : i32
    %c0_i32_0 = arith.constant 0 : i32
    %c0_i32_1 = arith.constant 0 : i32
    return %c0_i32, %c0_i32_0 : i32, i32
  }
}

</mosaic_0001>

<llo_original>
// kernel: tile.15
$region0: #{tile.15}
  #allocation0 [shape = 's32[1]{0}', space=sflag, size = 0x4, scoped, tag = 'scoped memory for tile.15']
  %s0 = inlined_call_operand.vmem [shape: f32[3], index: 0, kind: input, shape index: {}]
  %s1 = inlined_call_operand.vmem [shape: f32[9,3], index: 1, kind: output, shape index: {}]
  // Predicated region
  $region2: #{tile.15} parent=0 // pred_check
    _
  $region3: #{tile.15} parent=0 // pred_check_branch
    %3 = sbr.rel (0) target = $region5
  $region4: #{tile.15} parent=0 // pred_region
    _
  $region5: #{tile.15} parent=0 // pred_fallthru
    _
  %v4 = vld [vmem:[%s0] ss:$0 sm:$0xff]
  %5 = vst [vmem:[%s1] sm:$0xff] %v4
  %s6 = scalar_lea.vmem %s1, 8
  %7 = vst [vmem:[%s6] sm:$0xff] %v4

// kernel: div.11
$region0: #{div.11}
  %s0 = inlined_call_operand.vmem [shape: f32[9,3], index: 0, kind: input, shape index: {}]
  %s1 = inlined_call_operand.vmem [shape: f32[27], index: 1, kind: output, shape index: {}]
  $region1: #{div.11} parent=0
    #allocation0 [shape = 'u8[4096]{0}', space=vmem, size = 0x1000, scoped, tag = 'scoped mem for output reshape']
    %v2 = vld [vmem:[%s0] sm:$0x1]
    %vm3 = vcmask 23552
    %4 = vst.msk [vmem:[#allocation0] sm:$0x1] %vm3, %v2
    %s5 = scalar_lea.vmem %s0, 8
    %v6 = vld [vmem:[%s5] sm:$0x1]
    %7 = vrot.lane.b32.xlu0 %v6, 24
    %v8 = vpop.permute.xlu0 %7
    %vm9 = vcmask 220352
    %10 = vst.msk [vmem:[#allocation0] sm:$0x1] %vm9, %v8
    %s11 = scalar_lea.vmem %s0, 7
    %v12 = vld [vmem:[%s11] sm:$0x1]
    %13 = vrot.lane.b32.xlu0 %v12, 21
    %v14 = vpop.permute.xlu0 %13
    %vm15 = vcmask 195752
    %16 = vst.msk [vmem:[#allocation0] sm:$0x1] %vm15, %v14
    %s17 = scalar_lea.vmem %s0, 6
    %v18 = vld [vmem:[%s17] sm:$0x1]
    %19 = vrot.lane.b32.xlu0 %v18, 18
    %v20 = vpop.permute.xlu0 %19
    %vm21 = vcmask 171152
    %22 = vst.msk [vmem:[#allocation0] sm:$0x1] %vm21, %v20
    %s23 = scalar_lea.vmem %s0, 5
    %v24 = vld [vmem:[%s23] sm:$0x1]
    %25 = vrot.lane.b32.xlu0 %v24, 15
    %v26 = vpop.permute.xlu0 %25
    %vm27 = vcmask 146552
    %28 = vst.msk [vmem:[#allocation0] sm:$0x1] %vm27, %v26
    %s29 = scalar_lea.vmem %s0, 4
    %v30 = vld [vmem:[%s29] sm:$0x1]
    %31 = vrot.lane.b32.xlu0 %v30, 12
    %v32 = vpop.permute.xlu0 %31
    %vm33 = vcmask 121952
    %34 = vst.msk [vmem:[#allocation0] sm:$0x1] %vm33, %v32
    %s35 = scalar_lea.vmem %s0, 3
    %v36 = vld [vmem:[%s35] sm:$0x1]
    %37 = vrot.lane.b32.xlu0 %v36, 9
    %v38 = vpop.permute.xlu0 %37
    %vm39 = vcmask 97352
    %40 = vst.msk [vmem:[#allocation0] sm:$0x1] %vm39, %v38
    %s41 = scalar_lea.vmem %s0, 2
    %v42 = vld [vmem:[%s41] sm:$0x1]
    %43 = vrot.lane.b32.xlu0 %v42, 6
    %v44 = vpop.permute.xlu0 %43
    %vm45 = vcmask 72752
    %46 = vst.msk [vmem:[#allocation0] sm:$0x1] %vm45, %v44
    %s47 = scalar_lea.vmem %s0, 1
    %v48 = vld [vmem:[%s47] sm:$0x1]
    %49 = vrot.lane.b32.xlu0 %v48, 3
    %v50 = vpop.permute.xlu0 %49
    %vm51 = vcmask 48152
    %52 = vst.msk [vmem:[#allocation0] sm:$0x1] %vm51, %v50
    %s54 = sshllo.u32 0, 1
    %v56 = vld [vmem:[#allocation0] sm:%s54]
    %s57 = sshllo.u32 0, 1
    %58 = vst [vmem:[%s1] sm:%s57] %v56

// kernel: entity_rcnn_forward.3
$region0: #{entity_rcnn_forward.3}
  #allocation0 [shape = 'u32[]', space=smem, size = 0x4, offset = 0x4, fixed_abs, tag = 'smem constant byte address 0x4 - core index']
  #allocation1 [shape = 'u32[144,128]{1,0:T(1,128)}', space=vmem, size = 0x12000, scoped, tag = 'internal scratch']
  #allocation2 [shape = 'f32[288,384]{1,0:T(8,128)}', space=vmem, size = 0x6c000, scoped, tag = 'scratch operand']
  %s0 = inlined_call_operand.vmem [shape: f32[27,768], index: 0, kind: input, shape index: {}]
  %s1 = inlined_call_operand.vmem [shape: f32[1,384], index: 1, kind: input, shape index: {}]
  %s2 = inlined_call_operand.vmem [shape: f32[32,27], index: 2, kind: input, shape index: {}]
  %s3 = inlined_call_operand.vmem [shape: f32[32,1], index: 3, kind: input, shape index: {}]
  %s4 = inlined_call_operand.vmem [shape: f32[32,288], index: 4, kind: input, shape index: {}]
  %s5 = inlined_call_operand.vmem [shape: f32[32,1], index: 5, kind: input, shape index: {}]
  %s6 = inlined_call_operand.vmem [shape: f32[75,32], index: 6, kind: input, shape index: {}]
  %s7 = inlined_call_operand.vmem [shape: f32[75,1], index: 7, kind: input, shape index: {}]
  %s8 = inlined_call_operand.vmem [shape: f32[32,768], index: 8, kind: output, shape index: {0}]
  %s9 = inlined_call_operand.vmem [shape: f32[75,768], index: 9, kind: output, shape index: {1}]
  %10 = xla_tuple %s8, %s9
  %s11 = sld [smem:[#allocation0]]
  $region134: #{entity_rcnn_forward.3} parent=0
    _
  %s13 = ssub.s32 1, %s11
  %s14 = scalar_select 0, %s13, %s11
  $region1: #{entity_rcnn_forward.3} parent=0
    #allocation3 [shape = 'u8[98304]{0}', space=vmem, size = 0x18000, scoped, tag = 'input window, operand 0']
    #allocation4 [shape = 'u8[98304]{0}', space=vmem, size = 0x18000, scoped, tag = 'output window, operand 0']
    #allocation5 [shape = 'u8[245760]{0}', space=vmem, size = 0x3c000, scoped, tag = 'output window, operand 1']
    loop: start=0, step=1, limit=4
    $region2: #{entity_rcnn_forward.3} parent=1 // loop_pre_header
      _
    $region3: #{entity_rcnn_forward.3} parent=1 // loop_header
      %s16 = sphi 0, %s20
      %p17 = scmp.ge.s32.totalorder %s16, 4
      %s26 = sphi 0, %s28
      %s29 = sphi 0, %s26
      %s30 = sphi 0, %s29
      %s46 = sphi 0, %s30
      %s50 = sphi 0, %s50
      %s52 = sphi 0, %s50
      %s53 = sphi 0, %s52
      %s67 = sphi 0, %s53
      %s71 = sphi 0, %s71
      %s73 = sphi 0, %s71
      %s74 = sphi 0, %s73
      %s88 = sphi 0, %s74
      %s92 = sphi 0, %s92
      %s94 = sphi 0, %s92
      %s95 = sphi 0, %s94
      %s109 = sphi 0, %s95
      %s113 = sphi 0, %s113
      %s115 = sphi 0, %s113
      %s116 = sphi 0, %s115
      %s130 = sphi 0, %s116
      %s134 = sphi 0, %s134
      %s136 = sphi 0, %s134
      %s137 = sphi 0, %s136
      %s151 = sphi 0, %s137
      %s155 = sphi 0, %s155
      %s157 = sphi 0, %s155
      %s158 = sphi 0, %s157
      %s172 = sphi 0, %s158
      %s176 = sphi 0, %s176
      %s178 = sphi 0, %s176
      %s179 = sphi 0, %s178
      %s193 = sphi 0, %s179
      %s199 = sphi 0, %s201
      %s202 = sphi 0, %s199
      %s203 = sphi 0, %s202
      %s219 = sphi 0, %s203
      %s225 = sphi 0, %s227
      %s228 = sphi 0, %s225
      %s229 = sphi 0, %s228
      %s245 = sphi 0, %s229
    $region4: #{entity_rcnn_forward.3} parent=1 // loop_header_branch
      %19 = sbr.rel (%p17) target = $region8
    $region5: #{entity_rcnn_forward.3} parent=1 // loop_body
      %s21 = ssub.s32 %s16, 1
      %s22 = ssub.s32 %s16, 2
      %s23 = sadd.s32 %s16, 1
      %s24 = ssub.s32 %s16, %s23
      %p25 = scmp.eq.s32.totalorder %s24, 0
      %s27 = sadd.s32 %s26, 1
      %s28 = scalar_select %p25, %s26, %s27
      %p31 = pneg %p25
      %p32 = scmp.eq.s32.totalorder %s16, 1
      %p33 = por %p31, %p32
      %p34 = scmp.ne.s32.totalorder %s26, %s29
      %p35 = scmp.eq.s32.totalorder %s16, 0
      %p36 = por %p34, %p35
      %p37 = scmp.ne.s32.totalorder %s26, %s29
      %p38 = scmp.eq.s32.totalorder %s21, 1
      %p39 = por %p37, %p38
      %p40 = scmp.ne.s32.totalorder %s29, %s30
      %p41 = scmp.eq.s32.totalorder %s21, 0
      %p42 = por %p40, %p41
      %p43 = scmp.ne.s32.totalorder %s29, %s30
      %p44 = scmp.eq.s32.totalorder %s22, 1
      %p45 = por %p43, %p44
      %p47 = scmp.ne.s32.totalorder %s30, %s46
      %p48 = scmp.eq.s32.totalorder %s22, 0
      %p49 = por %p47, %p48
      %s51 = sadd.s32 %s50, 1
      %p54 = scmp.eq.s32.totalorder %s16, 1
      %p55 = scmp.ne.s32.totalorder %s50, %s52
      %p56 = scmp.eq.s32.totalorder %s16, 0
      %p57 = por %p55, %p56
      %p58 = scmp.ne.s32.totalorder %s50, %s52
      %p59 = scmp.eq.s32.totalorder %s21, 1
      %p60 = por %p58, %p59
      %p61 = scmp.ne.s32.totalorder %s52, %s53
      %p62 = scmp.eq.s32.totalorder %s21, 0
      %p63 = por %p61, %p62
      %p64 = scmp.ne.s32.totalorder %s52, %s53
      %p65 = scmp.eq.s32.totalorder %s22, 1
      %p66 = por %p64, %p65
      %p68 = scmp.ne.s32.totalorder %s53, %s67
      %p69 = scmp.eq.s32.totalorder %s22, 0
      %p70 = por %p68, %p69
      %s72 = sadd.s32 %s71, 1
      %p75 = scmp.eq.s32.totalorder %s16, 1
      %p76 = scmp.ne.s32.totalorder %s71, %s73
      %p77 = scmp.eq.s32.totalorder %s16, 0
      %p78 = por %p76, %p77
      %p79 = scmp.ne.s32.totalorder %s71, %s73
      %p80 = scmp.eq.s32.totalorder %s21, 1
      %p81 = por %p79, %p80
      %p82 = scmp.ne.s32.totalorder %s73, %s74
      %p83 = scmp.eq.s32.totalorder %s21, 0
      %p84 = por %p82, %p83
      %p85 = scmp.ne.s32.totalorder %s73, %s74
      %p86 = scmp.eq.s32.totalorder %s22, 1
      %p87 = por %p85, %p86
      %p89 = scmp.ne.s32.totalorder %s74, %s88
      %p90 = scmp.eq.s32.totalorder %s22, 0
      %p91 = por %p89, %p90
      %s93 = sadd.s32 %s92, 1
      %p96 = scmp.eq.s32.totalorder %s16, 1
      %p97 = scmp.ne.s32.totalorder %s92, %s94
      %p98 = scmp.eq.s32.totalorder %s16, 0
      %p99 = por %p97, %p98
      %p100 = scmp.ne.s32.totalorder %s92, %s94
      %p101 = scmp.eq.s32.totalorder %s21, 1
      %p102 = por %p100, %p101
      %p103 = scmp.ne.s32.totalorder %s94, %s95
      %p104 = scmp.eq.s32.totalorder %s21, 0
      %p105 = por %p103, %p104
      %p106 = scmp.ne.s32.totalorder %s94, %s95
      %p107 = scmp.eq.s32.totalorder %s22, 1
      %p108 = por %p106, %p107
      %p110 = scmp.ne.s32.totalorder %s95, %s109
      %p111 = scmp.eq.s32.totalorder %s22, 0
      %p112 = por %p110, %p111
      %s114 = sadd.s32 %s113, 1
      %p117 = scmp.eq.s32.totalorder %s16, 1
      %p118 = scmp.ne.s32.totalorder %s113, %s115
      %p119 = scmp.eq.s32.totalorder %s16, 0
      %p120 = por %p118, %p119
      %p121 = scmp.ne.s32.totalorder %s113, %s115
      %p122 = scmp.eq.s32.totalorder %s21, 1
      %p123 = por %p121, %p122
      %p124 = scmp.ne.s32.totalorder %s115, %s116
      %p125 = scmp.eq.s32.totalorder %s21, 0
      %p126 = por %p124, %p125
      %p127 = scmp.ne.s32.totalorder %s115, %s116
      %p128 = scmp.eq.s32.totalorder %s22, 1
      %p129 = por %p127, %p128
      %p131 = scmp.ne.s32.totalorder %s116, %s130
      %p132 = scmp.eq.s32.totalorder %s22, 0
      %p133 = por %p131, %p132
      %s135 = sadd.s32 %s134, 1
      %p138 = scmp.eq.s32.totalorder %s16, 1
      %p139 = scmp.ne.s32.totalorder %s134, %s136
      %p140 = scmp.eq.s32.totalorder %s16, 0
      %p141 = por %p139, %p140
      %p142 = scmp.ne.s32.totalorder %s134, %s136
      %p143 = scmp.eq.s32.totalorder %s21, 1
      %p144 = por %p142, %p143
      %p145 = scmp.ne.s32.totalorder %s136, %s137
      %p146 = scmp.eq.s32.totalorder %s21, 0
      %p147 = por %p145, %p146
      %p148 = scmp.ne.s32.totalorder %s136, %s137
      %p149 = scmp.eq.s32.totalorder %s22, 1
      %p150 = por %p148, %p149
      %p152 = scmp.ne.s32.totalorder %s137, %s151
      %p153 = scmp.eq.s32.totalorder %s22, 0
      %p154 = por %p152, %p153
      %s156 = sadd.s32 %s155, 1
      %p159 = scmp.eq.s32.totalorder %s16, 1
      %p160 = scmp.ne.s32.totalorder %s155, %s157
      %p161 = scmp.eq.s32.totalorder %s16, 0
      %p162 = por %p160, %p161
      %p163 = scmp.ne.s32.totalorder %s155, %s157
      %p164 = scmp.eq.s32.totalorder %s21, 1
      %p165 = por %p163, %p164
      %p166 = scmp.ne.s32.totalorder %s157, %s158
      %p167 = scmp.eq.s32.totalorder %s21, 0
      %p168 = por %p166, %p167
      %p169 = scmp.ne.s32.totalorder %s157, %s158
      %p170 = scmp.eq.s32.totalorder %s22, 1
      %p171 = por %p169, %p170
      %p173 = scmp.ne.s32.totalorder %s158, %s172
      %p174 = scmp.eq.s32.totalorder %s22, 0
      %p175 = por %p173, %p174
      %s177 = sadd.s32 %s176, 1
      %p180 = scmp.eq.s32.totalorder %s16, 1
      %p181 = scmp.ne.s32.totalorder %s176, %s178
      %p182 = scmp.eq.s32.totalorder %s16, 0
      %p183 = por %p181, %p182
      %p184 = scmp.ne.s32.totalorder %s176, %s178
      %p185 = scmp.eq.s32.totalorder %s21, 1
      %p186 = por %p184, %p185
      %p187 = scmp.ne.s32.totalorder %s178, %s179
      %p188 = scmp.eq.s32.totalorder %s21, 0
      %p189 = por %p187, %p188
      %p190 = scmp.ne.s32.totalorder %s178, %s179
      %p191 = scmp.eq.s32.totalorder %s22, 1
      %p192 = por %p190, %p191
      %p194 = scmp.ne.s32.totalorder %s179, %s193
      %p195 = scmp.eq.s32.totalorder %s22, 0
      %p196 = por %p194, %p195
      %s197 = ssub.s32 %s16, %s23
      %p198 = scmp.eq.s32.totalorder %s197, 0
      %s200 = sadd.s32 %s199, 1
      %s201 = scalar_select %p198, %s199, %s200
      %p204 = pneg %p198
      %p205 = scmp.eq.s32.totalorder %s16, 1
      %p206 = por %p204, %p205
      %p207 = scmp.ne.s32.totalorder %s199, %s202
      %p208 = scmp.eq.s32.totalorder %s16, 0
      %p209 = por %p207, %p208
      %p210 = scmp.ne.s32.totalorder %s199, %s202
      %p211 = scmp.eq.s32.totalorder %s21, 1
      %p212 = por %p210, %p211
      %p213 = scmp.ne.s32.totalorder %s202, %s203
      %p214 = scmp.eq.s32.totalorder %s21, 0
      %p215 = por %p213, %p214
      %p216 = scmp.ne.s32.totalorder %s202, %s203
      %p217 = scmp.eq.s32.totalorder %s22, 1
      %p218 = por %p216, %p217
      %p220 = scmp.ne.s32.totalorder %s203, %s219
      %p221 = scmp.eq.s32.totalorder %s22, 0
      %p222 = por %p220, %p221
      %s223 = ssub.s32 %s16, %s23
      %p224 = scmp.eq.s32.totalorder %s223, 0
      %s226 = sadd.s32 %s225, 1
      %s227 = scalar_select %p224, %s225, %s226
      %p230 = pneg %p224
      %p231 = scmp.eq.s32.totalorder %s16, 1
      %p232 = por %p230, %p231
      %p233 = scmp.ne.s32.totalorder %s225, %s228
      %p234 = scmp.eq.s32.totalorder %s16, 0
      %p235 = por %p233, %p234
      %p236 = scmp.ne.s32.totalorder %s225, %s228
      %p237 = scmp.eq.s32.totalorder %s21, 1
      %p238 = por %p236, %p237
      %p239 = scmp.ne.s32.totalorder %s228, %s229
      %p240 = scmp.eq.s32.totalorder %s21, 0
      %p241 = por %p239, %p240
      %p242 = scmp.ne.s32.totalorder %s228, %s229
      %p243 = scmp.eq.s32.totalorder %s22, 1
      %p244 = por %p242, %p243
      %p246 = scmp.ne.s32.totalorder %s229, %s245
      %p247 = scmp.eq.s32.totalorder %s22, 0
      %p248 = por %p246, %p247
      %p249 = scmp.le.s32.totalorder 1, %s16
      %p250 = scmp.lt.s32.totalorder %s16, 3
      %p251 = pnand %p249, %p250
      %p252 = pneg %p251
      // Predicated region
      $region9: #{entity_rcnn_forward.3} parent=5 // pred_check
        _
      $region10: #{entity_rcnn_forward.3} parent=5 // pred_check_branch
        %254 = sbr.rel (%p251) target = $region12
      $region11: #{entity_rcnn_forward.3} parent=5 // pred_region
        %s255 = ssub.s32 %s16, 1
        // Predicated region
        $region13: #{entity_rcnn_forward.3} parent=11 // pred_check
          %p256 = pneg %p63
        $region14: #{entity_rcnn_forward.3} parent=11 // pred_check_branch
          %258 = sbr.rel (%p256) target = $region16
        $region15: #{entity_rcnn_forward.3} parent=11 // pred_region
          _
        $region16: #{entity_rcnn_forward.3} parent=11 // pred_fallthru
          _
        // Predicated region
        $region17: #{entity_rcnn_forward.3} parent=11 // pred_check
          %p259 = pneg %p84
        $region18: #{entity_rcnn_forward.3} parent=11 // pred_check_branch
          %261 = sbr.rel (%p259) target = $region20
        $region19: #{entity_rcnn_forward.3} parent=11 // pred_region
          _
        $region20: #{entity_rcnn_forward.3} parent=11 // pred_fallthru
          _
        // Predicated region
        $region21: #{entity_rcnn_forward.3} parent=11 // pred_check
          %p262 = pneg %p105
        $region22: #{entity_rcnn_forward.3} parent=11 // pred_check_branch
          %264 = sbr.rel (%p262) target = $region24
        $region23: #{entity_rcnn_forward.3} parent=11 // pred_region
          _
        $region24: #{entity_rcnn_forward.3} parent=11 // pred_fallthru
          _
        // Predicated region
        $region25: #{entity_rcnn_forward.3} parent=11 // pred_check
          %p265 = pneg %p126
        $region26: #{entity_rcnn_forward.3} parent=11 // pred_check_branch
          %267 = sbr.rel (%p265) target = $region28
        $region27: #{entity_rcnn_forward.3} parent=11 // pred_region
          _
        $region28: #{entity_rcnn_forward.3} parent=11 // pred_fallthru
          _
        // Predicated region
        $region29: #{entity_rcnn_forward.3} parent=11 // pred_check
          %p268 = pneg %p147
        $region30: #{entity_rcnn_forward.3} parent=11 // pred_check_branch
          %270 = sbr.rel (%p268) target = $region32
        $region31: #{entity_rcnn_forward.3} parent=11 // pred_region
          _
        $region32: #{entity_rcnn_forward.3} parent=11 // pred_fallthru
          _
        // Predicated region
        $region33: #{entity_rcnn_forward.3} parent=11 // pred_check
          %p271 = pneg %p168
        $region34: #{entity_rcnn_forward.3} parent=11 // pred_check_branch
          %273 = sbr.rel (%p271) target = $region36
        $region35: #{entity_rcnn_forward.3} parent=11 // pred_region
          _
        $region36: #{entity_rcnn_forward.3} parent=11 // pred_fallthru
          _
        // Predicated region
        $region37: #{entity_rcnn_forward.3} parent=11 // pred_check
          %p274 = pneg %p189
        $region38: #{entity_rcnn_forward.3} parent=11 // pred_check_branch
          %276 = sbr.rel (%p274) target = $region40
        $region39: #{entity_rcnn_forward.3} parent=11 // pred_region
          _
        $region40: #{entity_rcnn_forward.3} parent=11 // pred_fallthru
          _
      $region12: #{entity_rcnn_forward.3} parent=5 // pred_fallthru
        _
      %p277 = scmp.lt.s32.totalorder %s16, 2
      // Predicated region
      $region41: #{entity_rcnn_forward.3} parent=5 // pred_check
        %p278 = pneg %p277
      $region42: #{entity_rcnn_forward.3} parent=5 // pred_check_branch
        %280 = sbr.rel (%p278) target = $region44
      $region43: #{entity_rcnn_forward.3} parent=5 // pred_region
        // Predicated region
        $region45: #{entity_rcnn_forward.3} parent=43 // pred_check
          %p281 = pneg %p36
        $region46: #{entity_rcnn_forward.3} parent=43 // pred_check_branch
          %283 = sbr.rel (%p281) target = $region48
        $region47: #{entity_rcnn_forward.3} parent=43 // pred_region
          %s284 = sand.u32 %s26, 1
          %s285 = sand.u32 %s26, 1
          %s286 = smul.addr %s285, 96
          %s287 = scalar_lea.vmem [#allocation3], %s286
          %s288 = smul.u32 3, %s16
          %s289 = smul.addr %s288, 8
          %s290 = scalar_lea.vmem %s0, %s289
          // Predicated region
          $region49: #{entity_rcnn_forward.3} parent=47 // pred_check
            _
          $region50: #{entity_rcnn_forward.3} parent=47 // pred_check_branch
            %292 = sbr.rel (0) target = $region52
          $region51: #{entity_rcnn_forward.3} parent=47 // pred_region
            // Predicated region
            $region53: #{entity_rcnn_forward.3} parent=51 // pred_check
              _
            $region54: #{entity_rcnn_forward.3} parent=51 // pred_check_branch
              %294 = sbr.rel (0) target = $region56
            $region55: #{entity_rcnn_forward.3} parent=51 // pred_region
              loop: start=0, step=1, limit=1
              $region57: #{entity_rcnn_forward.3} parent=55 // loop_pre_header
                _
              $region58: #{entity_rcnn_forward.3} parent=55 // loop_header
                %s296 = sphi 0, %s300
                %p297 = scmp.ge.s32.totalorder %s296, 1
                %s301 = sphi %s290, %s290
                %s302 = sphi %s287, %s287
              $region59: #{entity_rcnn_forward.3} parent=55 // loop_header_branch
                %299 = sbr.rel (%p297) target = $region63
              $region60: #{entity_rcnn_forward.3} parent=55 // loop_body
                %v303 = vld [vmem:[%s301] sm:$0xff]
                %304 = vst [vmem:[%s302] sm:$0xff] %v303
                %v305 = vld [vmem:[%s301 + $0x8] sm:$0xff]
                %306 = vst [vmem:[%s302 + $0x8] sm:$0xff] %v305
                %v307 = vld [vmem:[%s301 + $0x10] sm:$0xff]
                %308 = vst [vmem:[%s302 + $0x10] sm:$0xff] %v307
                %v309 = vld [vmem:[%s301 + $0x30] sm:$0xff]
                %310 = vst [vmem:[%s302 + $0x18] sm:$0xff] %v309
                %v311 = vld [vmem:[%s301 + $0x38] sm:$0xff]
                %312 = vst [vmem:[%s302 + $0x20] sm:$0xff] %v311
                %v313 = vld [vmem:[%s301 + $0x40] sm:$0xff]
                %314 = vst [vmem:[%s302 + $0x28] sm:$0xff] %v313
                %v315 = vld [vmem:[%s301 + $0x60] sm:$0xff]
                %316 = vst [vmem:[%s302 + $0x30] sm:$0xff] %v315
                %v317 = vld [vmem:[%s301 + $0x68] sm:$0xff]
                %318 = vst [vmem:[%s302 + $0x38] sm:$0xff] %v317
                %v319 = vld [vmem:[%s301 + $0x70] sm:$0xff]
                %320 = vst [vmem:[%s302 + $0x40] sm:$0xff] %v319
                %v321 = vld [vmem:[%s301 + $0x90] sm:$0xff]
                %322 = vst [vmem:[%s302 + $0x48] sm:$0xff] %v321
                %v323 = vld [vmem:[%s301 + $0x98] sm:$0xff]
                %324 = vst [vmem:[%s302 + $0x50] sm:$0xff] %v323
                %v325 = vld [vmem:[%s301 + $0xa0] sm:$0xff]
                %326 = vst [vmem:[%s302 + $0x58] sm:$0xff] %v325
              $region61: #{entity_rcnn_forward.3} parent=55 // loop_footer
                %s300 = sadd.s32 1, %s296
              $region62: #{entity_rcnn_forward.3} parent=55 // loop_footer_branch
                %295 = sbr.rel target = $region58
              $region63: #{entity_rcnn_forward.3} parent=55 // loop_exit
                _
            $region56: #{entity_rcnn_forward.3} parent=51 // pred_fallthru
              _
            // Predicated region
            $region64: #{entity_rcnn_forward.3} parent=51 // pred_check
              _
            $region65: #{entity_rcnn_forward.3} parent=51 // pred_check_branch
              %328 = sbr.rel target = $region67
            $region66: #{entity_rcnn_forward.3} parent=51 // pred_region
              _
            $region67: #{entity_rcnn_forward.3} parent=51 // pred_fallthru
              _
          $region52: #{entity_rcnn_forward.3} parent=47 // pred_fallthru
            _
          %329 = vnop
        $region48: #{entity_rcnn_forward.3} parent=43 // pred_fallthru
          _
      $region44: #{entity_rcnn_forward.3} parent=5 // pred_fallthru
        _
      %p330 = scmp.le.s32.totalorder 1, %s16
      %p331 = scmp.lt.s32.totalorder %s16, 3
      %p332 = pnand %p330, %p331
      %p333 = pneg %p332
      // Predicated region
      $region68: #{entity_rcnn_forward.3} parent=5 // pred_check
        _
      $region69: #{entity_rcnn_forward.3} parent=5 // pred_check_branch
        %335 = sbr.rel (%p332) target = $region71
      $region70: #{entity_rcnn_forward.3} parent=5 // pred_region
        %s336 = ssub.s32 %s16, 1
        %s337 = sand.u32 %s29, 1
        %s338 = sand.u32 %s29, 1
        %s339 = smul.addr %s338, 96
        %s340 = scalar_lea.vmem [#allocation3], %s339
        // Predicated region
        $region72: #{entity_rcnn_forward.3} parent=70 // pred_check
          %p341 = pneg %p42
        $region73: #{entity_rcnn_forward.3} parent=70 // pred_check_branch
          %343 = sbr.rel (%p341) target = $region75
        $region74: #{entity_rcnn_forward.3} parent=70 // pred_region
          _
        $region75: #{entity_rcnn_forward.3} parent=70 // pred_fallthru
          _
        %s344 = sand.u32 %s29, 1
        %s345 = sand.u32 %s29, 1
        %s346 = smul.addr %s345, 96
        %s347 = scalar_lea.vmem [#allocation3], %s346
        %p348 = pneg %p42
        %p349 = pneg %p39
        %p350 = pneg %p63
        %p351 = pneg %p60
        %p352 = pneg %p84
        %p353 = pneg %p81
        %p354 = pneg %p105
        %p355 = pneg %p102
        %p356 = pneg %p126
        %p357 = pneg %p123
        %p358 = pneg %p147
        %p359 = pneg %p144
        %p360 = pneg %p168
        %p361 = pneg %p165
        %p362 = pneg %p189
        %p363 = pneg %p186
        %p364 = pneg %p215
        %p365 = pneg %p212
        %s366 = sand.u32 %s202, 1
        %s367 = sand.u32 %s202, 1
        %s368 = smul.addr %s367, 96
        %s369 = scalar_lea.vmem [#allocation4], %s368
        %p370 = pneg %p241
        %p371 = pneg %p238
        %s372 = sand.u32 %s228, 1
        %s373 = sand.u32 %s228, 1
        %s374 = smul.addr %s373, 240
        %s375 = scalar_lea.vmem [#allocation5], %s374
        %s376 = smul.u32 3, %s21
        %s377 = smul.u32 3, %s21
        %s378 = smul.u32 3, %s21
        %v379 = vld [vmem:[%s2] sm:$0xff]
        %v380 = vld [vmem:[%s2 + $0x8] sm:$0xff]
        %v381 = vld [vmem:[%s2 + $0x10] sm:$0xff]
        %v382 = vld [vmem:[%s2 + $0x18] sm:$0xff]
        %v383 = vld [vmem:[%s340] sm:$0xff]
        %v384 = vld [vmem:[%s340 + $0x8] sm:$0xff]
        %v385 = vld [vmem:[%s340 + $0x10] sm:$0xff]
        %v386 = vld [vmem:[%s340 + $0x18] sm:$0xff]
        %v387 = vld [vmem:[%s340 + $0x20] sm:$0xff]
        %v388 = vld [vmem:[%s340 + $0x28] sm:$0xff]
        %v389 = vld [vmem:[%s340 + $0x30] sm:$0xff]
        %v390 = vld [vmem:[%s340 + $0x38] sm:$0xff]
        %v391 = vld [vmem:[%s340 + $0x40] sm:$0xff]
        %v392 = vld [vmem:[%s340 + $0x48] sm:$0x7]
        %v393 = vld [vmem:[%s340 + $0x50] sm:$0x7]
        %v394 = vld [vmem:[%s340 + $0x58] sm:$0x7]
        %v395 = vld [vmem:[%s3] sm:$0xff]
        %v396 = vld [vmem:[%s3 + $0x8] sm:$0xff]
        %v397 = vld [vmem:[%s3 + $0x10] sm:$0xff]
        %v398 = vld [vmem:[%s3 + $0x18] sm:$0xff]
        %400 = vset.pattern.permute.xlu0 0
        %401 = vperm.xlu0 %400, %v395
        %v402 = vpop.permute.xlu0 %401
        %405 = vset.pattern.permute.xlu0 0
        %406 = vperm.xlu0 %405, %v396
        %v407 = vpop.permute.xlu0 %406
        %410 = vset.pattern.permute.xlu0 0
        %411 = vperm.xlu0 %410, %v397
        %v412 = vpop.permute.xlu0 %411
        %415 = vset.pattern.permute.xlu0 0
        %416 = vperm.xlu0 %415, %v398
        %v417 = vpop.permute.xlu0 %416
        %vm419 = vcmask 220160
        %v421 = vsel %vm419, %v379, 0
        %v424 = vsel %vm419, %v380, 0
        %v427 = vsel %vm419, %v381, 0
        %v430 = vsel %vm419, %v382, 0
        %vm432 = vcmask 1042432
        %v434 = vsel %vm432, %v392, 0
        %v437 = vsel %vm432, %v393, 0
        %v440 = vsel %vm432, %v394, 0
        %442 = vmatprep.subr.mxu0 %v384
        %443 = vmatpush1.msra.mxu0 %v383
        %444 = vmatprep.subr.mxu0 %v387
        %445 = vmatpush1.msra.mxu0 %v386
        %446 = vmatprep.subr.mxu0 %v390
        %447 = vmatpush1.msra.mxu0 %v389
        %448 = vmatprep.subr.mxu0 %v437
        %449 = vmatpush1.msra.mxu0 %v434
        %450 = vmatprep.subr.mxu0 0.0
        %451 = vmatpush1.msra.mxu0 0.0
        %452 = vmatprep.subr.mxu0 0.0
        %453 = vmatpush1.msra.mxu0 0.0
        %454 = vmatprep.subr.mxu0 0.0
        %455 = vmatpush1.msra.mxu0 0.0
        %456 = vmatprep.subr.mxu0 0.0
        %457 = vmatpush1.msra.mxu0 0.0
        %458 = vmatprep.subr.mxu0 0.0
        %459 = vmatpush1.msra.mxu0 0.0
        %460 = vmatprep.subr.mxu0 0.0
        %461 = vmatpush1.msra.mxu0 0.0
        %462 = vmatprep.subr.mxu0 0.0
        %463 = vmatpush1.msra.mxu0 0.0
        %464 = vmatprep.subr.mxu0 0.0
        %465 = vmatpush1.msra.mxu0 0.0
        %466 = vmatprep.subr.mxu0 0.0
        %467 = vmatpush1.msra.mxu0 0.0
        %468 = vmatprep.subr.mxu0 0.0
        %469 = vmatpush1.msra.mxu0 0.0
        %470 = vmatprep.subr.mxu0 0.0
        %471 = vmatpush1.msra.mxu0 0.0
        %472 = vmatprep.subr.mxu0 0.0
        %473 = vmatpush1.msra.mxu0 0.0
        %474 = vmatprep.subr.mxu0 0.0
        %475 = vmatpush1.msra.mxu0 0.0
        %476 = vmatprep.subr.mxu0 0.0
        %477 = vmatpush1.msra.mxu0 0.0
        %478 = vmatprep.subr.mxu0 0.0
        %479 = vmatpush1.msra.mxu0 0.0
        %480 = vmatprep.subr.mxu0 0.0
        %481 = vmatpush1.msra.mxu0 0.0
        %482 = vmatprep.subr.mxu0 0.0
        %483 = vmatpush1.msra.mxu0 0.0
        %484 = vmatprep.subr.mxu0 0.0
        %485 = vmatpush1.msra.mxu0 0.0
        %486 = vmatprep.subr.mxu0 0.0
        %487 = vmatpush1.msra.mxu0 0.0
        %488 = vmatprep.subr.mxu0 0.0
        %489 = vmatpush1.msra.mxu0 0.0
        %490 = vmatprep.subr.mxu0 0.0
        %491 = vmatpush1.msra.mxu0 0.0
        %492 = vmatprep.subr.mxu0 0.0
        %493 = vmatpush1.msra.mxu0 0.0
        %494 = vmatprep.subr.mxu0 0.0
        %495 = vmatpush1.msra.mxu0 0.0
        %496 = vmatprep.subr.mxu0 0.0
        %497 = vmatpush1.msra.mxu0 0.0
        %498 = vmatprep.subr.mxu0 0.0
        %499 = vmatpush1.msra.mxu0 0.0
        %500 = vmatprep.subr.mxu0 0.0
        %501 = vmatpush1.msra.mxu0 0.0
        %502 = vmatprep.subr.mxu0 0.0
        %503 = vmatpush1.msra.mxu0 0.0
        %504 = vmatprep.subr.mxu0 0.0
        %505 = vmatpush1.msra.mxu0 0.0
        %506 = vmatprep.mubr.f32.mxu0 0.0
        %507 = vmatmul.mubr.f32.gmra.mrb[0].mxu0 %v421
        %v508 = vpop.f32.mrb[0].mxu0
        %v509 = vadd.f32 %v402, %v508
        %v510 = vpop.f32.mrb[0].mxu0
        %v511 = vadd.f32 %v402, %v510
        %512 = vmatprep.mubr.f32.mxu0 0.0
        %513 = vmatmul.mubr.f32.gmra.mrb[0].mxu0 %v424
        %v514 = vpop.f32.mrb[0].mxu0
        %v515 = vadd.f32 %v407, %v514
        %v516 = vpop.f32.mrb[0].mxu0
        %v517 = vadd.f32 %v407, %v516
        %518 = vmatprep.mubr.f32.mxu0 0.0
        %519 = vmatmul.mubr.f32.gmra.mrb[0].mxu0 %v427
        %v520 = vpop.f32.mrb[0].mxu0
        %v521 = vadd.f32 %v412, %v520
        %v522 = vpop.f32.mrb[0].mxu0
        %v523 = vadd.f32 %v412, %v522
        %524 = vmatprep.mubr.f32.mxu0 0.0
        %525 = vmatmul.mubr.f32.gmra.mrb[0].mxu0 %v430
        %v526 = vpop.f32.mrb[0].mxu0
        %v527 = vadd.f32 %v417, %v526
        %v528 = vpop.f32.mrb[0].mxu0
        %v529 = vadd.f32 %v417, %v528
        %530 = vdwg.mxu0
        %531 = vmatprep.subr.mxu0 0.0
        %532 = vmatpush1.msra.mxu0 %v385
        %533 = vmatprep.subr.mxu0 0.0
        %534 = vmatpush1.msra.mxu0 %v388
        %535 = vmatprep.subr.mxu0 0.0
        %536 = vmatpush1.msra.mxu0 %v391
        %537 = vmatprep.subr.mxu0 0.0
        %538 = vmatpush1.msra.mxu0 %v440
        %539 = vmatprep.subr.mxu0 0.0
        %540 = vmatpush1.msra.mxu0 0.0
        %541 = vmatprep.subr.mxu0 0.0
        %542 = vmatpush1.msra.mxu0 0.0
        %543 = vmatprep.subr.mxu0 0.0
        %544 = vmatpush1.msra.mxu0 0.0
        %545 = vmatprep.subr.mxu0 0.0
        %546 = vmatpush1.msra.mxu0 0.0
        %547 = vmatprep.subr.mxu0 0.0
        %548 = vmatpush1.msra.mxu0 0.0
        %549 = vmatprep.subr.mxu0 0.0
        %550 = vmatpush1.msra.mxu0 0.0
        %551 = vmatprep.subr.mxu0 0.0
        %552 = vmatpush1.msra.mxu0 0.0
        %553 = vmatprep.subr.mxu0 0.0
        %554 = vmatpush1.msra.mxu0 0.0
        %555 = vmatprep.subr.mxu0 0.0
        %556 = vmatpush1.msra.mxu0 0.0
        %557 = vmatprep.subr.mxu0 0.0
        %558 = vmatpush1.msra.mxu0 0.0
        %559 = vmatprep.subr.mxu0 0.0
        %560 = vmatpush1.msra.mxu0 0.0
        %561 = vmatprep.subr.mxu0 0.0
        %562 = vmatpush1.msra.mxu0 0.0
        %563 = vmatprep.subr.mxu0 0.0
        %564 = vmatpush1.msra.mxu0 0.0
        %565 = vmatprep.subr.mxu0 0.0
        %566 = vmatpush1.msra.mxu0 0.0
        %567 = vmatprep.subr.mxu0 0.0
        %568 = vmatpush1.msra.mxu0 0.0
        %569 = vmatprep.subr.mxu0 0.0
        %570 = vmatpush1.msra.mxu0 0.0
        %571 = vmatprep.subr.mxu0 0.0
        %572 = vmatpush1.msra.mxu0 0.0
        %573 = vmatprep.subr.mxu0 0.0
        %574 = vmatpush1.msra.mxu0 0.0
        %575 = vmatprep.subr.mxu0 0.0
        %576 = vmatpush1.msra.mxu0 0.0
        %577 = vmatprep.subr.mxu0 0.0
        %578 = vmatpush1.msra.mxu0 0.0
        %579 = vmatprep.subr.mxu0 0.0
        %580 = vmatpush1.msra.mxu0 0.0
        %581 = vmatprep.subr.mxu0 0.0
        %582 = vmatpush1.msra.mxu0 0.0
        %583 = vmatprep.subr.mxu0 0.0
        %584 = vmatpush1.msra.mxu0 0.0
        %585 = vmatprep.subr.mxu0 0.0
        %586 = vmatpush1.msra.mxu0 0.0
        %587 = vmatprep.subr.mxu0 0.0
        %588 = vmatpush1.msra.mxu0 0.0
        %589 = vmatprep.subr.mxu0 0.0
        %590 = vmatpush1.msra.mxu0 0.0
        %591 = vmatprep.subr.mxu0 0.0
        %592 = vmatpush1.msra.mxu0 0.0
        %593 = vmatprep.subr.mxu0 0.0
        %594 = vmatpush1.msra.mxu0 0.0
        %595 = vmatprep.mubr.f32.mxu0 0.0
        %596 = vmatmul.mubr.f32.gmra.mrb[0].mxu0 %v421
        %v597 = vpop.f32.mrb[0].mxu0
        %v598 = vadd.f32 %v402, %v597
        %v599 = vpop.f32.mrb[0].mxu0
        %600 = vmatprep.mubr.f32.mxu0 0.0
        %601 = vmatmul.mubr.f32.gmra.mrb[0].mxu0 %v424
        %v602 = vpop.f32.mrb[0].mxu0
        %v603 = vadd.f32 %v407, %v602
        %v604 = vpop.f32.mrb[0].mxu0
        %605 = vmatprep.mubr.f32.mxu0 0.0
        %606 = vmatmul.mubr.f32.gmra.mrb[0].mxu0 %v427
        %v607 = vpop.f32.mrb[0].mxu0
        %v608 = vadd.f32 %v412, %v607
        %v609 = vpop.f32.mrb[0].mxu0
        %610 = vmatprep.mubr.f32.mxu0 0.0
        %611 = vmatmul.mubr.f32.gmra.mrb[0].mxu0 %v430
        %v612 = vpop.f32.mrb[0].mxu0
        %v613 = vadd.f32 %v417, %v612
        %v614 = vpop.f32.mrb[0].mxu0
        %615 = vdwg.mxu0
        %v616 = vmax.f32 %v509, 0.0
        %v617 = vmax.f32 %v511, 0.0
        %v618 = vmax.f32 %v598, 0.0
        %v619 = vmax.f32 %v515, 0.0
        %v620 = vmax.f32 %v517, 0.0
        %v621 = vmax.f32 %v603, 0.0
        %v622 = vmax.f32 %v521, 0.0
        %v623 = vmax.f32 %v523, 0.0
        %v624 = vmax.f32 %v608, 0.0
        %v625 = vmax.f32 %v527, 0.0
        %v626 = vmax.f32 %v529, 0.0
        %v627 = vmax.f32 %v613, 0.0
        %v628 = vmin.f32 %v616, 6.0
        %v629 = vmin.f32 %v617, 6.0
        %v630 = vmin.f32 %v618, 6.0
        %v631 = vmin.f32 %v619, 6.0
        %v632 = vmin.f32 %v620, 6.0
        %v633 = vmin.f32 %v621, 6.0
        %v634 = vmin.f32 %v622, 6.0
        %v635 = vmin.f32 %v623, 6.0
        %v636 = vmin.f32 %v624, 6.0
        %v637 = vmin.f32 %v625, 6.0
        %v638 = vmin.f32 %v626, 6.0
        %v639 = vmin.f32 %v627, 6.0
        %v640 = vld [vmem:[%s1] sm:$0x7]
        %v642 = vlaneseq
        %v643 = vshrl.u32 %v642, 7
        %v644 = vsub.s32 0, %v643
        %v645 = vrot.slane %v640, %v644
        %v646 = vlaneseq
        %v647 = vshrl.u32 %v646, 7
        %v648 = vsub.s32 1, %v647
        %v649 = vrot.slane %v640, %v648
        %v650 = vlaneseq
        %v651 = vshrl.u32 %v650, 7
        %v652 = vsub.s32 2, %v651
        %v653 = vrot.slane %v640, %v652
        %v657 = vmul.f32 %v628, %v645
        %v658 = vmul.f32 %v629, %v649
        %v659 = vmul.f32 %v630, %v653
        %v660 = vmul.f32 %v631, %v645
        %v661 = vmul.f32 %v632, %v649
        %v662 = vmul.f32 %v633, %v653
        %v663 = vmul.f32 %v634, %v645
        %v664 = vmul.f32 %v635, %v649
        %v665 = vmul.f32 %v636, %v653
        %v666 = vmul.f32 %v637, %v645
        %v667 = vmul.f32 %v638, %v649
        %v668 = vmul.f32 %v639, %v653
        %669 = vst [vmem:[%s369] sm:$0xff] %v657
        %670 = vst [vmem:[%s369 + $0x8] sm:$0xff] %v658
        %671 = vst [vmem:[%s369 + $0x10] sm:$0xff] %v659
        %672 = vst [vmem:[%s369 + $0x18] sm:$0xff] %v660
        %673 = vst [vmem:[%s369 + $0x20] sm:$0xff] %v661
        %674 = vst [vmem:[%s369 + $0x28] sm:$0xff] %v662
        %675 = vst [vmem:[%s369 + $0x30] sm:$0xff] %v663
        %676 = vst [vmem:[%s369 + $0x38] sm:$0xff] %v664
        %677 = vst [vmem:[%s369 + $0x40] sm:$0xff] %v665
        %678 = vst [vmem:[%s369 + $0x48] sm:$0xff] %v666
        %679 = vst [vmem:[%s369 + $0x50] sm:$0xff] %v667
        %680 = vst [vmem:[%s369 + $0x58] sm:$0xff] %v668
        %681 = vrot.lane.b32.xlu0 %v657, 19
        %v682 = vpop.permute.xlu0 %681
        %683 = vrot.lane.b32.xlu0 %v660, 19
        %v684 = vpop.permute.xlu0 %683
        %685 = vrot.lane.b32.xlu0 %v663, 19
        %v686 = vpop.permute.xlu0 %685
        %687 = vrot.lane.b32.xlu0 %v666, 19
        %v688 = vpop.permute.xlu0 %687
        %689 = vrot.lane.b32.xlu0 %v658, 19
        %v690 = vpop.permute.xlu0 %689
        %691 = vrot.lane.b32.xlu0 %v661, 19
        %v692 = vpop.permute.xlu0 %691
        %693 = vrot.lane.b32.xlu0 %v664, 19
        %v694 = vpop.permute.xlu0 %693
        %695 = vrot.lane.b32.xlu0 %v667, 19
        %v696 = vpop.permute.xlu0 %695
        %697 = vrot.lane.b32.xlu0 %v659, 19
        %v698 = vpop.permute.xlu0 %697
        %699 = vrot.lane.b32.xlu0 %v662, 19
        %v700 = vpop.permute.xlu0 %699
        %701 = vrot.lane.b32.xlu0 %v665, 19
        %v702 = vpop.permute.xlu0 %701
        %703 = vrot.lane.b32.xlu0 %v668, 19
        %v704 = vpop.permute.xlu0 %703
        %v705 = vlaneseq
        %v706 = vand.u32 %v705, 127
        %vm707 = vcmp.lt.s32.totalorder %v706, 19
        %v708 = vsel %vm707, %v690, %v698
        %v709 = vsel %vm707, %v692, %v700
        %v710 = vsel %vm707, %v694, %v702
        %v711 = vsel %vm707, %v696, %v704
        %v712 = vsel %vm707, %v682, %v690
        %v713 = vsel %vm707, %v684, %v692
        %v714 = vsel %vm707, %v686, %v694
        %v715 = vsel %vm707, %v688, %v696
        %v716 = vsel %vm707, %v698, %v682
        %v717 = vsel %vm707, %v700, %v684
        %v718 = vsel %vm707, %v702, %v686
        %v719 = vsel %vm707, %v704, %v688
        %720 = vst [vmem:[#allocation2] sm:$0xff] %v716
        %721 = vst [vmem:[#allocation2 + $0x8] sm:$0xff] %v712
        %722 = vst [vmem:[#allocation2 + $0x10] sm:$0xff] %v708
        %723 = vst [vmem:[#allocation2 + $0x18] sm:$0xff] %v717
        %724 = vst [vmem:[#allocation2 + $0x20] sm:$0xff] %v713
        %725 = vst [vmem:[#allocation2 + $0x28] sm:$0xff] %v709
        %726 = vst [vmem:[#allocation2 + $0x30] sm:$0xff] %v718
        %727 = vst [vmem:[#allocation2 + $0x38] sm:$0xff] %v714
        %728 = vst [vmem:[#allocation2 + $0x40] sm:$0xff] %v710
        %729 = vst [vmem:[#allocation2 + $0x48] sm:$0xff] %v719
        %730 = vst [vmem:[#allocation2 + $0x50] sm:$0xff] %v715
        %731 = vst [vmem:[#allocation2 + $0x58] sm:$0xff] %v711
        %732 = vrot.lane.b32.xlu0 %v657, 18
        %v733 = vpop.permute.xlu0 %732
        %734 = vrot.lane.b32.xlu0 %v660, 18
        %v735 = vpop.permute.xlu0 %734
        %736 = vrot.lane.b32.xlu0 %v663, 18
        %v737 = vpop.permute.xlu0 %736
        %738 = vrot.lane.b32.xlu0 %v666, 18
        %v739 = vpop.permute.xlu0 %738
        %740 = vrot.lane.b32.xlu0 %v658, 18
        %v741 = vpop.permute.xlu0 %740
        %742 = vrot.lane.b32.xlu0 %v661, 18
        %v743 = vpop.permute.xlu0 %742
        %744 = vrot.lane.b32.xlu0 %v664, 18
        %v745 = vpop.permute.xlu0 %744
        %746 = vrot.lane.b32.xlu0 %v667, 18
        %v747 = vpop.permute.xlu0 %746
        %748 = vrot.lane.b32.xlu0 %v659, 18
        %v749 = vpop.permute.xlu0 %748
        %750 = vrot.lane.b32.xlu0 %v662, 18
        %v751 = vpop.permute.xlu0 %750
        %752 = vrot.lane.b32.xlu0 %v665, 18
        %v753 = vpop.permute.xlu0 %752
        %754 = vrot.lane.b32.xlu0 %v668, 18
        %v755 = vpop.permute.xlu0 %754
        %vm756 = vcmp.lt.s32.totalorder %v706, 18
        %v757 = vsel %vm756, %v741, %v749
        %v758 = vsel %vm756, %v743, %v751
        %v759 = vsel %vm756, %v745, %v753
        %v760 = vsel %vm756, %v747, %v755
        %v761 = vsel %vm756, %v733, %v741
        %v762 = vsel %vm756, %v735, %v743
        %v763 = vsel %vm756, %v737, %v745
        %v764 = vsel %vm756, %v739, %v747
        %v765 = vsel %vm756, %v749, %v733
        %v766 = vsel %vm756, %v751, %v735
        %v767 = vsel %vm756, %v753, %v737
        %v768 = vsel %vm756, %v755, %v739
        %769 = vst [vmem:[#allocation2 + $0x60] sm:$0xff] %v765
        %770 = vst [vmem:[#allocation2 + $0x68] sm:$0xff] %v761
        %771 = vst [vmem:[#allocation2 + $0x70] sm:$0xff] %v757
        %772 = vst [vmem:[#allocation2 + $0x78] sm:$0xff] %v766
        %773 = vst [vmem:[#allocation2 + $0x80] sm:$0xff] %v762
        %774 = vst [vmem:[#allocation2 + $0x88] sm:$0xff] %v758
        %775 = vst [vmem:[#allocation2 + $0x90] sm:$0xff] %v767
        %776 = vst [vmem:[#allocation2 + $0x98] sm:$0xff] %v763
        %777 = vst [vmem:[#allocation2 + $0xa0] sm:$0xff] %v759
        %778 = vst [vmem:[#allocation2 + $0xa8] sm:$0xff] %v768
        %779 = vst [vmem:[#allocation2 + $0xb0] sm:$0xff] %v764
        %780 = vst [vmem:[#allocation2 + $0xb8] sm:$0xff] %v760
        %781 = vrot.lane.b32.xlu0 %v657, 17
        %v782 = vpop.permute.xlu0 %781
        %783 = vrot.lane.b32.xlu0 %v660, 17
        %v784 = vpop.permute.xlu0 %783
        %785 = vrot.lane.b32.xlu0 %v663, 17
        %v786 = vpop.permute.xlu0 %785
        %787 = vrot.lane.b32.xlu0 %v666, 17
        %v788 = vpop.permute.xlu0 %787
        %789 = vrot.lane.b32.xlu0 %v658, 17
        %v790 = vpop.permute.xlu0 %789
        %791 = vrot.lane.b32.xlu0 %v661, 17
        %v792 = vpop.permute.xlu0 %791
        %793 = vrot.lane.b32.xlu0 %v664, 17
        %v794 = vpop.permute.xlu0 %793
        %795 = vrot.lane.b32.xlu0 %v667, 17
        %v796 = vpop.permute.xlu0 %795
        %797 = vrot.lane.b32.xlu0 %v659, 17
        %v798 = vpop.permute.xlu0 %797
        %799 = vrot.lane.b32.xlu0 %v662, 17
        %v800 = vpop.permute.xlu0 %799
        %801 = vrot.lane.b32.xlu0 %v665, 17
        %v802 = vpop.permute.xlu0 %801
        %803 = vrot.lane.b32.xlu0 %v668, 17
        %v804 = vpop.permute.xlu0 %803
        %vm805 = vcmp.lt.s32.totalorder %v706, 17
        %v806 = vsel %vm805, %v790, %v798
        %v807 = vsel %vm805, %v792, %v800
        %v808 = vsel %vm805, %v794, %v802
        %v809 = vsel %vm805, %v796, %v804
        %v810 = vsel %vm805, %v782, %v790
        %v811 = vsel %vm805, %v784, %v792
        %v812 = vsel %vm805, %v786, %v794
        %v813 = vsel %vm805, %v788, %v796
        %v814 = vsel %vm805, %v798, %v782
        %v815 = vsel %vm805, %v800, %v784
        %v816 = vsel %vm805, %v802, %v786
        %v817 = vsel %vm805, %v804, %v788
        %818 = vst [vmem:[#allocation2 + $0xc0] sm:$0xff] %v814
        %819 = vst [vmem:[#allocation2 + $0xc8] sm:$0xff] %v810
        %820 = vst [vmem:[#allocation2 + $0xd0] sm:$0xff] %v806
        %821 = vst [vmem:[#allocation2 + $0xd8] sm:$0xff] %v815
        %822 = vst [vmem:[#allocation2 + $0xe0] sm:$0xff] %v811
        %823 = vst [vmem:[#allocation2 + $0xe8] sm:$0xff] %v807
        %824 = vst [vmem:[#allocation2 + $0xf0] sm:$0xff] %v816
        %825 = vst [vmem:[#allocation2 + $0xf8] sm:$0xff] %v812
        %826 = vst [vmem:[#allocation2 + $0x100] sm:$0xff] %v808
        %827 = vst [vmem:[#allocation2 + $0x108] sm:$0xff] %v817
        %828 = vst [vmem:[#allocation2 + $0x110] sm:$0xff] %v813
        %829 = vst [vmem:[#allocation2 + $0x118] sm:$0xff] %v809
        %830 = vrot.lane.b32.xlu0 %v657, 1
        %v831 = vpop.permute.xlu0 %830
        %832 = vrot.lane.b32.xlu0 %v660, 1
        %v833 = vpop.permute.xlu0 %832
        %834 = vrot.lane.b32.xlu0 %v663, 1
        %v835 = vpop.permute.xlu0 %834
        %836 = vrot.lane.b32.xlu0 %v666, 1
        %v837 = vpop.permute.xlu0 %836
        %838 = vrot.lane.b32.xlu0 %v658, 1
        %v839 = vpop.permute.xlu0 %838
        %840 = vrot.lane.b32.xlu0 %v661, 1
        %v841 = vpop.permute.xlu0 %840
        %842 = vrot.lane.b32.xlu0 %v664, 1
        %v843 = vpop.permute.xlu0 %842
        %844 = vrot.lane.b32.xlu0 %v667, 1
        %v845 = vpop.permute.xlu0 %844
        %846 = vrot.lane.b32.xlu0 %v659, 1
        %v847 = vpop.permute.xlu0 %846
        %848 = vrot.lane.b32.xlu0 %v662, 1
        %v849 = vpop.permute.xlu0 %848
        %850 = vrot.lane.b32.xlu0 %v665, 1
        %v851 = vpop.permute.xlu0 %850
        %852 = vrot.lane.b32.xlu0 %v668, 1
        %v853 = vpop.permute.xlu0 %852
        %vm854 = vcmp.lt.s32.totalorder %v706, 1
        %v855 = vsel %vm854, %v839, %v847
        %v856 = vsel %vm854, %v841, %v849
        %v857 = vsel %vm854, %v843, %v851
        %v858 = vsel %vm854, %v845, %v853
        %v859 = vsel %vm854, %v831, %v839
        %v860 = vsel %vm854, %v833, %v841
        %v861 = vsel %vm854, %v835, %v843
        %v862 = vsel %vm854, %v837, %v845
        %v863 = vsel %vm854, %v847, %v831
        %v864 = vsel %vm854, %v849, %v833
        %v865 = vsel %vm854, %v851, %v835
        %v866 = vsel %vm854, %v853, %v837
        %867 = vst [vmem:[#allocation2 + $0x120] sm:$0xff] %v863
        %868 = vst [vmem:[#allocation2 + $0x128] sm:$0xff] %v859
        %869 = vst [vmem:[#allocation2 + $0x130] sm:$0xff] %v855
        %870 = vst [vmem:[#allocation2 + $0x138] sm:$0xff] %v864
        %871 = vst [vmem:[#allocation2 + $0x140] sm:$0xff] %v860
        %872 = vst [vmem:[#allocation2 + $0x148] sm:$0xff] %v856
        %873 = vst [vmem:[#allocation2 + $0x150] sm:$0xff] %v865
        %874 = vst [vmem:[#allocation2 + $0x158] sm:$0xff] %v861
        %875 = vst [vmem:[#allocation2 + $0x160] sm:$0xff] %v857
        %876 = vst [vmem:[#allocation2 + $0x168] sm:$0xff] %v866
        %877 = vst [vmem:[#allocation2 + $0x170] sm:$0xff] %v862
        %878 = vst [vmem:[#allocation2 + $0x178] sm:$0xff] %v858
        %879 = vst [vmem:[#allocation2 + $0x180] sm:$0xff] %v657
        %880 = vst [vmem:[#allocation2 + $0x188] sm:$0xff] %v658
        %881 = vst [vmem:[#allocation2 + $0x190] sm:$0xff] %v659
        %882 = vst [vmem:[#allocation2 + $0x198] sm:$0xff] %v660
        %883 = vst [vmem:[#allocation2 + $0x1a0] sm:$0xff] %v661
        %884 = vst [vmem:[#allocation2 + $0x1a8] sm:$0xff] %v662
        %885 = vst [vmem:[#allocation2 + $0x1b0] sm:$0xff] %v663
        %886 = vst [vmem:[#allocation2 + $0x1b8] sm:$0xff] %v664
        %887 = vst [vmem:[#allocation2 + $0x1c0] sm:$0xff] %v665
        %888 = vst [vmem:[#allocation2 + $0x1c8] sm:$0xff] %v666
        %889 = vst [vmem:[#allocation2 + $0x1d0] sm:$0xff] %v667
        %890 = vst [vmem:[#allocation2 + $0x1d8] sm:$0xff] %v668
        %891 = vrot.lane.b32.xlu0 %v657, 127
        %v892 = vpop.permute.xlu0 %891
        %893 = vrot.lane.b32.xlu0 %v660, 127
        %v894 = vpop.permute.xlu0 %893
        %895 = vrot.lane.b32.xlu0 %v663, 127
        %v896 = vpop.permute.xlu0 %895
        %897 = vrot.lane.b32.xlu0 %v666, 127
        %v898 = vpop.permute.xlu0 %897
        %899 = vrot.lane.b32.xlu0 %v658, 127
        %v900 = vpop.permute.xlu0 %899
        %901 = vrot.lane.b32.xlu0 %v661, 127
        %v902 = vpop.permute.xlu0 %901
        %903 = vrot.lane.b32.xlu0 %v664, 127
        %v904 = vpop.permute.xlu0 %903
        %905 = vrot.lane.b32.xlu0 %v667, 127
        %v906 = vpop.permute.xlu0 %905
        %907 = vrot.lane.b32.xlu0 %v659, 127
        %v908 = vpop.permute.xlu0 %907
        %909 = vrot.lane.b32.xlu0 %v662, 127
        %v910 = vpop.permute.xlu0 %909
        %911 = vrot.lane.b32.xlu0 %v665, 127
        %v912 = vpop.permute.xlu0 %911
        %913 = vrot.lane.b32.xlu0 %v668, 127
        %v914 = vpop.permute.xlu0 %913
        %vm915 = vcmp.lt.s32.totalorder %v706, 127
        %v916 = vsel %vm915, %v900, %v908
        %v917 = vsel %vm915, %v902, %v910
        %v918 = vsel %vm915, %v904, %v912
        %v919 = vsel %vm915, %v906, %v914
        %v920 = vsel %vm915, %v892, %v900
        %v921 = vsel %vm915, %v894, %v902
        %v922 = vsel %vm915, %v896, %v904
        %v923 = vsel %vm915, %v898, %v906
        %v924 = vsel %vm915, %v908, %v892
        %v925 = vsel %vm915, %v910, %v894
        %v926 = vsel %vm915, %v912, %v896
        %v927 = vsel %vm915, %v914, %v898
        %928 = vst [vmem:[#allocation2 + $0x1e0] sm:$0xff] %v920
        %929 = vst [vmem:[#allocation2 + $0x1e8] sm:$0xff] %v916
        %930 = vst [vmem:[#allocation2 + $0x1f0] sm:$0xff] %v924
        %931 = vst [vmem:[#allocation2 + $0x1f8] sm:$0xff] %v921
        %932 = vst [vmem:[#allocation2 + $0x200] sm:$0xff] %v917
        %933 = vst [vmem:[#allocation2 + $0x208] sm:$0xff] %v925
        %934 = vst [vmem:[#allocation2 + $0x210] sm:$0xff] %v922
        %935 = vst [vmem:[#allocation2 + $0x218] sm:$0xff] %v918
        %936 = vst [vmem:[#allocation2 + $0x220] sm:$0xff] %v926
        %937 = vst [vmem:[#allocation2 + $0x228] sm:$0xff] %v923
        %938 = vst [vmem:[#allocation2 + $0x230] sm:$0xff] %v919
        %939 = vst [vmem:[#allocation2 + $0x238] sm:$0xff] %v927
        %940 = vrot.lane.b32.xlu0 %v657, 111
        %v941 = vpop.permute.xlu0 %940
        %942 = vrot.lane.b32.xlu0 %v660, 111
        %v943 = vpop.permute.xlu0 %942
        %944 = vrot.lane.b32.xlu0 %v663, 111
        %v945 = vpop.permute.xlu0 %944
        %946 = vrot.lane.b32.xlu0 %v666, 111
        %v947 = vpop.permute.xlu0 %946
        %948 = vrot.lane.b32.xlu0 %v658, 111
        %v949 = vpop.permute.xlu0 %948
        %950 = vrot.lane.b32.xlu0 %v661, 111
        %v951 = vpop.permute.xlu0 %950
        %952 = vrot.lane.b32.xlu0 %v664, 111
        %v953 = vpop.permute.xlu0 %952
        %954 = vrot.lane.b32.xlu0 %v667, 111
        %v955 = vpop.permute.xlu0 %954
        %956 = vrot.lane.b32.xlu0 %v659, 111
        %v957 = vpop.permute.xlu0 %956
        %958 = vrot.lane.b32.xlu0 %v662, 111
        %v959 = vpop.permute.xlu0 %958
        %960 = vrot.lane.b32.xlu0 %v665, 111
        %v961 = vpop.permute.xlu0 %960
        %962 = vrot.lane.b32.xlu0 %v668, 111
        %v963 = vpop.permute.xlu0 %962
        %vm964 = vcmp.lt.s32.totalorder %v706, 111
        %v965 = vsel %vm964, %v949, %v957
        %v966 = vsel %vm964, %v951, %v959
        %v967 = vsel %vm964, %v953, %v961
        %v968 = vsel %vm964, %v955, %v963
        %v969 = vsel %vm964, %v941, %v949
        %v970 = vsel %vm964, %v943, %v951
        %v971 = vsel %vm964, %v945, %v953
        %v972 = vsel %vm964, %v947, %v955
        %v973 = vsel %vm964, %v957, %v941
        %v974 = vsel %vm964, %v959, %v943
        %v975 = vsel %vm964, %v961, %v945
        %v976 = vsel %vm964, %v963, %v947
        %977 = vst [vmem:[#allocation2 + $0x240] sm:$0xff] %v969
        %978 = vst [vmem:[#allocation2 + $0x248] sm:$0xff] %v965
        %979 = vst [vmem:[#allocation2 + $0x250] sm:$0xff] %v973
        %980 = vst [vmem:[#allocation2 + $0x258] sm:$0xff] %v970
        %981 = vst [vmem:[#allocation2 + $0x260] sm:$0xff] %v966
        %982 = vst [vmem:[#allocation2 + $0x268] sm:$0xff] %v974
        %983 = vst [vmem:[#allocation2 + $0x270] sm:$0xff] %v971
        %984 = vst [vmem:[#allocation2 + $0x278] sm:$0xff] %v967
        %985 = vst [vmem:[#allocation2 + $0x280] sm:$0xff] %v975
        %986 = vst [vmem:[#allocation2 + $0x288] sm:$0xff] %v972
        %987 = vst [vmem:[#allocation2 + $0x290] sm:$0xff] %v968
        %988 = vst [vmem:[#allocation2 + $0x298] sm:$0xff] %v976
        %989 = vrot.lane.b32.xlu0 %v657, 110
        %v990 = vpop.permute.xlu0 %989
        %991 = vrot.lane.b32.xlu0 %v660, 110
        %v992 = vpop.permute.xlu0 %991
        %993 = vrot.lane.b32.xlu0 %v663, 110
        %v994 = vpop.permute.xlu0 %993
        %995 = vrot.lane.b32.xlu0 %v666, 110
        %v996 = vpop.permute.xlu0 %995
        %997 = vrot.lane.b32.xlu0 %v658, 110
        %v998 = vpop.permute.xlu0 %997
        %999 = vrot.lane.b32.xlu0 %v661, 110
        %v1000 = vpop.permute.xlu0 %999
        %1001 = vrot.lane.b32.xlu0 %v664, 110
        %v1002 = vpop.permute.xlu0 %1001
        %1003 = vrot.lane.b32.xlu0 %v667, 110
        %v1004 = vpop.permute.xlu0 %1003
        %1005 = vrot.lane.b32.xlu0 %v659, 110
        %v1006 = vpop.permute.xlu0 %1005
        %1007 = vrot.lane.b32.xlu0 %v662, 110
        %v1008 = vpop.permute.xlu0 %1007
        %1009 = vrot.lane.b32.xlu0 %v665, 110
        %v1010 = vpop.permute.xlu0 %1009
        %1011 = vrot.lane.b32.xlu0 %v668, 110
        %v1012 = vpop.permute.xlu0 %1011
        %vm1013 = vcmp.lt.s32.totalorder %v706, 110
        %v1014 = vsel %vm1013, %v998, %v1006
        %v1015 = vsel %vm1013, %v1000, %v1008
        %v1016 = vsel %vm1013, %v1002, %v1010
        %v1017 = vsel %vm1013, %v1004, %v1012
        %v1018 = vsel %vm1013, %v990, %v998
        %v1019 = vsel %vm1013, %v992, %v1000
        %v1020 = vsel %vm1013, %v994, %v1002
        %v1021 = vsel %vm1013, %v996, %v1004
        %v1022 = vsel %vm1013, %v1006, %v990
        %v1023 = vsel %vm1013, %v1008, %v992
        %v1024 = vsel %vm1013, %v1010, %v994
        %v1025 = vsel %vm1013, %v1012, %v996
        %1026 = vst [vmem:[#allocation2 + $0x2a0] sm:$0xff] %v1018
        %1027 = vst [vmem:[#allocation2 + $0x2a8] sm:$0xff] %v1014
        %1028 = vst [vmem:[#allocation2 + $0x2b0] sm:$0xff] %v1022
        %1029 = vst [vmem:[#allocation2 + $0x2b8] sm:$0xff] %v1019
        %1030 = vst [vmem:[#allocation2 + $0x2c0] sm:$0xff] %v1015
        %1031 = vst [vmem:[#allocation2 + $0x2c8] sm:$0xff] %v1023
        %1032 = vst [vmem:[#allocation2 + $0x2d0] sm:$0xff] %v1020
        %1033 = vst [vmem:[#allocation2 + $0x2d8] sm:$0xff] %v1016
        %1034 = vst [vmem:[#allocation2 + $0x2e0] sm:$0xff] %v1024
        %1035 = vst [vmem:[#allocation2 + $0x2e8] sm:$0xff] %v1021
        %1036 = vst [vmem:[#allocation2 + $0x2f0] sm:$0xff] %v1017
        %1037 = vst [vmem:[#allocation2 + $0x2f8] sm:$0xff] %v1025
        %1038 = vrot.lane.b32.xlu0 %v657, 109
        %v1039 = vpop.permute.xlu0 %1038
        %1040 = vrot.lane.b32.xlu0 %v660, 109
        %v1041 = vpop.permute.xlu0 %1040
        %1042 = vrot.lane.b32.xlu0 %v663, 109
        %v1043 = vpop.permute.xlu0 %1042
        %1044 = vrot.lane.b32.xlu0 %v666, 109
        %v1045 = vpop.permute.xlu0 %1044
        %1046 = vrot.lane.b32.xlu0 %v658, 109
        %v1047 = vpop.permute.xlu0 %1046
        %1048 = vrot.lane.b32.xlu0 %v661, 109
        %v1049 = vpop.permute.xlu0 %1048
        %1050 = vrot.lane.b32.xlu0 %v664, 109
        %v1051 = vpop.permute.xlu0 %1050
        %1052 = vrot.lane.b32.xlu0 %v667, 109
        %v1053 = vpop.permute.xlu0 %1052
        %1054 = vrot.lane.b32.xlu0 %v659, 109
        %v1055 = vpop.permute.xlu0 %1054
        %1056 = vrot.lane.b32.xlu0 %v662, 109
        %v1057 = vpop.permute.xlu0 %1056
        %1058 = vrot.lane.b32.xlu0 %v665, 109
        %v1059 = vpop.permute.xlu0 %1058
        %1060 = vrot.lane.b32.xlu0 %v668, 109
        %v1061 = vpop.permute.xlu0 %1060
        %vm1062 = vcmp.lt.s32.totalorder %v706, 109
        %v1063 = vsel %vm1062, %v1047, %v1055
        %v1064 = vsel %vm1062, %v1049, %v1057
        %v1065 = vsel %vm1062, %v1051, %v1059
        %v1066 = vsel %vm1062, %v1053, %v1061
        %v1067 = vsel %vm1062, %v1039, %v1047
        %v1068 = vsel %vm1062, %v1041, %v1049
        %v1069 = vsel %vm1062, %v1043, %v1051
        %v1070 = vsel %vm1062, %v1045, %v1053
        %v1071 = vsel %vm1062, %v1055, %v1039
        %v1072 = vsel %vm1062, %v1057, %v1041
        %v1073 = vsel %vm1062, %v1059, %v1043
        %v1074 = vsel %vm1062, %v1061, %v1045
        %1075 = vst [vmem:[#allocation2 + $0x300] sm:$0xff] %v1067
        %1076 = vst [vmem:[#allocation2 + $0x308] sm:$0xff] %v1063
        %1077 = vst [vmem:[#allocation2 + $0x310] sm:$0xff] %v1071
        %1078 = vst [vmem:[#allocation2 + $0x318] sm:$0xff] %v1068
        %1079 = vst [vmem:[#allocation2 + $0x320] sm:$0xff] %v1064
        %1080 = vst [vmem:[#allocation2 + $0x328] sm:$0xff] %v1072
        %1081 = vst [vmem:[#allocation2 + $0x330] sm:$0xff] %v1069
        %1082 = vst [vmem:[#allocation2 + $0x338] sm:$0xff] %v1065
        %1083 = vst [vmem:[#allocation2 + $0x340] sm:$0xff] %v1073
        %1084 = vst [vmem:[#allocation2 + $0x348] sm:$0xff] %v1070
        %1085 = vst [vmem:[#allocation2 + $0x350] sm:$0xff] %v1066
        %1086 = vst [vmem:[#allocation2 + $0x358] sm:$0xff] %v1074
        %v1087 = vld [vmem:[%s4] sm:$0xff]
        %v1088 = vld [vmem:[%s4 + $0x8] sm:$0xff]
        %v1089 = vld [vmem:[%s4 + $0x10] sm:$0xff]
        %v1090 = vld [vmem:[%s4 + $0x18] sm:$0xff]
        %v1091 = vld [vmem:[%s4 + $0x20] sm:$0xff]
        %v1092 = vld [vmem:[%s4 + $0x28] sm:$0xff]
        %v1093 = vld [vmem:[%s4 + $0x30] sm:$0xff]
        %v1094 = vld [vmem:[%s4 + $0x38] sm:$0xff]
        %v1095 = vld [vmem:[%s4 + $0x40] sm:$0xff]
        %v1096 = vld [vmem:[%s4 + $0x48] sm:$0xff]
        %v1097 = vld [vmem:[%s4 + $0x50] sm:$0xff]
        %v1098 = vld [vmem:[%s4 + $0x58] sm:$0xff]
        %v1099 = vld [vmem:[#allocation2] sm:$0xff]
        %v1100 = vld [vmem:[#allocation2 + $0x8] sm:$0xff]
        %v1101 = vld [vmem:[#allocation2 + $0x10] sm:$0xff]
        %v1102 = vld [vmem:[#allocation2 + $0x18] sm:$0xff]
        %v1103 = vld [vmem:[#allocation2 + $0x20] sm:$0xff]
        %v1104 = vld [vmem:[#allocation2 + $0x28] sm:$0xff]
        %v1105 = vld [vmem:[#allocation2 + $0x30] sm:$0xff]
        %v1106 = vld [vmem:[#allocation2 + $0x38] sm:$0xff]
        %v1107 = vld [vmem:[#allocation2 + $0x40] sm:$0xff]
        %v1108 = vld [vmem:[#allocation2 + $0x48] sm:$0xff]
        %v1109 = vld [vmem:[#allocation2 + $0x50] sm:$0xff]
        %v1110 = vld [vmem:[#allocation2 + $0x58] sm:$0xff]
        %v1111 = vld [vmem:[#allocation2 + $0x60] sm:$0xff]
        %v1112 = vld [vmem:[#allocation2 + $0x68] sm:$0xff]
        %v1113 = vld [vmem:[#allocation2 + $0x70] sm:$0xff]
        %v1114 = vld [vmem:[#allocation2 + $0x78] sm:$0xff]
        %v1115 = vld [vmem:[#allocation2 + $0x80] sm:$0xff]
        %v1116 = vld [vmem:[#allocation2 + $0x88] sm:$0xff]
        %v1117 = vld [vmem:[#allocation2 + $0x90] sm:$0xff]
        %v1118 = vld [vmem:[#allocation2 + $0x98] sm:$0xff]
        %v1119 = vld [vmem:[#allocation2 + $0xa0] sm:$0xff]
        %v1120 = vld [vmem:[#allocation2 + $0xa8] sm:$0xff]
        %v1121 = vld [vmem:[#allocation2 + $0xb0] sm:$0xff]
        %v1122 = vld [vmem:[#allocation2 + $0xb8] sm:$0xff]
        %v1123 = vld [vmem:[#allocation2 + $0xc0] sm:$0xff]
        %v1124 = vld [vmem:[#allocation2 + $0xc8] sm:$0xff]
        %v1125 = vld [vmem:[#allocation2 + $0xd0] sm:$0xff]
        %v1126 = vld [vmem:[#allocation2 + $0xd8] sm:$0xff]
        %v1127 = vld [vmem:[#allocation2 + $0xe0] sm:$0xff]
        %v1128 = vld [vmem:[#allocation2 + $0xe8] sm:$0xff]
        %v1129 = vld [vmem:[#allocation2 + $0xf0] sm:$0xff]
        %v1130 = vld [vmem:[#allocation2 + $0xf8] sm:$0xff]
        %v1131 = vld [vmem:[#allocation2 + $0x100] sm:$0xff]
        %v1132 = vld [vmem:[#allocation2 + $0x108] sm:$0xff]
        %v1133 = vld [vmem:[#allocation2 + $0x110] sm:$0xff]
        %v1134 = vld [vmem:[#allocation2 + $0x118] sm:$0xff]
        %v1135 = vld [vmem:[#allocation2 + $0x120] sm:$0xff]
        %v1136 = vld [vmem:[#allocation2 + $0x128] sm:$0xff]
        %v1137 = vld [vmem:[#allocation2 + $0x130] sm:$0xff]
        %v1138 = vld [vmem:[#allocation2 + $0x138] sm:$0xff]
        %v1139 = vld [vmem:[#allocation2 + $0x140] sm:$0xff]
        %v1140 = vld [vmem:[#allocation2 + $0x148] sm:$0xff]
        %v1141 = vld [vmem:[#allocation2 + $0x150] sm:$0xff]
        %v1142 = vld [vmem:[#allocation2 + $0x158] sm:$0xff]
        %v1143 = vld [vmem:[#allocation2 + $0x160] sm:$0xff]
        %v1144 = vld [vmem:[#allocation2 + $0x168] sm:$0xff]
        %v1145 = vld [vmem:[#allocation2 + $0x170] sm:$0xff]
        %v1146 = vld [vmem:[#allocation2 + $0x178] sm:$0xff]
        %v1147 = vld [vmem:[#allocation2 + $0x180] sm:$0xff]
        %v1148 = vld [vmem:[#allocation2 + $0x188] sm:$0xff]
        %v1149 = vld [vmem:[#allocation2 + $0x190] sm:$0xff]
        %v1150 = vld [vmem:[#allocation2 + $0x198] sm:$0xff]
        %v1151 = vld [vmem:[#allocation2 + $0x1a0] sm:$0xff]
        %v1152 = vld [vmem:[#allocation2 + $0x1a8] sm:$0xff]
        %v1153 = vld [vmem:[#allocation2 + $0x1b0] sm:$0xff]
        %v1154 = vld [vmem:[#allocation2 + $0x1b8] sm:$0xff]
        %v1155 = vld [vmem:[#allocation2 + $0x1c0] sm:$0xff]
        %v1156 = vld [vmem:[#allocation2 + $0x1c8] sm:$0xff]
        %v1157 = vld [vmem:[#allocation2 + $0x1d0] sm:$0xff]
        %v1158 = vld [vmem:[#allocation2 + $0x1d8] sm:$0xff]
        %v1159 = vld [vmem:[#allocation2 + $0x1e0] sm:$0xff]
        %v1160 = vld [vmem:[#allocation2 + $0x1e8] sm:$0xff]
        %v1161 = vld [vmem:[#allocation2 + $0x1f0] sm:$0xff]
        %v1162 = vld [vmem:[#allocation2 + $0x1f8] sm:$0xff]
        %v1163 = vld [vmem:[#allocation2 + $0x200] sm:$0xff]
        %v1164 = vld [vmem:[#allocation2 + $0x208] sm:$0xff]
        %v1165 = vld [vmem:[#allocation2 + $0x210] sm:$0xff]
        %v1166 = vld [vmem:[#allocation2 + $0x218] sm:$0xff]
        %v1167 = vld [vmem:[#allocation2 + $0x220] sm:$0xff]
        %v1168 = vld [vmem:[#allocation2 + $0x228] sm:$0xff]
        %v1169 = vld [vmem:[#allocation2 + $0x230] sm:$0xff]
        %v1170 = vld [vmem:[#allocation2 + $0x238] sm:$0xff]
        %v1171 = vld [vmem:[#allocation2 + $0x240] sm:$0xff]
        %v1172 = vld [vmem:[#allocation2 + $0x248] sm:$0xff]
        %v1173 = vld [vmem:[#allocation2 + $0x250] sm:$0xff]
        %v1174 = vld [vmem:[#allocation2 + $0x258] sm:$0xff]
        %v1175 = vld [vmem:[#allocation2 + $0x260] sm:$0xff]
        %v1176 = vld [vmem:[#allocation2 + $0x268] sm:$0xff]
        %v1177 = vld [vmem:[#allocation2 + $0x270] sm:$0xff]
        %v1178 = vld [vmem:[#allocation2 + $0x278] sm:$0xff]
        %v1179 = vld [vmem:[#allocation2 + $0x280] sm:$0xff]
        %v1180 = vld [vmem:[#allocation2 + $0x288] sm:$0xff]
        %v1181 = vld [vmem:[#allocation2 + $0x290] sm:$0xff]
        %v1182 = vld [vmem:[#allocation2 + $0x298] sm:$0xff]
        %v1183 = vld [vmem:[#allocation2 + $0x2a0] sm:$0xff]
        %v1184 = vld [vmem:[#allocation2 + $0x2a8] sm:$0xff]
        %v1185 = vld [vmem:[#allocation2 + $0x2b0] sm:$0xff]
        %v1186 = vld [vmem:[#allocation2 + $0x2b8] sm:$0xff]
        %v1187 = vld [vmem:[#allocation2 + $0x2c0] sm:$0xff]
        %v1188 = vld [vmem:[#allocation2 + $0x2c8] sm:$0xff]
        %v1189 = vld [vmem:[#allocation2 + $0x2d0] sm:$0xff]
        %v1190 = vld [vmem:[#allocation2 + $0x2d8] sm:$0xff]
        %v1191 = vld [vmem:[#allocation2 + $0x2e0] sm:$0xff]
        %v1192 = vld [vmem:[#allocation2 + $0x2e8] sm:$0xff]
        %v1193 = vld [vmem:[#allocation2 + $0x2f0] sm:$0xff]
        %v1194 = vld [vmem:[#allocation2 + $0x2f8] sm:$0xff]
        %v1195 = vld [vmem:[#allocation2 + $0x300] sm:$0xff]
        %v1196 = vld [vmem:[#allocation2 + $0x308] sm:$0xff]
        %v1197 = vld [vmem:[#allocation2 + $0x310] sm:$0xff]
        %v1198 = vld [vmem:[#allocation2 + $0x318] sm:$0xff]
        %v1199 = vld [vmem:[#allocation2 + $0x320] sm:$0xff]
        %v1200 = vld [vmem:[#allocation2 + $0x328] sm:$0xff]
        %v1201 = vld [vmem:[#allocation2 + $0x330] sm:$0xff]
        %v1202 = vld [vmem:[#allocation2 + $0x338] sm:$0xff]
        %v1203 = vld [vmem:[#allocation2 + $0x340] sm:$0xff]
        %v1204 = vld [vmem:[#allocation2 + $0x348] sm:$0xff]
        %v1205 = vld [vmem:[#allocation2 + $0x350] sm:$0xff]
        %v1206 = vld [vmem:[#allocation2 + $0x358] sm:$0xff]
        %v1207 = vld [vmem:[%s5] sm:$0xff]
        %v1208 = vld [vmem:[%s5 + $0x8] sm:$0xff]
        %v1209 = vld [vmem:[%s5 + $0x10] sm:$0xff]
        %v1210 = vld [vmem:[%s5 + $0x18] sm:$0xff]
        %1212 = vset.pattern.permute.xlu0 0
        %1213 = vperm.xlu0 %1212, %v1207
        %v1214 = vpop.permute.xlu0 %1213
        %1217 = vset.pattern.permute.xlu0 0
        %1218 = vperm.xlu0 %1217, %v1208
        %v1219 = vpop.permute.xlu0 %1218
        %1222 = vset.pattern.permute.xlu0 0
        %1223 = vperm.xlu0 %1222, %v1209
        %v1224 = vpop.permute.xlu0 %1223
        %1227 = vset.pattern.permute.xlu0 0
        %1228 = vperm.xlu0 %1227, %v1210
        %v1229 = vpop.permute.xlu0 %1228
        %vm1231 = vcmask 261120
        %v1233 = vsel %vm1231, %v1089, 0
        %v1236 = vsel %vm1231, %v1092, 0
        %v1239 = vsel %vm1231, %v1095, 0
        %v1242 = vsel %vm1231, %v1098, 0
        %1244 = vmatprep.subr.mxu0 %v1100
        %1245 = vmatpush1.msra.mxu0 %v1099
        %1246 = vmatprep.subr.mxu0 %v1103
        %1247 = vmatpush1.msra.mxu0 %v1102
        %1248 = vmatprep.subr.mxu0 %v1106
        %1249 = vmatpush1.msra.mxu0 %v1105
        %1250 = vmatprep.subr.mxu0 %v1109
        %1251 = vmatpush1.msra.mxu0 %v1108
        %1252 = vmatprep.subr.mxu0 %v1112
        %1253 = vmatpush1.msra.mxu0 %v1111
        %1254 = vmatprep.subr.mxu0 %v1115
        %1255 = vmatpush1.msra.mxu0 %v1114
        %1256 = vmatprep.subr.mxu0 %v1118
        %1257 = vmatpush1.msra.mxu0 %v1117
        %1258 = vmatprep.subr.mxu0 %v1121
        %1259 = vmatpush1.msra.mxu0 %v1120
        %1260 = vmatprep.subr.mxu0 %v1124
        %1261 = vmatpush1.msra.mxu0 %v1123
        %1262 = vmatprep.subr.mxu0 %v1127
        %1263 = vmatpush1.msra.mxu0 %v1126
        %1264 = vmatprep.subr.mxu0 %v1130
        %1265 = vmatpush1.msra.mxu0 %v1129
        %1266 = vmatprep.subr.mxu0 %v1133
        %1267 = vmatpush1.msra.mxu0 %v1132
        %1268 = vmatprep.subr.mxu0 %v1136
        %1269 = vmatpush1.msra.mxu0 %v1135
        %1270 = vmatprep.subr.mxu0 %v1139
        %1271 = vmatpush1.msra.mxu0 %v1138
        %1272 = vmatprep.subr.mxu0 %v1142
        %1273 = vmatpush1.msra.mxu0 %v1141
        %1274 = vmatprep.subr.mxu0 %v1145
        %1275 = vmatpush1.msra.mxu0 %v1144
        %1276 = vmatprep.subr.mxu0 %v1148
        %1277 = vmatpush1.msra.mxu0 %v1147
        %1278 = vmatprep.subr.mxu0 %v1151
        %1279 = vmatpush1.msra.mxu0 %v1150
        %1280 = vmatprep.subr.mxu0 %v1154
        %1281 = vmatpush1.msra.mxu0 %v1153
        %1282 = vmatprep.subr.mxu0 %v1157
        %1283 = vmatpush1.msra.mxu0 %v1156
        %1284 = vmatprep.subr.mxu0 %v1160
        %1285 = vmatpush1.msra.mxu0 %v1159
        %1286 = vmatprep.subr.mxu0 %v1163
        %1287 = vmatpush1.msra.mxu0 %v1162
        %1288 = vmatprep.subr.mxu0 %v1166
        %1289 = vmatpush1.msra.mxu0 %v1165
        %1290 = vmatprep.subr.mxu0 %v1169
        %1291 = vmatpush1.msra.mxu0 %v1168
        %1292 = vmatprep.subr.mxu0 %v1172
        %1293 = vmatpush1.msra.mxu0 %v1171
        %1294 = vmatprep.subr.mxu0 %v1175
        %1295 = vmatpush1.msra.mxu0 %v1174
        %1296 = vmatprep.subr.mxu0 %v1178
        %1297 = vmatpush1.msra.mxu0 %v1177
        %1298 = vmatprep.subr.mxu0 %v1181
        %1299 = vmatpush1.msra.mxu0 %v1180
        %1300 = vmatprep.subr.mxu0 %v1184
        %1301 = vmatpush1.msra.mxu0 %v1183
        %1302 = vmatprep.subr.mxu0 %v1187
        %1303 = vmatpush1.msra.mxu0 %v1186
        %1304 = vmatprep.subr.mxu0 %v1190
        %1305 = vmatpush1.msra.mxu0 %v1189
        %1306 = vmatprep.subr.mxu0 %v1193
        %1307 = vmatpush1.msra.mxu0 %v1192
        %1308 = vmatprep.mubr.f32.mxu0 %v1088
        %1309 = vmatmul.mubr.f32.gmra.mrb[0].mxu0 %v1087
        %v1310 = vpop.f32.mrb[0].mxu0
        %v1311 = vadd.f32 %v1214, %v1310
        %v1312 = vpop.f32.mrb[0].mxu0
        %v1313 = vadd.f32 %v1214, %v1312
        %1314 = vmatprep.mubr.f32.mxu0 %v1091
        %1315 = vmatmul.mubr.f32.gmra.mrb[0].mxu0 %v1090
        %v1316 = vpop.f32.mrb[0].mxu0
        %v1317 = vadd.f32 %v1219, %v1316
        %v1318 = vpop.f32.mrb[0].mxu0
        %v1319 = vadd.f32 %v1219, %v1318
        %1320 = vmatprep.mubr.f32.mxu0 %v1094
        %1321 = vmatmul.mubr.f32.gmra.mrb[0].mxu0 %v1093
        %v1322 = vpop.f32.mrb[0].mxu0
        %v1323 = vadd.f32 %v1224, %v1322
        %v1324 = vpop.f32.mrb[0].mxu0
        %v1325 = vadd.f32 %v1224, %v1324
        %1326 = vmatprep.mubr.f32.mxu0 %v1097
        %1327 = vmatmul.mubr.f32.gmra.mrb[0].mxu0 %v1096
        %v1328 = vpop.f32.mrb[0].mxu0
        %v1329 = vadd.f32 %v1229, %v1328
        %v1330 = vpop.f32.mrb[0].mxu0
        %v1331 = vadd.f32 %v1229, %v1330
        %1332 = vdwg.mxu0
        %1333 = vmatprep.subr.mxu0 %v1196
        %1334 = vmatpush1.msra.mxu0 %v1195
        %1335 = vmatprep.subr.mxu0 %v1199
        %1336 = vmatpush1.msra.mxu0 %v1198
        %1337 = vmatprep.subr.mxu0 %v1202
        %1338 = vmatpush1.msra.mxu0 %v1201
        %1339 = vmatprep.subr.mxu0 %v1205
        %1340 = vmatpush1.msra.mxu0 %v1204
        %1341 = vmatprep.subr.mxu0 0.0
        %1342 = vmatpush1.msra.mxu0 0.0
        %1343 = vmatprep.subr.mxu0 0.0
        %1344 = vmatpush1.msra.mxu0 0.0
        %1345 = vmatprep.subr.mxu0 0.0
        %1346 = vmatpush1.msra.mxu0 0.0
        %1347 = vmatprep.subr.mxu0 0.0
        %1348 = vmatpush1.msra.mxu0 0.0
        %1349 = vmatprep.subr.mxu0 0.0
        %1350 = vmatpush1.msra.mxu0 0.0
        %1351 = vmatprep.subr.mxu0 0.0
        %1352 = vmatpush1.msra.mxu0 0.0
        %1353 = vmatprep.subr.mxu0 0.0
        %1354 = vmatpush1.msra.mxu0 0.0
        %1355 = vmatprep.subr.mxu0 0.0
        %1356 = vmatpush1.msra.mxu0 0.0
        %1357 = vmatprep.subr.mxu0 0.0
        %1358 = vmatpush1.msra.mxu0 0.0
        %1359 = vmatprep.subr.mxu0 0.0
        %1360 = vmatpush1.msra.mxu0 0.0
        %1361 = vmatprep.subr.mxu0 0.0
        %1362 = vmatpush1.msra.mxu0 0.0
        %1363 = vmatprep.subr.mxu0 0.0
        %1364 = vmatpush1.msra.mxu0 0.0
        %1365 = vmatprep.subr.mxu0 0.0
        %1366 = vmatpush1.msra.mxu0 0.0
        %1367 = vmatprep.subr.mxu0 0.0
        %1368 = vmatpush1.msra.mxu0 0.0
        %1369 = vmatprep.subr.mxu0 0.0
        %1370 = vmatpush1.msra.mxu0 0.0
        %1371 = vmatprep.subr.mxu0 0.0
        %1372 = vmatpush1.msra.mxu0 0.0
        %1373 = vmatprep.subr.mxu0 0.0
        %1374 = vmatpush1.msra.mxu0 0.0
        %1375 = vmatprep.subr.mxu0 0.0
        %1376 = vmatpush1.msra.mxu0 0.0
        %1377 = vmatprep.subr.mxu0 0.0
        %1378 = vmatpush1.msra.mxu0 0.0
        %1379 = vmatprep.subr.mxu0 0.0
        %1380 = vmatpush1.msra.mxu0 0.0
        %1381 = vmatprep.subr.mxu0 0.0
        %1382 = vmatpush1.msra.mxu0 0.0
        %1383 = vmatprep.subr.mxu0 0.0
        %1384 = vmatpush1.msra.mxu0 0.0
        %1385 = vmatprep.subr.mxu0 0.0
        %1386 = vmatpush1.msra.mxu0 0.0
        %1387 = vmatprep.subr.mxu0 0.0
        %1388 = vmatpush1.msra.mxu0 0.0
        %1389 = vmatprep.subr.mxu0 0.0
        %1390 = vmatpush1.msra.mxu0 0.0
        %1391 = vmatprep.subr.mxu0 0.0
        %1392 = vmatpush1.msra.mxu0 0.0
        %1393 = vmatprep.subr.mxu0 0.0
        %1394 = vmatpush1.msra.mxu0 0.0
        %1395 = vmatprep.subr.mxu0 0.0
        %1396 = vmatpush1.msra.mxu0 0.0
        %1397 = vmatprep.mubr.f32.mxu0 0.0
        %1398 = vmatmul.mubr.f32.gmra.mrb[0].mxu0 %v1233
        %v1399 = vpop.f32.mrb[0].mxu0
        %v1400 = vadd.f32 %v1311, %v1399
        %v1401 = vpop.f32.mrb[0].mxu0
        %v1402 = vadd.f32 %v1313, %v1401
        %1403 = vmatprep.mubr.f32.mxu0 0.0
        %1404 = vmatmul.mubr.f32.gmra.mrb[0].mxu0 %v1236
        %v1405 = vpop.f32.mrb[0].mxu0
        %v1406 = vadd.f32 %v1317, %v1405
        %v1407 = vpop.f32.mrb[0].mxu0
        %v1408 = vadd.f32 %v1319, %v1407
        %1409 = vmatprep.mubr.f32.mxu0 0.0
        %1410 = vmatmul.mubr.f32.gmra.mrb[0].mxu0 %v1239
        %v1411 = vpop.f32.mrb[0].mxu0
        %v1412 = vadd.f32 %v1323, %v1411
        %v1413 = vpop.f32.mrb[0].mxu0
        %v1414 = vadd.f32 %v1325, %v1413
        %1415 = vmatprep.mubr.f32.mxu0 0.0
        %1416 = vmatmul.mubr.f32.gmra.mrb[0].mxu0 %v1242
        %v1417 = vpop.f32.mrb[0].mxu0
        %v1418 = vadd.f32 %v1329, %v1417
        %v1419 = vpop.f32.mrb[0].mxu0
        %v1420 = vadd.f32 %v1331, %v1419
        %1421 = vdwg.mxu0
        %1422 = vmatprep.subr.mxu0 0.0
        %1423 = vmatpush1.msra.mxu0 %v1101
        %1424 = vmatprep.subr.mxu0 0.0
        %1425 = vmatpush1.msra.mxu0 %v1104
        %1426 = vmatprep.subr.mxu0 0.0
        %1427 = vmatpush1.msra.mxu0 %v1107
        %1428 = vmatprep.subr.mxu0 0.0
        %1429 = vmatpush1.msra.mxu0 %v1110
        %1430 = vmatprep.subr.mxu0 0.0
        %1431 = vmatpush1.msra.mxu0 %v1113
        %1432 = vmatprep.subr.mxu0 0.0
        %1433 = vmatpush1.msra.mxu0 %v1116
        %1434 = vmatprep.subr.mxu0 0.0
        %1435 = vmatpush1.msra.mxu0 %v1119
        %1436 = vmatprep.subr.mxu0 0.0
        %1437 = vmatpush1.msra.mxu0 %v1122
        %1438 = vmatprep.subr.mxu0 0.0
        %1439 = vmatpush1.msra.mxu0 %v1125
        %1440 = vmatprep.subr.mxu0 0.0
        %1441 = vmatpush1.msra.mxu0 %v1128
        %1442 = vmatprep.subr.mxu0 0.0
        %1443 = vmatpush1.msra.mxu0 %v1131
        %1444 = vmatprep.subr.mxu0 0.0
        %1445 = vmatpush1.msra.mxu0 %v1134
        %1446 = vmatprep.subr.mxu0 0.0
        %1447 = vmatpush1.msra.mxu0 %v1137
        %1448 = vmatprep.subr.mxu0 0.0
        %1449 = vmatpush1.msra.mxu0 %v1140
        %1450 = vmatprep.subr.mxu0 0.0
        %1451 = vmatpush1.msra.mxu0 %v1143
        %1452 = vmatprep.subr.mxu0 0.0
        %1453 = vmatpush1.msra.mxu0 %v1146
        %1454 = vmatprep.subr.mxu0 0.0
        %1455 = vmatpush1.msra.mxu0 %v1149
        %1456 = vmatprep.subr.mxu0 0.0
        %1457 = vmatpush1.msra.mxu0 %v1152
        %1458 = vmatprep.subr.mxu0 0.0
        %1459 = vmatpush1.msra.mxu0 %v1155
        %1460 = vmatprep.subr.mxu0 0.0
        %1461 = vmatpush1.msra.mxu0 %v1158
        %1462 = vmatprep.subr.mxu0 0.0
        %1463 = vmatpush1.msra.mxu0 %v1161
        %1464 = vmatprep.subr.mxu0 0.0
        %1465 = vmatpush1.msra.mxu0 %v1164
        %1466 = vmatprep.subr.mxu0 0.0
        %1467 = vmatpush1.msra.mxu0 %v1167
        %1468 = vmatprep.subr.mxu0 0.0
        %1469 = vmatpush1.msra.mxu0 %v1170
        %1470 = vmatprep.subr.mxu0 0.0
        %1471 = vmatpush1.msra.mxu0 %v1173
        %1472 = vmatprep.subr.mxu0 0.0
        %1473 = vmatpush1.msra.mxu0 %v1176
        %1474 = vmatprep.subr.mxu0 0.0
        %1475 = vmatpush1.msra.mxu0 %v1179
        %1476 = vmatprep.subr.mxu0 0.0
        %1477 = vmatpush1.msra.mxu0 %v1182
        %1478 = vmatprep.subr.mxu0 0.0
        %1479 = vmatpush1.msra.mxu0 %v1185
        %1480 = vmatprep.subr.mxu0 0.0
        %1481 = vmatpush1.msra.mxu0 %v1188
        %1482 = vmatprep.subr.mxu0 0.0
        %1483 = vmatpush1.msra.mxu0 %v1191
        %1484 = vmatprep.subr.mxu0 0.0
        %1485 = vmatpush1.msra.mxu0 %v1194
        %1486 = vmatprep.mubr.f32.mxu0 %v1088
        %1487 = vmatmul.mubr.f32.gmra.mrb[0].mxu0 %v1087
        %v1488 = vpop.f32.mrb[0].mxu0
        %v1489 = vadd.f32 %v1214, %v1488
        %v1490 = vpop.f32.mrb[0].mxu0
        %1491 = vmatprep.mubr.f32.mxu0 %v1091
        %1492 = vmatmul.mubr.f32.gmra.mrb[0].mxu0 %v1090
        %v1493 = vpop.f32.mrb[0].mxu0
        %v1494 = vadd.f32 %v1219, %v1493
        %v1495 = vpop.f32.mrb[0].mxu0
        %1496 = vmatprep.mubr.f32.mxu0 %v1094
        %1497 = vmatmul.mubr.f32.gmra.mrb[0].mxu0 %v1093
        %v1498 = vpop.f32.mrb[0].mxu0
        %v1499 = vadd.f32 %v1224, %v1498
        %v1500 = vpop.f32.mrb[0].mxu0
        %1501 = vmatprep.mubr.f32.mxu0 %v1097
        %1502 = vmatmul.mubr.f32.gmra.mrb[0].mxu0 %v1096
        %v1503 = vpop.f32.mrb[0].mxu0
        %v1504 = vadd.f32 %v1229, %v1503
        %v1505 = vpop.f32.mrb[0].mxu0
        %1506 = vdwg.mxu0
        %1507 = vmatprep.subr.mxu0 0.0
        %1508 = vmatpush1.msra.mxu0 %v1197
        %1509 = vmatprep.subr.mxu0 0.0
        %1510 = vmatpush1.msra.mxu0 %v1200
        %1511 = vmatprep.subr.mxu0 0.0
        %1512 = vmatpush1.msra.mxu0 %v1203
        %1513 = vmatprep.subr.mxu0 0.0
        %1514 = vmatpush1.msra.mxu0 %v1206
        %1515 = vmatprep.subr.mxu0 0.0
        %1516 = vmatpush1.msra.mxu0 0.0
        %1517 = vmatprep.subr.mxu0 0.0
        %1518 = vmatpush1.msra.mxu0 0.0
        %1519 = vmatprep.subr.mxu0 0.0
        %1520 = vmatpush1.msra.mxu0 0.0
        %1521 = vmatprep.subr.mxu0 0.0
        %1522 = vmatpush1.msra.mxu0 0.0
        %1523 = vmatprep.subr.mxu0 0.0
        %1524 = vmatpush1.msra.mxu0 0.0
        %1525 = vmatprep.subr.mxu0 0.0
        %1526 = vmatpush1.msra.mxu0 0.0
        %1527 = vmatprep.subr.mxu0 0.0
        %1528 = vmatpush1.msra.mxu0 0.0
        %1529 = vmatprep.subr.mxu0 0.0
        %1530 = vmatpush1.msra.mxu0 0.0
        %1531 = vmatprep.subr.mxu0 0.0
        %1532 = vmatpush1.msra.mxu0 0.0
        %1533 = vmatprep.subr.mxu0 0.0
        %1534 = vmatpush1.msra.mxu0 0.0
        %1535 = vmatprep.subr.mxu0 0.0
        %1536 = vmatpush1.msra.mxu0 0.0
        %1537 = vmatprep.subr.mxu0 0.0
        %1538 = vmatpush1.msra.mxu0 0.0
        %1539 = vmatprep.subr.mxu0 0.0
        %1540 = vmatpush1.msra.mxu0 0.0
        %1541 = vmatprep.subr.mxu0 0.0
        %1542 = vmatpush1.msra.mxu0 0.0
        %1543 = vmatprep.subr.mxu0 0.0
        %1544 = vmatpush1.msra.mxu0 0.0
        %1545 = vmatprep.subr.mxu0 0.0
        %1546 = vmatpush1.msra.mxu0 0.0
        %1547 = vmatprep.subr.mxu0 0.0
        %1548 = vmatpush1.msra.mxu0 0.0
        %1549 = vmatprep.subr.mxu0 0.0
        %1550 = vmatpush1.msra.mxu0 0.0
        %1551 = vmatprep.subr.mxu0 0.0
        %1552 = vmatpush1.msra.mxu0 0.0
        %1553 = vmatprep.subr.mxu0 0.0
        %1554 = vmatpush1.msra.mxu0 0.0
        %1555 = vmatprep.subr.mxu0 0.0
        %1556 = vmatpush1.msra.mxu0 0.0
        %1557 = vmatprep.subr.mxu0 0.0
        %1558 = vmatpush1.msra.mxu0 0.0
        %1559 = vmatprep.subr.mxu0 0.0
        %1560 = vmatpush1.msra.mxu0 0.0
        %1561 = vmatprep.subr.mxu0 0.0
        %1562 = vmatpush1.msra.mxu0 0.0
        %1563 = vmatprep.subr.mxu0 0.0
        %1564 = vmatpush1.msra.mxu0 0.0
        %1565 = vmatprep.subr.mxu0 0.0
        %1566 = vmatpush1.msra.mxu0 0.0
        %1567 = vmatprep.subr.mxu0 0.0
        %1568 = vmatpush1.msra.mxu0 0.0
        %1569 = vmatprep.subr.mxu0 0.0
        %1570 = vmatpush1.msra.mxu0 0.0
        %1571 = vmatprep.mubr.f32.mxu0 0.0
        %1572 = vmatmul.mubr.f32.gmra.mrb[0].mxu0 %v1233
        %v1573 = vpop.f32.mrb[0].mxu0
        %v1574 = vadd.f32 %v1489, %v1573
        %v1575 = vpop.f32.mrb[0].mxu0
        %1576 = vmatprep.mubr.f32.mxu0 0.0
        %1577 = vmatmul.mubr.f32.gmra.mrb[0].mxu0 %v1236
        %v1578 = vpop.f32.mrb[0].mxu0
        %v1579 = vadd.f32 %v1494, %v1578
        %v1580 = vpop.f32.mrb[0].mxu0
        %1581 = vmatprep.mubr.f32.mxu0 0.0
        %1582 = vmatmul.mubr.f32.gmra.mrb[0].mxu0 %v1239
        %v1583 = vpop.f32.mrb[0].mxu0
        %v1584 = vadd.f32 %v1499, %v1583
        %v1585 = vpop.f32.mrb[0].mxu0
        %1586 = vmatprep.mubr.f32.mxu0 0.0
        %1587 = vmatmul.mubr.f32.gmra.mrb[0].mxu0 %v1242
        %v1588 = vpop.f32.mrb[0].mxu0
        %v1589 = vadd.f32 %v1504, %v1588
        %v1590 = vpop.f32.mrb[0].mxu0
        %1591 = vdwg.mxu0
        %v1592 = vmax.f32 %v1400, 0.0
        %v1593 = vmax.f32 %v1402, 0.0
        %v1594 = vmax.f32 %v1574, 0.0
        %v1595 = vmax.f32 %v1406, 0.0
        %v1596 = vmax.f32 %v1408, 0.0
        %v1597 = vmax.f32 %v1579, 0.0
        %v1598 = vmax.f32 %v1412, 0.0
        %v1599 = vmax.f32 %v1414, 0.0
        %v1600 = vmax.f32 %v1584, 0.0
        %v1601 = vmax.f32 %v1418, 0.0
        %v1602 = vmax.f32 %v1420, 0.0
        %v1603 = vmax.f32 %v1589, 0.0
        %v1604 = vld [vmem:[%s6] sm:$0xff]
        %v1605 = vld [vmem:[%s6 + $0x8] sm:$0xff]
        %v1606 = vld [vmem:[%s6 + $0x10] sm:$0xff]
        %v1607 = vld [vmem:[%s6 + $0x18] sm:$0xff]
        %v1608 = vld [vmem:[%s6 + $0x20] sm:$0xff]
        %v1609 = vld [vmem:[%s6 + $0x28] sm:$0xff]
        %v1610 = vld [vmem:[%s6 + $0x30] sm:$0xff]
        %v1611 = vld [vmem:[%s6 + $0x38] sm:$0xff]
        %v1612 = vld [vmem:[%s6 + $0x40] sm:$0xff]
        %v1613 = vld [vmem:[%s6 + $0x48] sm:$0x7]
        %v1614 = vld [vmem:[%s7] sm:$0xff]
        %v1615 = vld [vmem:[%s7 + $0x8] sm:$0xff]
        %v1616 = vld [vmem:[%s7 + $0x10] sm:$0xff]
        %v1617 = vld [vmem:[%s7 + $0x18] sm:$0xff]
        %v1618 = vld [vmem:[%s7 + $0x20] sm:$0xff]
        %v1619 = vld [vmem:[%s7 + $0x28] sm:$0xff]
        %v1620 = vld [vmem:[%s7 + $0x30] sm:$0xff]
        %v1621 = vld [vmem:[%s7 + $0x38] sm:$0xff]
        %v1622 = vld [vmem:[%s7 + $0x40] sm:$0xff]
        %v1623 = vld [vmem:[%s7 + $0x48] sm:$0x7]
        %1625 = vset.pattern.permute.xlu0 0
        %1626 = vperm.xlu0 %1625, %v1614
        %v1627 = vpop.permute.xlu0 %1626
        %1630 = vset.pattern.permute.xlu0 0
        %1631 = vperm.xlu0 %1630, %v1615
        %v1632 = vpop.permute.xlu0 %1631
        %1635 = vset.pattern.permute.xlu0 0
        %1636 = vperm.xlu0 %1635, %v1616
        %v1637 = vpop.permute.xlu0 %1636
        %1640 = vset.pattern.permute.xlu0 0
        %1641 = vperm.xlu0 %1640, %v1617
        %v1642 = vpop.permute.xlu0 %1641
        %1645 = vset.pattern.permute.xlu0 0
        %1646 = vperm.xlu0 %1645, %v1618
        %v1647 = vpop.permute.xlu0 %1646
        %1650 = vset.pattern.permute.xlu0 0
        %1651 = vperm.xlu0 %1650, %v1619
        %v1652 = vpop.permute.xlu0 %1651
        %1655 = vset.pattern.permute.xlu0 0
        %1656 = vperm.xlu0 %1655, %v1620
        %v1657 = vpop.permute.xlu0 %1656
        %1660 = vset.pattern.permute.xlu0 0
        %1661 = vperm.xlu0 %1660, %v1621
        %v1662 = vpop.permute.xlu0 %1661
        %1665 = vset.pattern.permute.xlu0 0
        %1666 = vperm.xlu0 %1665, %v1622
        %v1667 = vpop.permute.xlu0 %1666
        %1670 = vset.pattern.permute.xlu0 0
        %1671 = vperm.xlu0 %1670, %v1623
        %v1672 = vpop.permute.xlu0 %1671
        %v1675 = vsel %vm1231, %v1604, 0
        %v1678 = vsel %vm1231, %v1605, 0
        %v1681 = vsel %vm1231, %v1606, 0
        %v1684 = vsel %vm1231, %v1607, 0
        %v1687 = vsel %vm1231, %v1608, 0
        %v1690 = vsel %vm1231, %v1609, 0
        %v1693 = vsel %vm1231, %v1610, 0
        %v1696 = vsel %vm1231, %v1611, 0
        %v1699 = vsel %vm1231, %v1612, 0
        %v1702 = vsel %vm1231, %v1613, 0
        %1704 = vmatprep.subr.mxu0 %v1593
        %1705 = vmatpush1.msra.mxu0 %v1592
        %1706 = vmatprep.subr.mxu0 %v1596
        %1707 = vmatpush1.msra.mxu0 %v1595
        %1708 = vmatprep.subr.mxu0 %v1599
        %1709 = vmatpush1.msra.mxu0 %v1598
        %1710 = vmatprep.subr.mxu0 %v1602
        %1711 = vmatpush1.msra.mxu0 %v1601
        %1712 = vmatprep.subr.mxu0 0.0
        %1713 = vmatpush1.msra.mxu0 0.0
        %1714 = vmatprep.subr.mxu0 0.0
        %1715 = vmatpush1.msra.mxu0 0.0
        %1716 = vmatprep.subr.mxu0 0.0
        %1717 = vmatpush1.msra.mxu0 0.0
        %1718 = vmatprep.subr.mxu0 0.0
        %1719 = vmatpush1.msra.mxu0 0.0
        %1720 = vmatprep.subr.mxu0 0.0
        %1721 = vmatpush1.msra.mxu0 0.0
        %1722 = vmatprep.subr.mxu0 0.0
        %1723 = vmatpush1.msra.mxu0 0.0
        %1724 = vmatprep.subr.mxu0 0.0
        %1725 = vmatpush1.msra.mxu0 0.0
        %1726 = vmatprep.subr.mxu0 0.0
        %1727 = vmatpush1.msra.mxu0 0.0
        %1728 = vmatprep.subr.mxu0 0.0
        %1729 = vmatpush1.msra.mxu0 0.0
        %1730 = vmatprep.subr.mxu0 0.0
        %1731 = vmatpush1.msra.mxu0 0.0
        %1732 = vmatprep.subr.mxu0 0.0
        %1733 = vmatpush1.msra.mxu0 0.0
        %1734 = vmatprep.subr.mxu0 0.0
        %1735 = vmatpush1.msra.mxu0 0.0
        %1736 = vmatprep.subr.mxu0 0.0
        %1737 = vmatpush1.msra.mxu0 0.0
        %1738 = vmatprep.subr.mxu0 0.0
        %1739 = vmatpush1.msra.mxu0 0.0
        %1740 = vmatprep.subr.mxu0 0.0
        %1741 = vmatpush1.msra.mxu0 0.0
        %1742 = vmatprep.subr.mxu0 0.0
        %1743 = vmatpush1.msra.mxu0 0.0
        %1744 = vmatprep.subr.mxu0 0.0
        %1745 = vmatpush1.msra.mxu0 0.0
        %1746 = vmatprep.subr.mxu0 0.0
        %1747 = vmatpush1.msra.mxu0 0.0
        %1748 = vmatprep.subr.mxu0 0.0
        %1749 = vmatpush1.msra.mxu0 0.0
        %1750 = vmatprep.subr.mxu0 0.0
        %1751 = vmatpush1.msra.mxu0 0.0
        %1752 = vmatprep.subr.mxu0 0.0
        %1753 = vmatpush1.msra.mxu0 0.0
        %1754 = vmatprep.subr.mxu0 0.0
        %1755 = vmatpush1.msra.mxu0 0.0
        %1756 = vmatprep.subr.mxu0 0.0
        %1757 = vmatpush1.msra.mxu0 0.0
        %1758 = vmatprep.subr.mxu0 0.0
        %1759 = vmatpush1.msra.mxu0 0.0
        %1760 = vmatprep.subr.mxu0 0.0
        %1761 = vmatpush1.msra.mxu0 0.0
        %1762 = vmatprep.subr.mxu0 0.0
        %1763 = vmatpush1.msra.mxu0 0.0
        %1764 = vmatprep.subr.mxu0 0.0
        %1765 = vmatpush1.msra.mxu0 0.0
        %1766 = vmatprep.subr.mxu0 0.0
        %1767 = vmatpush1.msra.mxu0 0.0
        %1768 = vmatprep.mubr.f32.mxu0 0.0
        %1769 = vmatmul.mubr.f32.gmra.mrb[0].mxu0 %v1675
        %v1770 = vpop.f32.mrb[0].mxu0
        %v1771 = vadd.f32 %v1627, %v1770
        %v1772 = vpop.f32.mrb[0].mxu0
        %v1773 = vadd.f32 %v1627, %v1772
        %1774 = vmatprep.mubr.f32.mxu0 0.0
        %1775 = vmatmul.mubr.f32.gmra.mrb[0].mxu0 %v1678
        %v1776 = vpop.f32.mrb[0].mxu0
        %v1777 = vadd.f32 %v1632, %v1776
        %v1778 = vpop.f32.mrb[0].mxu0
        %v1779 = vadd.f32 %v1632, %v1778
        %1780 = vmatprep.mubr.f32.mxu0 0.0
        %1781 = vmatmul.mubr.f32.gmra.mrb[0].mxu0 %v1681
        %v1782 = vpop.f32.mrb[0].mxu0
        %v1783 = vadd.f32 %v1637, %v1782
        %v1784 = vpop.f32.mrb[0].mxu0
        %v1785 = vadd.f32 %v1637, %v1784
        %1786 = vmatprep.mubr.f32.mxu0 0.0
        %1787 = vmatmul.mubr.f32.gmra.mrb[0].mxu0 %v1684
        %v1788 = vpop.f32.mrb[0].mxu0
        %v1789 = vadd.f32 %v1642, %v1788
        %v1790 = vpop.f32.mrb[0].mxu0
        %v1791 = vadd.f32 %v1642, %v1790
        %1792 = vmatprep.mubr.f32.mxu0 0.0
        %1793 = vmatmul.mubr.f32.gmra.mrb[0].mxu0 %v1687
        %v1794 = vpop.f32.mrb[0].mxu0
        %v1795 = vadd.f32 %v1647, %v1794
        %v1796 = vpop.f32.mrb[0].mxu0
        %v1797 = vadd.f32 %v1647, %v1796
        %1798 = vmatprep.mubr.f32.mxu0 0.0
        %1799 = vmatmul.mubr.f32.gmra.mrb[0].mxu0 %v1690
        %v1800 = vpop.f32.mrb[0].mxu0
        %v1801 = vadd.f32 %v1652, %v1800
        %v1802 = vpop.f32.mrb[0].mxu0
        %v1803 = vadd.f32 %v1652, %v1802
        %1804 = vmatprep.mubr.f32.mxu0 0.0
        %1805 = vmatmul.mubr.f32.gmra.mrb[0].mxu0 %v1693
        %v1806 = vpop.f32.mrb[0].mxu0
        %v1807 = vadd.f32 %v1657, %v1806
        %v1808 = vpop.f32.mrb[0].mxu0
        %v1809 = vadd.f32 %v1657, %v1808
        %1810 = vmatprep.mubr.f32.mxu0 0.0
        %1811 = vmatmul.mubr.f32.gmra.mrb[0].mxu0 %v1696
        %v1812 = vpop.f32.mrb[0].mxu0
        %v1813 = vadd.f32 %v1662, %v1812
        %v1814 = vpop.f32.mrb[0].mxu0
        %v1815 = vadd.f32 %v1662, %v1814
        %1816 = vmatprep.mubr.f32.mxu0 0.0
        %1817 = vmatmul.mubr.f32.gmra.mrb[0].mxu0 %v1699
        %v1818 = vpop.f32.mrb[0].mxu0
        %v1819 = vadd.f32 %v1667, %v1818
        %v1820 = vpop.f32.mrb[0].mxu0
        %v1821 = vadd.f32 %v1667, %v1820
        %1822 = vmatprep.mubr.f32.mxu0 0.0
        %1823 = vmatmul.mubr.f32.gmra.mrb[0].mxu0 %v1702
        %v1824 = vpop.f32.mrb[0].mxu0
        %v1825 = vadd.f32 %v1672, %v1824
        %v1826 = vpop.f32.mrb[0].mxu0
        %v1827 = vadd.f32 %v1672, %v1826
        %1828 = vdwg.mxu0
        %1829 = vmatprep.subr.mxu0 0.0
        %1830 = vmatpush1.msra.mxu0 %v1594
        %1831 = vmatprep.subr.mxu0 0.0
        %1832 = vmatpush1.msra.mxu0 %v1597
        %1833 = vmatprep.subr.mxu0 0.0
        %1834 = vmatpush1.msra.mxu0 %v1600
        %1835 = vmatprep.subr.mxu0 0.0
        %1836 = vmatpush1.msra.mxu0 %v1603
        %1837 = vmatprep.subr.mxu0 0.0
        %1838 = vmatpush1.msra.mxu0 0.0
        %1839 = vmatprep.subr.mxu0 0.0
        %1840 = vmatpush1.msra.mxu0 0.0
        %1841 = vmatprep.subr.mxu0 0.0
        %1842 = vmatpush1.msra.mxu0 0.0
        %1843 = vmatprep.subr.mxu0 0.0
        %1844 = vmatpush1.msra.mxu0 0.0
        %1845 = vmatprep.subr.mxu0 0.0
        %1846 = vmatpush1.msra.mxu0 0.0
        %1847 = vmatprep.subr.mxu0 0.0
        %1848 = vmatpush1.msra.mxu0 0.0
        %1849 = vmatprep.subr.mxu0 0.0
        %1850 = vmatpush1.msra.mxu0 0.0
        %1851 = vmatprep.subr.mxu0 0.0
        %1852 = vmatpush1.msra.mxu0 0.0
        %1853 = vmatprep.subr.mxu0 0.0
        %1854 = vmatpush1.msra.mxu0 0.0
        %1855 = vmatprep.subr.mxu0 0.0
        %1856 = vmatpush1.msra.mxu0 0.0
        %1857 = vmatprep.subr.mxu0 0.0
        %1858 = vmatpush1.msra.mxu0 0.0
        %1859 = vmatprep.subr.mxu0 0.0
        %1860 = vmatpush1.msra.mxu0 0.0
        %1861 = vmatprep.subr.mxu0 0.0
        %1862 = vmatpush1.msra.mxu0 0.0
        %1863 = vmatprep.subr.mxu0 0.0
        %1864 = vmatpush1.msra.mxu0 0.0
        %1865 = vmatprep.subr.mxu0 0.0
        %1866 = vmatpush1.msra.mxu0 0.0
        %1867 = vmatprep.subr.mxu0 0.0
        %1868 = vmatpush1.msra.mxu0 0.0
        %1869 = vmatprep.subr.mxu0 0.0
        %1870 = vmatpush1.msra.mxu0 0.0
        %1871 = vmatprep.subr.mxu0 0.0
        %1872 = vmatpush1.msra.mxu0 0.0
        %1873 = vmatprep.subr.mxu0 0.0
        %1874 = vmatpush1.msra.mxu0 0.0
        %1875 = vmatprep.subr.mxu0 0.0
        %1876 = vmatpush1.msra.mxu0 0.0
        %1877 = vmatprep.subr.mxu0 0.0
        %1878 = vmatpush1.msra.mxu0 0.0
        %1879 = vmatprep.subr.mxu0 0.0
        %1880 = vmatpush1.msra.mxu0 0.0
        %1881 = vmatprep.subr.mxu0 0.0
        %1882 = vmatpush1.msra.mxu0 0.0
        %1883 = vmatprep.subr.mxu0 0.0
        %1884 = vmatpush1.msra.mxu0 0.0
        %1885 = vmatprep.subr.mxu0 0.0
        %1886 = vmatpush1.msra.mxu0 0.0
        %1887 = vmatprep.subr.mxu0 0.0
        %1888 = vmatpush1.msra.mxu0 0.0
        %1889 = vmatprep.subr.mxu0 0.0
        %1890 = vmatpush1.msra.mxu0 0.0
        %1891 = vmatprep.subr.mxu0 0.0
        %1892 = vmatpush1.msra.mxu0 0.0
        %1893 = vmatprep.mubr.f32.mxu0 0.0
        %1894 = vmatmul.mubr.f32.gmra.mrb[0].mxu0 %v1675
        %v1895 = vpop.f32.mrb[0].mxu0
        %v1896 = vadd.f32 %v1627, %v1895
        %v1897 = vpop.f32.mrb[0].mxu0
        %1898 = vmatprep.mubr.f32.mxu0 0.0
        %1899 = vmatmul.mubr.f32.gmra.mrb[0].mxu0 %v1678
        %v1900 = vpop.f32.mrb[0].mxu0
        %v1901 = vadd.f32 %v1632, %v1900
        %v1902 = vpop.f32.mrb[0].mxu0
        %1903 = vmatprep.mubr.f32.mxu0 0.0
        %1904 = vmatmul.mubr.f32.gmra.mrb[0].mxu0 %v1681
        %v1905 = vpop.f32.mrb[0].mxu0
        %v1906 = vadd.f32 %v1637, %v1905
        %v1907 = vpop.f32.mrb[0].mxu0
        %1908 = vmatprep.mubr.f32.mxu0 0.0
        %1909 = vmatmul.mubr.f32.gmra.mrb[0].mxu0 %v1684
        %v1910 = vpop.f32.mrb[0].mxu0
        %v1911 = vadd.f32 %v1642, %v1910
        %v1912 = vpop.f32.mrb[0].mxu0
        %1913 = vmatprep.mubr.f32.mxu0 0.0
        %1914 = vmatmul.mubr.f32.gmra.mrb[0].mxu0 %v1687
        %v1915 = vpop.f32.mrb[0].mxu0
        %v1916 = vadd.f32 %v1647, %v1915
        %v1917 = vpop.f32.mrb[0].mxu0
        %1918 = vmatprep.mubr.f32.mxu0 0.0
        %1919 = vmatmul.mubr.f32.gmra.mrb[0].mxu0 %v1690
        %v1920 = vpop.f32.mrb[0].mxu0
        %v1921 = vadd.f32 %v1652, %v1920
        %v1922 = vpop.f32.mrb[0].mxu0
        %1923 = vmatprep.mubr.f32.mxu0 0.0
        %1924 = vmatmul.mubr.f32.gmra.mrb[0].mxu0 %v1693
        %v1925 = vpop.f32.mrb[0].mxu0
        %v1926 = vadd.f32 %v1657, %v1925
        %v1927 = vpop.f32.mrb[0].mxu0
        %1928 = vmatprep.mubr.f32.mxu0 0.0
        %1929 = vmatmul.mubr.f32.gmra.mrb[0].mxu0 %v1696
        %v1930 = vpop.f32.mrb[0].mxu0
        %v1931 = vadd.f32 %v1662, %v1930
        %v1932 = vpop.f32.mrb[0].mxu0
        %1933 = vmatprep.mubr.f32.mxu0 0.0
        %1934 = vmatmul.mubr.f32.gmra.mrb[0].mxu0 %v1699
        %v1935 = vpop.f32.mrb[0].mxu0
        %v1936 = vadd.f32 %v1667, %v1935
        %v1937 = vpop.f32.mrb[0].mxu0
        %1938 = vmatprep.mubr.f32.mxu0 0.0
        %1939 = vmatmul.mubr.f32.gmra.mrb[0].mxu0 %v1702
        %v1940 = vpop.f32.mrb[0].mxu0
        %v1941 = vadd.f32 %v1672, %v1940
        %v1942 = vpop.f32.mrb[0].mxu0
        %1943 = vdwg.mxu0
        %1944 = vst [vmem:[%s375] sm:$0xff] %v1771
        %1945 = vst [vmem:[%s375 + $0x8] sm:$0xff] %v1773
        %1946 = vst [vmem:[%s375 + $0x10] sm:$0xff] %v1896
        %1947 = vst [vmem:[%s375 + $0x18] sm:$0xff] %v1777
        %1948 = vst [vmem:[%s375 + $0x20] sm:$0xff] %v1779
        %1949 = vst [vmem:[%s375 + $0x28] sm:$0xff] %v1901
        %1950 = vst [vmem:[%s375 + $0x30] sm:$0xff] %v1783
        %1951 = vst [vmem:[%s375 + $0x38] sm:$0xff] %v1785
        %1952 = vst [vmem:[%s375 + $0x40] sm:$0xff] %v1906
        %1953 = vst [vmem:[%s375 + $0x48] sm:$0xff] %v1789
        %1954 = vst [vmem:[%s375 + $0x50] sm:$0xff] %v1791
        %1955 = vst [vmem:[%s375 + $0x58] sm:$0xff] %v1911
        %1956 = vst [vmem:[%s375 + $0x60] sm:$0xff] %v1795
        %1957 = vst [vmem:[%s375 + $0x68] sm:$0xff] %v1797
        %1958 = vst [vmem:[%s375 + $0x70] sm:$0xff] %v1916
        %1959 = vst [vmem:[%s375 + $0x78] sm:$0xff] %v1801
        %1960 = vst [vmem:[%s375 + $0x80] sm:$0xff] %v1803
        %1961 = vst [vmem:[%s375 + $0x88] sm:$0xff] %v1921
        %1962 = vst [vmem:[%s375 + $0x90] sm:$0xff] %v1807
        %1963 = vst [vmem:[%s375 + $0x98] sm:$0xff] %v1809
        %1964 = vst [vmem:[%s375 + $0xa0] sm:$0xff] %v1926
        %1965 = vst [vmem:[%s375 + $0xa8] sm:$0xff] %v1813
        %1966 = vst [vmem:[%s375 + $0xb0] sm:$0xff] %v1815
        %1967 = vst [vmem:[%s375 + $0xb8] sm:$0xff] %v1931
        %1968 = vst [vmem:[%s375 + $0xc0] sm:$0xff] %v1819
        %1969 = vst [vmem:[%s375 + $0xc8] sm:$0xff] %v1821
        %1970 = vst [vmem:[%s375 + $0xd0] sm:$0xff] %v1936
        %1971 = vst [vmem:[%s375 + $0xd8] sm:$0x7] %v1825
        %1972 = vst [vmem:[%s375 + $0xe0] sm:$0x7] %v1827
        %1973 = vst [vmem:[%s375 + $0xe8] sm:$0x7] %v1941
        %s1974 = sand.u32 %s202, 1
        %s1975 = sand.u32 %s202, 1
        %s1976 = smul.addr %s1975, 96
        %s1977 = scalar_lea.vmem [#allocation4], %s1976
        %s1978 = sand.u32 %s228, 1
        %s1979 = sand.u32 %s228, 1
        %s1980 = smul.addr %s1979, 240
        %s1981 = scalar_lea.vmem [#allocation5], %s1980
        // Predicated region
        $region76: #{entity_rcnn_forward.3} parent=70 // pred_check
          %p1982 = pneg %p212
        $region77: #{entity_rcnn_forward.3} parent=70 // pred_check_branch
          %1984 = sbr.rel (%p1982) target = $region79
        $region78: #{entity_rcnn_forward.3} parent=70 // pred_region
          %s1985 = smul.u32 3, %s21
          %s1986 = smul.addr %s1985, 8
          %s1987 = scalar_lea.vmem %s8, %s1986
          // Predicated region
          $region80: #{entity_rcnn_forward.3} parent=78 // pred_check
            _
          $region81: #{entity_rcnn_forward.3} parent=78 // pred_check_branch
            %1989 = sbr.rel (0) target = $region83
          $region82: #{entity_rcnn_forward.3} parent=78 // pred_region
            // Predicated region
            $region84: #{entity_rcnn_forward.3} parent=82 // pred_check
              _
            $region85: #{entity_rcnn_forward.3} parent=82 // pred_check_branch
              %1991 = sbr.rel (0) target = $region87
            $region86: #{entity_rcnn_forward.3} parent=82 // pred_region
              loop: start=0, step=1, limit=1
              $region88: #{entity_rcnn_forward.3} parent=86 // loop_pre_header
                _
              $region89: #{entity_rcnn_forward.3} parent=86 // loop_header
                %s1993 = sphi 0, %s1997
                %p1994 = scmp.ge.s32.totalorder %s1993, 1
                %s1998 = sphi %s1977, %s1977
                %s1999 = sphi %s1987, %s1987
              $region90: #{entity_rcnn_forward.3} parent=86 // loop_header_branch
                %1996 = sbr.rel (%p1994) target = $region94
              $region91: #{entity_rcnn_forward.3} parent=86 // loop_body
                %v2000 = vld [vmem:[%s1998] sm:$0xff]
                %2001 = vst [vmem:[%s1999] sm:$0xff] %v2000
                %v2002 = vld [vmem:[%s1998 + $0x8] sm:$0xff]
                %2003 = vst [vmem:[%s1999 + $0x8] sm:$0xff] %v2002
                %v2004 = vld [vmem:[%s1998 + $0x10] sm:$0xff]
                %2005 = vst [vmem:[%s1999 + $0x10] sm:$0xff] %v2004
                %v2006 = vld [vmem:[%s1998 + $0x18] sm:$0xff]
                %2007 = vst [vmem:[%s1999 + $0x30] sm:$0xff] %v2006
                %v2008 = vld [vmem:[%s1998 + $0x20] sm:$0xff]
                %2009 = vst [vmem:[%s1999 + $0x38] sm:$0xff] %v2008
                %v2010 = vld [vmem:[%s1998 + $0x28] sm:$0xff]
                %2011 = vst [vmem:[%s1999 + $0x40] sm:$0xff] %v2010
                %v2012 = vld [vmem:[%s1998 + $0x30] sm:$0xff]
                %2013 = vst [vmem:[%s1999 + $0x60] sm:$0xff] %v2012
                %v2014 = vld [vmem:[%s1998 + $0x38] sm:$0xff]
                %2015 = vst [vmem:[%s1999 + $0x68] sm:$0xff] %v2014
                %v2016 = vld [vmem:[%s1998 + $0x40] sm:$0xff]
                %2017 = vst [vmem:[%s1999 + $0x70] sm:$0xff] %v2016
                %v2018 = vld [vmem:[%s1998 + $0x48] sm:$0xff]
                %2019 = vst [vmem:[%s1999 + $0x90] sm:$0xff] %v2018
                %v2020 = vld [vmem:[%s1998 + $0x50] sm:$0xff]
                %2021 = vst [vmem:[%s1999 + $0x98] sm:$0xff] %v2020
                %v2022 = vld [vmem:[%s1998 + $0x58] sm:$0xff]
                %2023 = vst [vmem:[%s1999 + $0xa0] sm:$0xff] %v2022
              $region92: #{entity_rcnn_forward.3} parent=86 // loop_footer
                %s1997 = sadd.s32 1, %s1993
              $region93: #{entity_rcnn_forward.3} parent=86 // loop_footer_branch
                %1992 = sbr.rel target = $region89
              $region94: #{entity_rcnn_forward.3} parent=86 // loop_exit
                _
            $region87: #{entity_rcnn_forward.3} parent=82 // pred_fallthru
              _
            // Predicated region
            $region95: #{entity_rcnn_forward.3} parent=82 // pred_check
              _
            $region96: #{entity_rcnn_forward.3} parent=82 // pred_check_branch
              %2025 = sbr.rel target = $region98
            $region97: #{entity_rcnn_forward.3} parent=82 // pred_region
              _
            $region98: #{entity_rcnn_forward.3} parent=82 // pred_fallthru
              _
          $region83: #{entity_rcnn_forward.3} parent=78 // pred_fallthru
            _
          %2026 = vnop
        $region79: #{entity_rcnn_forward.3} parent=70 // pred_fallthru
          _
        // Predicated region
        $region99: #{entity_rcnn_forward.3} parent=70 // pred_check
          %p2027 = pneg %p238
        $region100: #{entity_rcnn_forward.3} parent=70 // pred_check_branch
          %2029 = sbr.rel (%p2027) target = $region102
        $region101: #{entity_rcnn_forward.3} parent=70 // pred_region
          %s2030 = smul.u32 3, %s21
          %s2031 = smul.addr %s2030, 8
          %s2032 = scalar_lea.vmem %s9, %s2031
          // Predicated region
          $region103: #{entity_rcnn_forward.3} parent=101 // pred_check
            _
          $region104: #{entity_rcnn_forward.3} parent=101 // pred_check_branch
            %2034 = sbr.rel (0) target = $region106
          $region105: #{entity_rcnn_forward.3} parent=101 // pred_region
            // Predicated region
            $region107: #{entity_rcnn_forward.3} parent=105 // pred_check
              _
            $region108: #{entity_rcnn_forward.3} parent=105 // pred_check_branch
              %2036 = sbr.rel (0) target = $region110
            $region109: #{entity_rcnn_forward.3} parent=105 // pred_region
              loop: start=0, step=1, limit=1
              $region111: #{entity_rcnn_forward.3} parent=109 // loop_pre_header
                _
              $region112: #{entity_rcnn_forward.3} parent=109 // loop_header
                %s2038 = sphi 0, %s2042
                %p2039 = scmp.ge.s32.totalorder %s2038, 1
                %s2043 = sphi %s1981, %s1981
                %s2044 = sphi %s2032, %s2032
              $region113: #{entity_rcnn_forward.3} parent=109 // loop_header_branch
                %2041 = sbr.rel (%p2039) target = $region117
              $region114: #{entity_rcnn_forward.3} parent=109 // loop_body
                %v2045 = vld [vmem:[%s2043] sm:$0xff]
                %2046 = vst [vmem:[%s2044] sm:$0xff] %v2045
                %v2047 = vld [vmem:[%s2043 + $0x8] sm:$0xff]
                %2048 = vst [vmem:[%s2044 + $0x8] sm:$0xff] %v2047
                %v2049 = vld [vmem:[%s2043 + $0x10] sm:$0xff]
                %2050 = vst [vmem:[%s2044 + $0x10] sm:$0xff] %v2049
                %v2051 = vld [vmem:[%s2043 + $0x18] sm:$0xff]
                %2052 = vst [vmem:[%s2044 + $0x30] sm:$0xff] %v2051
                %v2053 = vld [vmem:[%s2043 + $0x20] sm:$0xff]
                %2054 = vst [vmem:[%s2044 + $0x38] sm:$0xff] %v2053
                %v2055 = vld [vmem:[%s2043 + $0x28] sm:$0xff]
                %2056 = vst [vmem:[%s2044 + $0x40] sm:$0xff] %v2055
                %v2057 = vld [vmem:[%s2043 + $0x30] sm:$0xff]
                %2058 = vst [vmem:[%s2044 + $0x60] sm:$0xff] %v2057
                %v2059 = vld [vmem:[%s2043 + $0x38] sm:$0xff]
                %2060 = vst [vmem:[%s2044 + $0x68] sm:$0xff] %v2059
                %v2061 = vld [vmem:[%s2043 + $0x40] sm:$0xff]
                %2062 = vst [vmem:[%s2044 + $0x70] sm:$0xff] %v2061
                %v2063 = vld [vmem:[%s2043 + $0x48] sm:$0xff]
                %2064 = vst [vmem:[%s2044 + $0x90] sm:$0xff] %v2063
                %v2065 = vld [vmem:[%s2043 + $0x50] sm:$0xff]
                %2066 = vst [vmem:[%s2044 + $0x98] sm:$0xff] %v2065
                %v2067 = vld [vmem:[%s2043 + $0x58] sm:$0xff]
                %2068 = vst [vmem:[%s2044 + $0xa0] sm:$0xff] %v2067
                %v2069 = vld [vmem:[%s2043 + $0x60] sm:$0xff]
                %2070 = vst [vmem:[%s2044 + $0xc0] sm:$0xff] %v2069
                %v2071 = vld [vmem:[%s2043 + $0x68] sm:$0xff]
                %2072 = vst [vmem:[%s2044 + $0xc8] sm:$0xff] %v2071
                %v2073 = vld [vmem:[%s2043 + $0x70] sm:$0xff]
                %2074 = vst [vmem:[%s2044 + $0xd0] sm:$0xff] %v2073
                %v2075 = vld [vmem:[%s2043 + $0x78] sm:$0xff]
                %2076 = vst [vmem:[%s2044 + $0xf0] sm:$0xff] %v2075
                %v2077 = vld [vmem:[%s2043 + $0x80] sm:$0xff]
                %2078 = vst [vmem:[%s2044 + $0xf8] sm:$0xff] %v2077
                %v2079 = vld [vmem:[%s2043 + $0x88] sm:$0xff]
                %2080 = vst [vmem:[%s2044 + $0x100] sm:$0xff] %v2079
                %v2081 = vld [vmem:[%s2043 + $0x90] sm:$0xff]
                %2082 = vst [vmem:[%s2044 + $0x120] sm:$0xff] %v2081
                %v2083 = vld [vmem:[%s2043 + $0x98] sm:$0xff]
                %2084 = vst [vmem:[%s2044 + $0x128] sm:$0xff] %v2083
                %v2085 = vld [vmem:[%s2043 + $0xa0] sm:$0xff]
                %2086 = vst [vmem:[%s2044 + $0x130] sm:$0xff] %v2085
                %v2087 = vld [vmem:[%s2043 + $0xa8] sm:$0xff]
                %2088 = vst [vmem:[%s2044 + $0x150] sm:$0xff] %v2087
                %v2089 = vld [vmem:[%s2043 + $0xb0] sm:$0xff]
                %2090 = vst [vmem:[%s2044 + $0x158] sm:$0xff] %v2089
                %v2091 = vld [vmem:[%s2043 + $0xb8] sm:$0xff]
                %2092 = vst [vmem:[%s2044 + $0x160] sm:$0xff] %v2091
                %v2093 = vld [vmem:[%s2043 + $0xc0] sm:$0xff]
                %2094 = vst [vmem:[%s2044 + $0x180] sm:$0xff] %v2093
                %v2095 = vld [vmem:[%s2043 + $0xc8] sm:$0xff]
                %2096 = vst [vmem:[%s2044 + $0x188] sm:$0xff] %v2095
                %v2097 = vld [vmem:[%s2043 + $0xd0] sm:$0xff]
                %2098 = vst [vmem:[%s2044 + $0x190] sm:$0xff] %v2097
                %v2099 = vld [vmem:[%s2043 + $0xd8] sm:$0xff]
                %2100 = vst [vmem:[%s2044 + $0x1b0] sm:$0xff] %v2099
                %v2101 = vld [vmem:[%s2043 + $0xe0] sm:$0xff]
                %2102 = vst [vmem:[%s2044 + $0x1b8] sm:$0xff] %v2101
                %v2103 = vld [vmem:[%s2043 + $0xe8] sm:$0xff]
                %2104 = vst [vmem:[%s2044 + $0x1c0] sm:$0xff] %v2103
              $region115: #{entity_rcnn_forward.3} parent=109 // loop_footer
                %s2042 = sadd.s32 1, %s2038
              $region116: #{entity_rcnn_forward.3} parent=109 // loop_footer_branch
                %2037 = sbr.rel target = $region112
              $region117: #{entity_rcnn_forward.3} parent=109 // loop_exit
                _
            $region110: #{entity_rcnn_forward.3} parent=105 // pred_fallthru
              _
            // Predicated region
            $region118: #{entity_rcnn_forward.3} parent=105 // pred_check
              _
            $region119: #{entity_rcnn_forward.3} parent=105 // pred_check_branch
              %2106 = sbr.rel target = $region121
            $region120: #{entity_rcnn_forward.3} parent=105 // pred_region
              _
            $region121: #{entity_rcnn_forward.3} parent=105 // pred_fallthru
              _
          $region106: #{entity_rcnn_forward.3} parent=101 // pred_fallthru
            _
          %2107 = vnop
        $region102: #{entity_rcnn_forward.3} parent=70 // pred_fallthru
          _
      $region71: #{entity_rcnn_forward.3} parent=5 // pred_fallthru
        _
      %p2108 = scmp.le.s32.totalorder 2, %s16
      // Predicated region
      $region122: #{entity_rcnn_forward.3} parent=5 // pred_check
        %p2109 = pneg %p2108
      $region123: #{entity_rcnn_forward.3} parent=5 // pred_check_branch
        %2111 = sbr.rel (%p2109) target = $region125
      $region124: #{entity_rcnn_forward.3} parent=5 // pred_region
        %s2112 = ssub.s32 %s16, 2
        // Predicated region
        $region126: #{entity_rcnn_forward.3} parent=124 // pred_check
          %p2113 = pneg %p218
        $region127: #{entity_rcnn_forward.3} parent=124 // pred_check_branch
          %2115 = sbr.rel (%p2113) target = $region129
        $region128: #{entity_rcnn_forward.3} parent=124 // pred_region
          %s2116 = sand.u32 %s203, 1
          %s2117 = sand.u32 %s203, 1
          %s2118 = smul.addr %s2117, 96
          %s2119 = scalar_lea.vmem [#allocation4], %s2118
        $region129: #{entity_rcnn_forward.3} parent=124 // pred_fallthru
          _
        // Predicated region
        $region130: #{entity_rcnn_forward.3} parent=124 // pred_check
          %p2120 = pneg %p244
        $region131: #{entity_rcnn_forward.3} parent=124 // pred_check_branch
          %2122 = sbr.rel (%p2120) target = $region133
        $region132: #{entity_rcnn_forward.3} parent=124 // pred_region
          %s2123 = sand.u32 %s229, 1
          %s2124 = sand.u32 %s229, 1
          %s2125 = smul.addr %s2124, 240
          %s2126 = scalar_lea.vmem [#allocation5], %s2125
        $region133: #{entity_rcnn_forward.3} parent=124 // pred_fallthru
          _
      $region125: #{entity_rcnn_forward.3} parent=5 // pred_fallthru
        _
    $region6: #{entity_rcnn_forward.3} parent=1 // loop_footer
      %s20 = sadd.s32 1, %s16
    $region7: #{entity_rcnn_forward.3} parent=1 // loop_footer_branch
      %15 = sbr.rel target = $region3
    $region8: #{entity_rcnn_forward.3} parent=1 // loop_exit
      _

// kernel: custom-call
$region0: #{custom-call}
  #allocation0 [shape = 'u32[8,128]{1,0}', space=vmem, size = 0x1000, scoped, tag = 'scratch']
  #allocation1 [shape = 'u32[8,128]{1,0}', space=vmem, size = 0x1000, scoped, tag = 'scratch']
  #allocation2 [shape = 'u32[8,128]{1,0}', space=vmem, size = 0x1000, scoped, tag = 'scratch']
  #allocation3 [shape = 'u32[8,128]{1,0}', space=vmem, size = 0x1000, scoped, tag = 'scratch']
  #allocation4 [shape = 'u32[8,128]{1,0}', space=vmem, size = 0x1000, scoped, tag = 'scratch']
  #allocation5 [shape = 'u32[8,128]{1,0}', space=vmem, size = 0x1000, scoped, tag = 'scratch']
  #allocation6 [shape = 'u32[8,128]{1,0}', space=vmem, size = 0x1000, scoped, tag = 'scratch']
  %s0 = inlined_call_operand.vmem [shape: f32[2,3840], index: 0, kind: input, shape index: {}]
  %s1 = inlined_call_operand.hbm [shape: f32[2,8], index: 1, kind: output, shape index: {0}]
  %s2 = inlined_call_operand.vmem [shape: s32[2,8], index: 2, kind: output, shape index: {1}]
  %3 = xla_tuple %s1, %s2
  %4 = xla_tuple 2147483648, 2147483647
  $region1: #{custom-call} parent=0
    #allocation7 [shape = 'u8[4096]{0}', space=vmem, size = 0x1000, scoped, tag = 'operand span for operand 1']
    #allocation8 [shape = 'u8[1024]{0}', space=vmem, size = 0x400, scoped, tag = 'packed  for operand 1']
    #allocation9 [shape = 's32[1]{0}', space=sflag, size = 0x4, scoped, tag = 'scoped memory for custom-call']
    #allocation10 [shape = 'u8[4096]{0}', space=vmem, size = 0x1000, scoped, tag = 'operand span for operand 2']
    #allocation11 [shape = 'u8[1024]{0}', space=vmem, size = 0x400, scoped, tag = 'packed  for operand 2']
    #allocation12 [shape = 'f32[8,2]{1,0:T(8,128)}', space=vmem, size = 0x1000, scoped, tag = 'scoped memory for custom-call']
    #allocation13 [shape = 'f32[8,2]{1,0:T(8,128)}', space=vmem, size = 0x1000, scoped, tag = 'scoped memory for custom-call']
    #allocation14 [shape = 's32[8,2]{1,0:T(8,128)}', space=vmem, size = 0x1000, scoped, tag = 'scoped memory for custom-call']
    #allocation15 [shape = 's32[8,2]{1,0:T(8,128)}', space=vmem, size = 0x1000, scoped, tag = 'scoped memory for custom-call']
    %5 = vsyncpa [#allocation9], 0
    %6 = xla_tuple [#allocation7], [#allocation10]
    %7 = vst [vmem:[#allocation12] sm:$0xff] 2147483648
    %8 = vst [vmem:[#allocation14] sm:$0xff] 2147483647
    %9 = xla_tuple [#allocation12], [#allocation14]
    %10 = xla_tuple [#allocation13], [#allocation15]
    $region2: #{custom-call} parent=1
      #allocation16 [shape = 'u8[32768]{0}', space=vmem, size = 0x8000, scoped, tag = 'operand span for operand 0']
      #allocation17 [shape = 's32[8192]{0}', space=vmem, size = 0x8000, scoped, tag = 'scoped memory for custom-call']
      // Predicated region
      $region3: #{custom-call} parent=2 // pred_check
        _
      $region4: #{custom-call} parent=2 // pred_check_branch
        %12 = sbr.rel (0) target = $region6
      $region5: #{custom-call} parent=2 // pred_region
        // Predicated region
        $region7: #{custom-call} parent=5 // pred_check
          _
        $region8: #{custom-call} parent=5 // pred_check_branch
          %14 = sbr.rel (0) target = $region10
        $region9: #{custom-call} parent=5 // pred_region
          // Predicated region
          $region11: #{custom-call} parent=9 // pred_check
            _
          $region12: #{custom-call} parent=9 // pred_check_branch
            %16 = sbr.rel (0) target = $region14
          $region13: #{custom-call} parent=9 // pred_region
            %s17 = scalar_lea.vmem %s0, 56
            %s18 = scalar_lea.vmem [#allocation16], 56
            loop: start=0, step=1, limit=1
            $region15: #{custom-call} parent=13 // loop_pre_header
              _
            $region16: #{custom-call} parent=13 // loop_header
              %s20 = sphi 0, %s24
              %p21 = scmp.ge.s32.totalorder %s20, 1
              %s25 = sphi %s0, %s0
              %s26 = sphi [#allocation16], [#allocation16]
            $region17: #{custom-call} parent=13 // loop_header_branch
              %23 = sbr.rel (%p21) target = $region21
            $region18: #{custom-call} parent=13 // loop_body
              %v27 = vld [vmem:[%s25] sm:$0xff]
              %28 = vst [vmem:[%s26] sm:$0xff] %v27
              %v29 = vld [vmem:[%s25 + $0x8] sm:$0xff]
              %30 = vst [vmem:[%s26 + $0x8] sm:$0xff] %v29
              %v31 = vld [vmem:[%s25 + $0x10] sm:$0xff]
              %32 = vst [vmem:[%s26 + $0x10] sm:$0xff] %v31
              %v33 = vld [vmem:[%s25 + $0x18] sm:$0xff]
              %34 = vst [vmem:[%s26 + $0x18] sm:$0xff] %v33
              %v35 = vld [vmem:[%s25 + $0x20] sm:$0xff]
              %36 = vst [vmem:[%s26 + $0x20] sm:$0xff] %v35
              %v37 = vld [vmem:[%s25 + $0x28] sm:$0xff]
              %38 = vst [vmem:[%s26 + $0x28] sm:$0xff] %v37
              %v39 = vld [vmem:[%s25 + $0x30] sm:$0xff]
              %40 = vst [vmem:[%s26 + $0x30] sm:$0xff] %v39
            $region19: #{custom-call} parent=13 // loop_footer
              %s24 = sadd.s32 1, %s20
            $region20: #{custom-call} parent=13 // loop_footer_branch
              %19 = sbr.rel target = $region16
            $region21: #{custom-call} parent=13 // loop_exit
              _
            loop: start=0, step=1, limit=1
            $region22: #{custom-call} parent=13 // loop_pre_header
              _
            $region23: #{custom-call} parent=13 // loop_header
              %s43 = sphi 0, %s47
              %p44 = scmp.ge.s32.totalorder %s43, 1
              %s48 = sphi %s17, %s17
              %s49 = sphi %s18, %s18
            $region24: #{custom-call} parent=13 // loop_header_branch
              %46 = sbr.rel (%p44) target = $region28
            $region25: #{custom-call} parent=13 // loop_body
              %v50 = vld [vmem:[%s48] sm:$0xf]
              %51 = vst [vmem:[%s49] sm:$0xf] %v50
            $region26: #{custom-call} parent=13 // loop_footer
              %s47 = sadd.s32 1, %s43
            $region27: #{custom-call} parent=13 // loop_footer_branch
              %42 = sbr.rel target = $region23
            $region28: #{custom-call} parent=13 // loop_exit
              _
          $region14: #{custom-call} parent=9 // pred_fallthru
            _
        $region10: #{custom-call} parent=5 // pred_fallthru
          _
        %52 = vnop
      $region6: #{custom-call} parent=2 // pred_fallthru
        _
      // Predicated region
      $region29: #{custom-call} parent=2 // pred_check
        _
      $region30: #{custom-call} parent=2 // pred_check_branch
        %54 = sbr.rel (0) target = $region32
      $region31: #{custom-call} parent=2 // pred_region
        _
      $region32: #{custom-call} parent=2 // pred_fallthru
        _
      %v55 = vlaneseq
      %v56 = vand.u32 %v55, 127
      %v57 = vlaneseq
      %v58 = vshrl.u32 %v57, 7
      %v59 = vshrl.u32 %v58, 1
      %v60 = vand.u32 %v58, 1
      %v61 = vmul.u32 %v59, 128
      %v62 = vadd.s32 %v56, %v61
      %v64 = vld [vmem:[#allocation16] sm:$0xff]
      %vm65 = vcmp.lt.s32.totalorder %v64, 0
      %v66 = vsub.s32 2147483647, %v64
      %v67 = vsel %vm65, %v66, %v64
      %vm69 = vcmp.lt.s32.totalorder %v62, 3840
      %v70 = vsel %vm69, %v67, 2147483648
      %71 = vst [vmem:[#allocation16] sm:$0xff] %v70
      %s72 = scalar_lea.vmem [#allocation16], 8
      %v73 = vld [vmem:[%s72] sm:$0xff]
      %vm74 = vcmp.lt.s32.totalorder %v73, 0
      %v75 = vsub.s32 2147483647, %v73
      %v76 = vsel %vm74, %v75, %v73
      %v77 = vadd.s32 %v62, 512
      %vm78 = vcmp.lt.s32.totalorder %v77, 3840
      %v79 = vsel %vm78, %v76, 2147483648
      %80 = vst [vmem:[%s72] sm:$0xff] %v79
      %s81 = scalar_lea.vmem [#allocation16], 16
      %v82 = vld [vmem:[%s81] sm:$0xff]
      %vm83 = vcmp.lt.s32.totalorder %v82, 0
      %v84 = vsub.s32 2147483647, %v82
      %v85 = vsel %vm83, %v84, %v82
      %v86 = vadd.s32 %v62, 1024
      %vm87 = vcmp.lt.s32.totalorder %v86, 3840
      %v88 = vsel %vm87, %v85, 2147483648
      %89 = vst [vmem:[%s81] sm:$0xff] %v88
      %s90 = scalar_lea.vmem [#allocation16], 24
      %v91 = vld [vmem:[%s90] sm:$0xff]
      %vm92 = vcmp.lt.s32.totalorder %v91, 0
      %v93 = vsub.s32 2147483647, %v91
      %v94 = vsel %vm92, %v93, %v91
      %v95 = vadd.s32 %v62, 1536
      %vm96 = vcmp.lt.s32.totalorder %v95, 3840
      %v97 = vsel %vm96, %v94, 2147483648
      %98 = vst [vmem:[%s90] sm:$0xff] %v97
      %s99 = scalar_lea.vmem [#allocation16], 32
      %v100 = vld [vmem:[%s99] sm:$0xff]
      %vm101 = vcmp.lt.s32.totalorder %v100, 0
      %v102 = vsub.s32 2147483647, %v100
      %v103 = vsel %vm101, %v102, %v100
      %v104 = vadd.s32 %v62, 2048
      %vm105 = vcmp.lt.s32.totalorder %v104, 3840
      %v106 = vsel %vm105, %v103, 2147483648
      %107 = vst [vmem:[%s99] sm:$0xff] %v106
      %s108 = scalar_lea.vmem [#allocation16], 40
      %v109 = vld [vmem:[%s108] sm:$0xff]
      %vm110 = vcmp.lt.s32.totalorder %v109, 0
      %v111 = vsub.s32 2147483647, %v109
      %v112 = vsel %vm110, %v111, %v109
      %v113 = vadd.s32 %v62, 2560
      %vm114 = vcmp.lt.s32.totalorder %v113, 3840
      %v115 = vsel %vm114, %v112, 2147483648
      %116 = vst [vmem:[%s108] sm:$0xff] %v115
      %s117 = scalar_lea.vmem [#allocation16], 48
      %v118 = vld [vmem:[%s117] sm:$0xff]
      %vm119 = vcmp.lt.s32.totalorder %v118, 0
      %v120 = vsub.s32 2147483647, %v118
      %v121 = vsel %vm119, %v120, %v118
      %v122 = vadd.s32 %v62, 3072
      %vm123 = vcmp.lt.s32.totalorder %v122, 3840
      %v124 = vsel %vm123, %v121, 2147483648
      %125 = vst [vmem:[%s117] sm:$0xff] %v124
      %s126 = scalar_lea.vmem [#allocation16], 56
      %v127 = vld [vmem:[%s126] sm:$0xff]
      %vm128 = vcmp.lt.s32.totalorder %v127, 0
      %v129 = vsub.s32 2147483647, %v127
      %v130 = vsel %vm128, %v129, %v127
      %v131 = vadd.s32 %v62, 3584
      %vm132 = vcmp.lt.s32.totalorder %v131, 3840
      %v133 = vsel %vm132, %v130, 2147483648
      %134 = vst [vmem:[%s126] sm:$0xff] %v133
      %v135 = vlaneseq
      %v136 = vand.u32 %v135, 127
      %v137 = vlaneseq
      %v138 = vshrl.u32 %v137, 7
      %v139 = vshrl.u32 %v138, 1
      %v140 = vand.u32 %v138, 1
      %v141 = vmul.u32 %v139, 128
      %v142 = vadd.s32 %v136, %v141
      %145 = vst [vmem:[#allocation17] sm:$0xff] %v142
      %v146 = vadd.s32 %v142, 512
      %s147 = scalar_lea.vmem [#allocation17], 8
      %148 = vst [vmem:[%s147] sm:$0xff] %v146
      %v149 = vadd.s32 %v142, 1024
      %s150 = scalar_lea.vmem [#allocation17], 16
      %151 = vst [vmem:[%s150] sm:$0xff] %v149
      %v152 = vadd.s32 %v142, 1536
      %s153 = scalar_lea.vmem [#allocation17], 24
      %154 = vst [vmem:[%s153] sm:$0xff] %v152
      %v155 = vadd.s32 %v142, 2048
      %s156 = scalar_lea.vmem [#allocation17], 32
      %157 = vst [vmem:[%s156] sm:$0xff] %v155
      %v158 = vadd.s32 %v142, 2560
      %s159 = scalar_lea.vmem [#allocation17], 40
      %160 = vst [vmem:[%s159] sm:$0xff] %v158
      %v161 = vadd.s32 %v142, 3072
      %s162 = scalar_lea.vmem [#allocation17], 48
      %163 = vst [vmem:[%s162] sm:$0xff] %v161
      %v164 = vadd.s32 %v142, 3584
      %s165 = scalar_lea.vmem [#allocation17], 56
      %166 = vst [vmem:[%s165] sm:$0xff] %v164
      %167 = xla_tuple [#allocation16], [#allocation17]
      %168 = vst [vmem:[#allocation13] sm:$0xff] 2147483648
      %169 = vst [vmem:[#allocation15] sm:$0xff] 2147483647
      %170 = xla_tuple [#allocation13], [#allocation15]
      loop: start=0, step=1, limit=8
      $region33: #{custom-call} parent=2 // loop_pre_header
        _
      $region34: #{custom-call} parent=2 // loop_header
        %s172 = sphi 0, %s176
        %p173 = scmp.ge.s32.totalorder %s172, 8
      $region35: #{custom-call} parent=2 // loop_header_branch
        %175 = sbr.rel (%p173) target = $region39
      $region36: #{custom-call} parent=2 // loop_body
        %v177 = vld [vmem:[#allocation16] sm:$0xff]
        %v178 = vld [vmem:[#allocation17] sm:$0xff]
        %179 = xla_tuple %v177, %v178
        %s180 = scalar_lea.vmem [#allocation16], 8
        %v181 = vld [vmem:[%s180] sm:$0xff]
        %s182 = scalar_lea.vmem [#allocation17], 8
        %v183 = vld [vmem:[%s182] sm:$0xff]
        %184 = xla_tuple %v181, %v183
        %vm185 = vcmp.gt.s32.totalorder %v181, %v177
        %vm186 = vcmp.eq.s32.totalorder %v181, %v177
        %vm187 = vcmp.lt.s32.totalorder %v183, %v178
        %vm188 = vmand %vm186, %vm187
        %vm189 = vmor %vm185, %vm188
        %v190 = vsel %vm189, %v181, %v177
        %v191 = vsel %vm189, %v183, %v178
        %192 = xla_tuple %v190, %v191
        %s193 = scalar_lea.vmem [#allocation16], 16
        %v194 = vld [vmem:[%s193] sm:$0xff]
        %s195 = scalar_lea.vmem [#allocation17], 16
        %v196 = vld [vmem:[%s195] sm:$0xff]
        %197 = xla_tuple %v194, %v196
        %vm198 = vcmp.gt.s32.totalorder %v194, %v190
        %vm199 = vcmp.eq.s32.totalorder %v194, %v190
        %vm200 = vcmp.lt.s32.totalorder %v196, %v191
        %vm201 = vmand %vm199, %vm200
        %vm202 = vmor %vm198, %vm201
        %v203 = vsel %vm202, %v194, %v190
        %v204 = vsel %vm202, %v196, %v191
        %205 = xla_tuple %v203, %v204
        %s206 = scalar_lea.vmem [#allocation16], 24
        %v207 = vld [vmem:[%s206] sm:$0xff]
        %s208 = scalar_lea.vmem [#allocation17], 24
        %v209 = vld [vmem:[%s208] sm:$0xff]
        %210 = xla_tuple %v207, %v209
        %vm211 = vcmp.gt.s32.totalorder %v207, %v203
        %vm212 = vcmp.eq.s32.totalorder %v207, %v203
        %vm213 = vcmp.lt.s32.totalorder %v209, %v204
        %vm214 = vmand %vm212, %vm213
        %vm215 = vmor %vm211, %vm214
        %v216 = vsel %vm215, %v207, %v203
        %v217 = vsel %vm215, %v209, %v204
        %218 = xla_tuple %v216, %v217
        %s219 = scalar_lea.vmem [#allocation16], 32
        %v220 = vld [vmem:[%s219] sm:$0xff]
        %s221 = scalar_lea.vmem [#allocation17], 32
        %v222 = vld [vmem:[%s221] sm:$0xff]
        %223 = xla_tuple %v220, %v222
        %vm224 = vcmp.gt.s32.totalorder %v220, %v216
        %vm225 = vcmp.eq.s32.totalorder %v220, %v216
        %vm226 = vcmp.lt.s32.totalorder %v222, %v217
        %vm227 = vmand %vm225, %vm226
        %vm228 = vmor %vm224, %vm227
        %v229 = vsel %vm228, %v220, %v216
        %v230 = vsel %vm228, %v222, %v217
        %231 = xla_tuple %v229, %v230
        %s232 = scalar_lea.vmem [#allocation16], 40
        %v233 = vld [vmem:[%s232] sm:$0xff]
        %s234 = scalar_lea.vmem [#allocation17], 40
        %v235 = vld [vmem:[%s234] sm:$0xff]
        %236 = xla_tuple %v233, %v235
        %vm237 = vcmp.gt.s32.totalorder %v233, %v229
        %vm238 = vcmp.eq.s32.totalorder %v233, %v229
        %vm239 = vcmp.lt.s32.totalorder %v235, %v230
        %vm240 = vmand %vm238, %vm239
        %vm241 = vmor %vm237, %vm240
        %v242 = vsel %vm241, %v233, %v229
        %v243 = vsel %vm241, %v235, %v230
        %244 = xla_tuple %v242, %v243
        %s245 = scalar_lea.vmem [#allocation16], 48
        %v246 = vld [vmem:[%s245] sm:$0xff]
        %s247 = scalar_lea.vmem [#allocation17], 48
        %v248 = vld [vmem:[%s247] sm:$0xff]
        %249 = xla_tuple %v246, %v248
        %vm250 = vcmp.gt.s32.totalorder %v246, %v242
        %vm251 = vcmp.eq.s32.totalorder %v246, %v242
        %vm252 = vcmp.lt.s32.totalorder %v248, %v243
        %vm253 = vmand %vm251, %vm252
        %vm254 = vmor %vm250, %vm253
        %v255 = vsel %vm254, %v246, %v242
        %v256 = vsel %vm254, %v248, %v243
        %257 = xla_tuple %v255, %v256
        %s258 = scalar_lea.vmem [#allocation16], 56
        %v259 = vld [vmem:[%s258] sm:$0xff]
        %s260 = scalar_lea.vmem [#allocation17], 56
        %v261 = vld [vmem:[%s260] sm:$0xff]
        %262 = xla_tuple %v259, %v261
        %vm263 = vcmp.gt.s32.totalorder %v259, %v255
        %vm264 = vcmp.eq.s32.totalorder %v259, %v255
        %vm265 = vcmp.lt.s32.totalorder %v261, %v256
        %vm266 = vmand %vm264, %vm265
        %vm267 = vmor %vm263, %vm266
        %v268 = vsel %vm267, %v259, %v255
        %v269 = vsel %vm267, %v261, %v256
        %270 = xla_tuple %v268, %v269
        %v271 = vrot.slane %v268, 2
        %v272 = vrot.slane %v269, 2
        %273 = xla_tuple %v271, %v272
        %vm274 = vcmp.gt.s32.totalorder %v271, %v268
        %vm275 = vcmp.eq.s32.totalorder %v271, %v268
        %vm276 = vcmp.lt.s32.totalorder %v272, %v269
        %vm277 = vmand %vm275, %vm276
        %vm278 = vmor %vm274, %vm277
        %v279 = vsel %vm278, %v271, %v268
        %v280 = vsel %vm278, %v272, %v269
        %281 = xla_tuple %v279, %v280
        %v282 = vrot.slane %v279, 2
        %v283 = vrot.slane %v280, 2
        %284 = xla_tuple %v282, %v283
        %vm285 = vcmp.gt.s32.totalorder %v282, %v279
        %vm286 = vcmp.eq.s32.totalorder %v282, %v279
        %vm287 = vcmp.lt.s32.totalorder %v283, %v280
        %vm288 = vmand %vm286, %vm287
        %vm289 = vmor %vm285, %vm288
        %v290 = vsel %vm289, %v282, %v279
        %v291 = vsel %vm289, %v283, %v280
        %292 = xla_tuple %v290, %v291
        %v293 = vrot.slane %v290, 2
        %v294 = vrot.slane %v291, 2
        %295 = xla_tuple %v293, %v294
        %vm296 = vcmp.gt.s32.totalorder %v293, %v290
        %vm297 = vcmp.eq.s32.totalorder %v293, %v290
        %vm298 = vcmp.lt.s32.totalorder %v294, %v291
        %vm299 = vmand %vm297, %vm298
        %vm300 = vmor %vm296, %vm299
        %v301 = vsel %vm300, %v293, %v290
        %v302 = vsel %vm300, %v294, %v291
        %303 = xla_tuple %v301, %v302
        %304 = vxpose.xlu0.b32.start [1/16] %v301, 128
        %305 = vxpose.xlu0.b32.cont [2/16] %v301, 128
        %306 = vxpose.xlu0.b32.cont [3/16] %v301, 128
        %307 = vxpose.xlu0.b32.cont [4/16] %v301, 128
        %308 = vxpose.xlu0.b32.cont [5/16] %v301, 128
        %309 = vxpose.xlu0.b32.cont [6/16] %v301, 128
        %310 = vxpose.xlu0.b32.cont [7/16] %v301, 128
        %311 = vxpose.xlu0.b32.cont [8/16] %v301, 128
        %312 = vxpose.xlu0.b32.cont [9/16] %v301, 128
        %313 = vxpose.xlu0.b32.cont [10/16] %v301, 128
        %314 = vxpose.xlu0.b32.cont [11/16] %v301, 128
        %315 = vxpose.xlu0.b32.cont [12/16] %v301, 128
        %316 = vxpose.xlu0.b32.cont [13/16] %v301, 128
        %317 = vxpose.xlu0.b32.cont [14/16] %v301, 128
        %318 = vxpose.xlu0.b32.cont [15/16] %v301, 128
        %319 = vxpose.xlu0.b32.end [16/16] %v301, 128
        %v320 = vpop.trf.xlu0
        %v321 = vpop.trf.xlu0
        %v322 = vpop.trf.xlu0
        %v323 = vpop.trf.xlu0
        %v324 = vpop.trf.xlu0
        %v325 = vpop.trf.xlu0
        %v326 = vpop.trf.xlu0
        %v327 = vpop.trf.xlu0
        %v328 = vpop.trf.xlu0
        %v329 = vpop.trf.xlu0
        %v330 = vpop.trf.xlu0
        %v331 = vpop.trf.xlu0
        %v332 = vpop.trf.xlu0
        %v333 = vpop.trf.xlu0
        %v334 = vpop.trf.xlu0
        %v335 = vpop.trf.xlu0
        %336 = vxpose.xlu0.b32.start [1/16] %v302, 128
        %337 = vxpose.xlu0.b32.cont [2/16] %v302, 128
        %338 = vxpose.xlu0.b32.cont [3/16] %v302, 128
        %339 = vxpose.xlu0.b32.cont [4/16] %v302, 128
        %340 = vxpose.xlu0.b32.cont [5/16] %v302, 128
        %341 = vxpose.xlu0.b32.cont [6/16] %v302, 128
        %342 = vxpose.xlu0.b32.cont [7/16] %v302, 128
        %343 = vxpose.xlu0.b32.cont [8/16] %v302, 128
        %344 = vxpose.xlu0.b32.cont [9/16] %v302, 128
        %345 = vxpose.xlu0.b32.cont [10/16] %v302, 128
        %346 = vxpose.xlu0.b32.cont [11/16] %v302, 128
        %347 = vxpose.xlu0.b32.cont [12/16] %v302, 128
        %348 = vxpose.xlu0.b32.cont [13/16] %v302, 128
        %349 = vxpose.xlu0.b32.cont [14/16] %v302, 128
        %350 = vxpose.xlu0.b32.cont [15/16] %v302, 128
        %351 = vxpose.xlu0.b32.end [16/16] %v302, 128
        %v352 = vpop.trf.xlu0
        %v353 = vpop.trf.xlu0
        %v354 = vpop.trf.xlu0
        %v355 = vpop.trf.xlu0
        %v356 = vpop.trf.xlu0
        %v357 = vpop.trf.xlu0
        %v358 = vpop.trf.xlu0
        %v359 = vpop.trf.xlu0
        %v360 = vpop.trf.xlu0
        %v361 = vpop.trf.xlu0
        %v362 = vpop.trf.xlu0
        %v363 = vpop.trf.xlu0
        %v364 = vpop.trf.xlu0
        %v365 = vpop.trf.xlu0
        %v366 = vpop.trf.xlu0
        %v367 = vpop.trf.xlu0
        %368 = xla_tuple %v320, %v352
        %369 = xla_tuple %v321, %v353
        %vm370 = vcmp.gt.s32.totalorder %v321, %v320
        %vm371 = vcmp.eq.s32.totalorder %v321, %v320
        %vm372 = vcmp.lt.s32.totalorder %v353, %v352
        %vm373 = vmand %vm371, %vm372
        %vm374 = vmor %vm370, %vm373
        %v375 = vsel %vm374, %v321, %v320
        %v376 = vsel %vm374, %v353, %v352
        %377 = xla_tuple %v375, %v376
        %378 = xla_tuple %v322, %v354
        %vm379 = vcmp.gt.s32.totalorder %v322, %v375
        %vm380 = vcmp.eq.s32.totalorder %v322, %v375
        %vm381 = vcmp.lt.s32.totalorder %v354, %v376
        %vm382 = vmand %vm380, %vm381
        %vm383 = vmor %vm379, %vm382
        %v384 = vsel %vm383, %v322, %v375
        %v385 = vsel %vm383, %v354, %v376
        %386 = xla_tuple %v384, %v385
        %387 = xla_tuple %v323, %v355
        %vm388 = vcmp.gt.s32.totalorder %v323, %v384
        %vm389 = vcmp.eq.s32.totalorder %v323, %v384
        %vm390 = vcmp.lt.s32.totalorder %v355, %v385
        %vm391 = vmand %vm389, %vm390
        %vm392 = vmor %vm388, %vm391
        %v393 = vsel %vm392, %v323, %v384
        %v394 = vsel %vm392, %v355, %v385
        %395 = xla_tuple %v393, %v394
        %396 = xla_tuple %v324, %v356
        %vm397 = vcmp.gt.s32.totalorder %v324, %v393
        %vm398 = vcmp.eq.s32.totalorder %v324, %v393
        %vm399 = vcmp.lt.s32.totalorder %v356, %v394
        %vm400 = vmand %vm398, %vm399
        %vm401 = vmor %vm397, %vm400
        %v402 = vsel %vm401, %v324, %v393
        %v403 = vsel %vm401, %v356, %v394
        %404 = xla_tuple %v402, %v403
        %405 = xla_tuple %v325, %v357
        %vm406 = vcmp.gt.s32.totalorder %v325, %v402
        %vm407 = vcmp.eq.s32.totalorder %v325, %v402
        %vm408 = vcmp.lt.s32.totalorder %v357, %v403
        %vm409 = vmand %vm407, %vm408
        %vm410 = vmor %vm406, %vm409
        %v411 = vsel %vm410, %v325, %v402
        %v412 = vsel %vm410, %v357, %v403
        %413 = xla_tuple %v411, %v412
        %414 = xla_tuple %v326, %v358
        %vm415 = vcmp.gt.s32.totalorder %v326, %v411
        %vm416 = vcmp.eq.s32.totalorder %v326, %v411
        %vm417 = vcmp.lt.s32.totalorder %v358, %v412
        %vm418 = vmand %vm416, %vm417
        %vm419 = vmor %vm415, %vm418
        %v420 = vsel %vm419, %v326, %v411
        %v421 = vsel %vm419, %v358, %v412
        %422 = xla_tuple %v420, %v421
        %423 = xla_tuple %v327, %v359
        %vm424 = vcmp.gt.s32.totalorder %v327, %v420
        %vm425 = vcmp.eq.s32.totalorder %v327, %v420
        %vm426 = vcmp.lt.s32.totalorder %v359, %v421
        %vm427 = vmand %vm425, %vm426
        %vm428 = vmor %vm424, %vm427
        %v429 = vsel %vm428, %v327, %v420
        %v430 = vsel %vm428, %v359, %v421
        %431 = xla_tuple %v429, %v430
        %432 = xla_tuple %v328, %v360
        %vm433 = vcmp.gt.s32.totalorder %v328, %v429
        %vm434 = vcmp.eq.s32.totalorder %v328, %v429
        %vm435 = vcmp.lt.s32.totalorder %v360, %v430
        %vm436 = vmand %vm434, %vm435
        %vm437 = vmor %vm433, %vm436
        %v438 = vsel %vm437, %v328, %v429
        %v439 = vsel %vm437, %v360, %v430
        %440 = xla_tuple %v438, %v439
        %441 = xla_tuple %v329, %v361
        %vm442 = vcmp.gt.s32.totalorder %v329, %v438
        %vm443 = vcmp.eq.s32.totalorder %v329, %v438
        %vm444 = vcmp.lt.s32.totalorder %v361, %v439
        %vm445 = vmand %vm443, %vm444
        %vm446 = vmor %vm442, %vm445
        %v447 = vsel %vm446, %v329, %v438
        %v448 = vsel %vm446, %v361, %v439
        %449 = xla_tuple %v447, %v448
        %450 = xla_tuple %v330, %v362
        %vm451 = vcmp.gt.s32.totalorder %v330, %v447
        %vm452 = vcmp.eq.s32.totalorder %v330, %v447
        %vm453 = vcmp.lt.s32.totalorder %v362, %v448
        %vm454 = vmand %vm452, %vm453
        %vm455 = vmor %vm451, %vm454
        %v456 = vsel %vm455, %v330, %v447
        %v457 = vsel %vm455, %v362, %v448
        %458 = xla_tuple %v456, %v457
        %459 = xla_tuple %v331, %v363
        %vm460 = vcmp.gt.s32.totalorder %v331, %v456
        %vm461 = vcmp.eq.s32.totalorder %v331, %v456
        %vm462 = vcmp.lt.s32.totalorder %v363, %v457
        %vm463 = vmand %vm461, %vm462
        %vm464 = vmor %vm460, %vm463
        %v465 = vsel %vm464, %v331, %v456
        %v466 = vsel %vm464, %v363, %v457
        %467 = xla_tuple %v465, %v466
        %468 = xla_tuple %v332, %v364
        %vm469 = vcmp.gt.s32.totalorder %v332, %v465
        %vm470 = vcmp.eq.s32.totalorder %v332, %v465
        %vm471 = vcmp.lt.s32.totalorder %v364, %v466
        %vm472 = vmand %vm470, %vm471
        %vm473 = vmor %vm469, %vm472
        %v474 = vsel %vm473, %v332, %v465
        %v475 = vsel %vm473, %v364, %v466
        %476 = xla_tuple %v474, %v475
        %477 = xla_tuple %v333, %v365
        %vm478 = vcmp.gt.s32.totalorder %v333, %v474
        %vm479 = vcmp.eq.s32.totalorder %v333, %v474
        %vm480 = vcmp.lt.s32.totalorder %v365, %v475
        %vm481 = vmand %vm479, %vm480
        %vm482 = vmor %vm478, %vm481
        %v483 = vsel %vm482, %v333, %v474
        %v484 = vsel %vm482, %v365, %v475
        %485 = xla_tuple %v483, %v484
        %486 = xla_tuple %v334, %v366
        %vm487 = vcmp.gt.s32.totalorder %v334, %v483
        %vm488 = vcmp.eq.s32.totalorder %v334, %v483
        %vm489 = vcmp.lt.s32.totalorder %v366, %v484
        %vm490 = vmand %vm488, %vm489
        %vm491 = vmor %vm487, %vm490
        %v492 = vsel %vm491, %v334, %v483
        %v493 = vsel %vm491, %v366, %v484
        %494 = xla_tuple %v492, %v493
        %495 = xla_tuple %v335, %v367
        %vm496 = vcmp.gt.s32.totalorder %v335, %v492
        %vm497 = vcmp.eq.s32.totalorder %v335, %v492
        %vm498 = vcmp.lt.s32.totalorder %v367, %v493
        %vm499 = vmand %vm497, %vm498
        %vm500 = vmor %vm496, %vm499
        %v501 = vsel %vm500, %v335, %v492
        %v502 = vsel %vm500, %v367, %v493
        %503 = xla_tuple %v501, %v502
        %v504 = vrot.slane %v501, 1
        %v505 = vrot.slane %v502, 1
        %506 = xla_tuple %v504, %v505
        %vm507 = vcmp.gt.s32.totalorder %v504, %v501
        %vm508 = vcmp.eq.s32.totalorder %v504, %v501
        %vm509 = vcmp.lt.s32.totalorder %v505, %v502
        %vm510 = vmand %vm508, %vm509
        %vm511 = vmor %vm507, %vm510
        %v512 = vsel %vm511, %v504, %v501
        %v513 = vsel %vm511, %v505, %v502
        %514 = xla_tuple %v512, %v513
        %v515 = vrot.slane %v512, 1
        %v516 = vrot.slane %v513, 1
        %517 = xla_tuple %v515, %v516
        %vm518 = vcmp.gt.s32.totalorder %v515, %v512
        %vm519 = vcmp.eq.s32.totalorder %v515, %v512
        %vm520 = vcmp.lt.s32.totalorder %v516, %v513
        %vm521 = vmand %vm519, %vm520
        %vm522 = vmor %vm518, %vm521
        %v523 = vsel %vm522, %v515, %v512
        %v524 = vsel %vm522, %v516, %v513
        %525 = xla_tuple %v523, %v524
        %v526 = vrot.slane %v523, 1
        %v527 = vrot.slane %v524, 1
        %528 = xla_tuple %v526, %v527
        %vm529 = vcmp.gt.s32.totalorder %v526, %v523
        %vm530 = vcmp.eq.s32.totalorder %v526, %v523
        %vm531 = vcmp.lt.s32.totalorder %v527, %v524
        %vm532 = vmand %vm530, %vm531
        %vm533 = vmor %vm529, %vm532
        %v534 = vsel %vm533, %v526, %v523
        %v535 = vsel %vm533, %v527, %v524
        %536 = xla_tuple %v534, %v535
        %v537 = vrot.slane %v534, 1
        %v538 = vrot.slane %v535, 1
        %539 = xla_tuple %v537, %v538
        %vm540 = vcmp.gt.s32.totalorder %v537, %v534
        %vm541 = vcmp.eq.s32.totalorder %v537, %v534
        %vm542 = vcmp.lt.s32.totalorder %v538, %v535
        %vm543 = vmand %vm541, %vm542
        %vm544 = vmor %vm540, %vm543
        %v545 = vsel %vm544, %v537, %v534
        %v546 = vsel %vm544, %v538, %v535
        %547 = xla_tuple %v545, %v546
        %v548 = vrot.slane %v545, 1
        %v549 = vrot.slane %v546, 1
        %550 = xla_tuple %v548, %v549
        %vm551 = vcmp.gt.s32.totalorder %v548, %v545
        %vm552 = vcmp.eq.s32.totalorder %v548, %v545
        %vm553 = vcmp.lt.s32.totalorder %v549, %v546
        %vm554 = vmand %vm552, %vm553
        %vm555 = vmor %vm551, %vm554
        %v556 = vsel %vm555, %v548, %v545
        %v557 = vsel %vm555, %v549, %v546
        %558 = xla_tuple %v556, %v557
        %v559 = vrot.slane %v556, 1
        %v560 = vrot.slane %v557, 1
        %561 = xla_tuple %v559, %v560
        %vm562 = vcmp.gt.s32.totalorder %v559, %v556
        %vm563 = vcmp.eq.s32.totalorder %v559, %v556
        %vm564 = vcmp.lt.s32.totalorder %v560, %v557
        %vm565 = vmand %vm563, %vm564
        %vm566 = vmor %vm562, %vm565
        %v567 = vsel %vm566, %v559, %v556
        %v568 = vsel %vm566, %v560, %v557
        %569 = xla_tuple %v567, %v568
        %v570 = vrot.slane %v567, 1
        %v571 = vrot.slane %v568, 1
        %572 = xla_tuple %v570, %v571
        %vm573 = vcmp.gt.s32.totalorder %v570, %v567
        %vm574 = vcmp.eq.s32.totalorder %v570, %v567
        %vm575 = vcmp.lt.s32.totalorder %v571, %v568
        %vm576 = vmand %vm574, %vm575
        %vm577 = vmor %vm573, %vm576
        %v578 = vsel %vm577, %v570, %v567
        %v579 = vsel %vm577, %v571, %v568
        %580 = xla_tuple %v578, %v579
        %s581 = scalar_lea.vmem [#allocation13], %s172
        %582 = vst [vmem:[%s581] sm:$0x1] %v578
        %s583 = scalar_lea.vmem [#allocation15], %s172
        %584 = vst [vmem:[%s583] sm:$0x1] %v579
        %585 = xla_tuple %582, %584
        %586 = vxpose.xlu0.b32.start [1/16] %v579, 128
        %587 = vxpose.xlu0.b32.cont [2/16] 0.0, 128
        %588 = vxpose.xlu0.b32.cont [3/16] 0.0, 128
        %589 = vxpose.xlu0.b32.cont [4/16] 0.0, 128
        %590 = vxpose.xlu0.b32.cont [5/16] 0.0, 128
        %591 = vxpose.xlu0.b32.cont [6/16] 0.0, 128
        %592 = vxpose.xlu0.b32.cont [7/16] 0.0, 128
        %593 = vxpose.xlu0.b32.cont [8/16] 0.0, 128
        %594 = vxpose.xlu0.b32.cont [9/16] 0.0, 128
        %595 = vxpose.xlu0.b32.cont [10/16] 0.0, 128
        %596 = vxpose.xlu0.b32.cont [11/16] 0.0, 128
        %597 = vxpose.xlu0.b32.cont [12/16] 0.0, 128
        %598 = vxpose.xlu0.b32.cont [13/16] 0.0, 128
        %599 = vxpose.xlu0.b32.cont [14/16] 0.0, 128
        %600 = vxpose.xlu0.b32.cont [15/16] 0.0, 128
        %601 = vxpose.xlu0.b32.end [16/16] 0.0, 128
        %v602 = vpop.trf.xlu0
        %v603 = vpop.trf.xlu0
        %v604 = vpop.trf.xlu0
        %v605 = vpop.trf.xlu0
        %v606 = vpop.trf.xlu0
        %v607 = vpop.trf.xlu0
        %v608 = vpop.trf.xlu0
        %v609 = vpop.trf.xlu0
        %v610 = vpop.trf.xlu0
        %v611 = vpop.trf.xlu0
        %v612 = vpop.trf.xlu0
        %v613 = vpop.trf.xlu0
        %v614 = vpop.trf.xlu0
        %v615 = vpop.trf.xlu0
        %v616 = vpop.trf.xlu0
        %v617 = vpop.trf.xlu0
        %s618 = vtos %v602
        %s619 = sshrl.u32 %s618, 9
        %p620 = scmp.lt.s32.totalorder %s618, 0
        %s621 = ssub.s32 0, %s618
        %s622 = scalar_select %p620, %s621, %s618
        %s623 = sand.u32 %s622, 511
        %s624 = ssub.s32 0, %s623
        %s625 = scalar_select %p620, %s624, %s623
        %s626 = sshrl.u32 %s625, 7
        %s627 = smul.u32 %s626, 256
        %s628 = sand.u32 %s625, 127
        %s629 = sadd.s32 %s627, %s628
        %v630 = vlaneseq
        %v631 = vstv %s629
        %vm633 = vcmp.eq.s32.totalorder %v630, %v631
        %s634 = smul.addr %s619, 8
        %s635 = scalar_lea.vmem [#allocation16], %s634
        %636 = vst.msk [vmem:[%s635] sm:$0xff] %vm633, 2147483648
        %s637 = smul.addr %s619, 8
        %s638 = scalar_lea.vmem [#allocation17], %s637
        %639 = vst.msk [vmem:[%s638] sm:$0xff] %vm633, 2147483647
        %640 = xla_tuple %636, %639
        %v641 = vrot.slane %v602, 1
        %s642 = vtos %v641
        %s643 = sshrl.u32 %s642, 9
        %p644 = scmp.lt.s32.totalorder %s642, 0
        %s645 = ssub.s32 0, %s642
        %s646 = scalar_select %p644, %s645, %s642
        %s647 = sand.u32 %s646, 511
        %s648 = ssub.s32 0, %s647
        %s649 = scalar_select %p644, %s648, %s647
        %s650 = sshrl.u32 %s649, 7
        %s651 = smul.u32 %s650, 256
        %s652 = sand.u32 %s649, 127
        %s653 = sadd.s32 %s651, %s652
        %v654 = vlaneseq
        %v655 = vstv %s653
        %v656 = vadd.s32 %v655, 128
        %vm657 = vcmp.eq.s32.totalorder %v654, %v656
        %s658 = smul.addr %s643, 8
        %s659 = scalar_lea.vmem [#allocation16], %s658
        %660 = vst.msk [vmem:[%s659] sm:$0xff] %vm657, 2147483648
        %s661 = smul.addr %s643, 8
        %s662 = scalar_lea.vmem [#allocation17], %s661
        %663 = vst.msk [vmem:[%s662] sm:$0xff] %vm657, 2147483647
        %664 = xla_tuple %660, %663
        %v665 = vrot.slane %v641, 1
      $region37: #{custom-call} parent=2 // loop_footer
        %s176 = sadd.s32 1, %s172
      $region38: #{custom-call} parent=2 // loop_footer_branch
        %171 = sbr.rel target = $region34
      $region39: #{custom-call} parent=2 // loop_exit
        _
      %s666 = scalar_lea.vmem [#allocation13], 7
      %v667 = vld [vmem:[%s666] ss:$-1 sm:$0xff]
      %s668 = scalar_lea.vmem [#allocation13], 7
      %v669 = vld [vmem:[%s668] ss:$-1 sm:$0xff]
      %670 = vst [vmem:[#allocation13] sm:$0xff] %v669
      %671 = vst [vmem:[#allocation13] sm:$0xff] %v667
      %s672 = scalar_lea.vmem [#allocation15], 7
      %v673 = vld [vmem:[%s672] ss:$-1 sm:$0xff]
      %s674 = scalar_lea.vmem [#allocation15], 7
      %v675 = vld [vmem:[%s674] ss:$-1 sm:$0xff]
      %676 = vst [vmem:[#allocation15] sm:$0xff] %v675
      %677 = vst [vmem:[#allocation15] sm:$0xff] %v673
      %678 = xla_tuple %671, %677
      %v679 = vld [vmem:[#allocation12] sm:$0xff]
      %v680 = vld [vmem:[#allocation14] sm:$0xff]
      %681 = xla_tuple %v679, %v680
      %v682 = vld [vmem:[#allocation13] sm:$0xff]
      %v683 = vld [vmem:[#allocation15] sm:$0xff]
      %684 = xla_tuple %v682, %v683
      %vm685 = vcmp.gt.s32.totalorder %v679, %v682
      %vm686 = vcmp.eq.s32.totalorder %v679, %v682
      %vm687 = vcmp.lt.s32.totalorder %v680, %v683
      %vm688 = vmand %vm686, %vm687
      %vm689 = vmor %vm685, %vm688
      %v690 = vsel %vm689, %v679, %v682
      %691 = vst [vmem:[#allocation12] sm:$0xff] %v690
      %v692 = vsel %vm689, %v682, %v679
      %693 = vst [vmem:[#allocation13] sm:$0xff] %v692
      %v694 = vsel %vm689, %v680, %v683
      %695 = vst [vmem:[#allocation14] sm:$0xff] %v694
      %v696 = vsel %vm689, %v683, %v680
      %697 = vst [vmem:[#allocation15] sm:$0xff] %v696
      %698 = xla_tuple %693, %697
      %699 = xla_tuple [#allocation12], [#allocation14]
      %v700 = vld [vmem:[#allocation12] sm:$0xff]
      %v701 = vld [vmem:[#allocation14] sm:$0xff]
      %702 = xla_tuple %v700, %v701
      %v704 = vunpack.c.l.s4 839939668
      %v705 = vunpack.c.0.s8 %v704
      %v706 = vlaneseq
      %v707 = vshrl.u32 %v706, 7
      %v708 = vsub.s32 %v705, %v707
      %v709 = vrot.slane %v700, %v708
      %v711 = vunpack.c.l.s4 839939668
      %v712 = vunpack.c.0.s8 %v711
      %v713 = vlaneseq
      %v714 = vshrl.u32 %v713, 7
      %v715 = vsub.s32 %v712, %v714
      %v716 = vrot.slane %v701, %v715
      %717 = xla_tuple %v709, %v716
      %vm718 = vcmp.gt.s32.totalorder %v700, %v709
      %vm719 = vcmp.eq.s32.totalorder %v700, %v709
      %vm720 = vcmp.lt.s32.totalorder %v701, %v716
      %vm721 = vmand %vm719, %vm720
      %vm722 = vmor %vm718, %vm721
      %v723 = vlaneseq
      %v724 = vshrl.u32 %v723, 7
      %v725 = vand.u32 %v724, 4
      %vm726 = vcmp.ne.s32.totalorder %v725, 0
      %vm727 = vmxor %vm722, %vm726
      %v728 = vsel %vm727, %v700, %v709
      %v729 = vsel %vm727, %v701, %v716
      %730 = xla_tuple %v728, %v729
      %v732 = vunpack.c.l.s4 1417023538
      %v733 = vunpack.c.0.s8 %v732
      %v734 = vlaneseq
      %v735 = vshrl.u32 %v734, 7
      %v736 = vsub.s32 %v733, %v735
      %v737 = vrot.slane %v728, %v736
      %v739 = vunpack.c.l.s4 1417023538
      %v740 = vunpack.c.0.s8 %v739
      %v741 = vlaneseq
      %v742 = vshrl.u32 %v741, 7
      %v743 = vsub.s32 %v740, %v742
      %v744 = vrot.slane %v729, %v743
      %745 = xla_tuple %v737, %v744
      %vm746 = vcmp.gt.s32.totalorder %v728, %v737
      %vm747 = vcmp.eq.s32.totalorder %v728, %v737
      %vm748 = vcmp.lt.s32.totalorder %v729, %v744
      %vm749 = vmand %vm747, %vm748
      %vm750 = vmor %vm746, %vm749
      %v751 = vlaneseq
      %v752 = vshrl.u32 %v751, 7
      %v753 = vand.u32 %v752, 2
      %vm754 = vcmp.ne.s32.totalorder %v753, 0
      %vm755 = vmxor %vm750, %vm754
      %v756 = vsel %vm755, %v728, %v737
      %v757 = vsel %vm755, %v729, %v744
      %758 = xla_tuple %v756, %v757
      %v760 = vunpack.c.l.s4 1732584193
      %v761 = vunpack.c.0.s8 %v760
      %v762 = vlaneseq
      %v763 = vshrl.u32 %v762, 7
      %v764 = vsub.s32 %v761, %v763
      %v765 = vrot.slane %v756, %v764
      %v767 = vunpack.c.l.s4 1732584193
      %v768 = vunpack.c.0.s8 %v767
      %v769 = vlaneseq
      %v770 = vshrl.u32 %v769, 7
      %v771 = vsub.s32 %v768, %v770
      %v772 = vrot.slane %v757, %v771
      %773 = xla_tuple %v765, %v772
      %vm774 = vcmp.gt.s32.totalorder %v756, %v765
      %vm775 = vcmp.eq.s32.totalorder %v756, %v765
      %vm776 = vcmp.lt.s32.totalorder %v757, %v772
      %vm777 = vmand %vm775, %vm776
      %vm778 = vmor %vm774, %vm777
      %v779 = vlaneseq
      %v780 = vshrl.u32 %v779, 7
      %v781 = vand.u32 %v780, 1
      %vm782 = vcmp.ne.s32.totalorder %v781, 0
      %vm783 = vmxor %vm778, %vm782
      %v784 = vsel %vm783, %v756, %v765
      %v785 = vsel %vm783, %v757, %v772
      %786 = xla_tuple %v784, %v785
      %787 = vst [vmem:[#allocation12] sm:$0xff] %v784
      %788 = vst [vmem:[#allocation14] sm:$0xff] %v785
      %789 = xla_tuple %787, %788
      %v790 = vld [vmem:[#allocation12] sm:$0xff]
      %v791 = vld [vmem:[#allocation14] sm:$0xff]
      %792 = xla_tuple %v790, %v791
      %v794 = vunpack.c.l.s4 839939668
      %v795 = vunpack.c.0.s8 %v794
      %v796 = vlaneseq
      %v797 = vshrl.u32 %v796, 7
      %v798 = vsub.s32 %v795, %v797
      %v799 = vrot.slane %v790, %v798
      %v801 = vunpack.c.l.s4 839939668
      %v802 = vunpack.c.0.s8 %v801
      %v803 = vlaneseq
      %v804 = vshrl.u32 %v803, 7
      %v805 = vsub.s32 %v802, %v804
      %v806 = vrot.slane %v791, %v805
      %807 = xla_tuple %v799, %v806
      %vm808 = vcmp.gt.s32.totalorder %v790, %v799
      %vm809 = vcmp.eq.s32.totalorder %v790, %v799
      %vm810 = vcmp.lt.s32.totalorder %v791, %v806
      %vm811 = vmand %vm809, %vm810
      %vm812 = vmor %vm808, %vm811
      %v813 = vlaneseq
      %v814 = vshrl.u32 %v813, 7
      %v815 = vand.u32 %v814, 4
      %vm816 = vcmp.ne.s32.totalorder %v815, 0
      %vm817 = vmxor %vm812, %vm816
      %v818 = vsel %vm817, %v790, %v799
      %v819 = vsel %vm817, %v791, %v806
      %820 = xla_tuple %v818, %v819
      %v822 = vunpack.c.l.s4 1417023538
      %v823 = vunpack.c.0.s8 %v822
      %v824 = vlaneseq
      %v825 = vshrl.u32 %v824, 7
      %v826 = vsub.s32 %v823, %v825
      %v827 = vrot.slane %v818, %v826
      %v829 = vunpack.c.l.s4 1417023538
      %v830 = vunpack.c.0.s8 %v829
      %v831 = vlaneseq
      %v832 = vshrl.u32 %v831, 7
      %v833 = vsub.s32 %v830, %v832
      %v834 = vrot.slane %v819, %v833
      %835 = xla_tuple %v827, %v834
      %vm836 = vcmp.gt.s32.totalorder %v818, %v827
      %vm837 = vcmp.eq.s32.totalorder %v818, %v827
      %vm838 = vcmp.lt.s32.totalorder %v819, %v834
      %vm839 = vmand %vm837, %vm838
      %vm840 = vmor %vm836, %vm839
      %v841 = vlaneseq
      %v842 = vshrl.u32 %v841, 7
      %v843 = vand.u32 %v842, 2
      %vm844 = vcmp.ne.s32.totalorder %v843, 0
      %vm845 = vmxor %vm840, %vm844
      %v846 = vsel %vm845, %v818, %v827
      %v847 = vsel %vm845, %v819, %v834
      %848 = xla_tuple %v846, %v847
      %v850 = vunpack.c.l.s4 1732584193
      %v851 = vunpack.c.0.s8 %v850
      %v852 = vlaneseq
      %v853 = vshrl.u32 %v852, 7
      %v854 = vsub.s32 %v851, %v853
      %v855 = vrot.slane %v846, %v854
      %v857 = vunpack.c.l.s4 1732584193
      %v858 = vunpack.c.0.s8 %v857
      %v859 = vlaneseq
      %v860 = vshrl.u32 %v859, 7
      %v861 = vsub.s32 %v858, %v860
      %v862 = vrot.slane %v847, %v861
      %863 = xla_tuple %v855, %v862
      %vm864 = vcmp.gt.s32.totalorder %v846, %v855
      %vm865 = vcmp.eq.s32.totalorder %v846, %v855
      %vm866 = vcmp.lt.s32.totalorder %v847, %v862
      %vm867 = vmand %vm865, %vm866
      %vm868 = vmor %vm864, %vm867
      %v869 = vlaneseq
      %v870 = vshrl.u32 %v869, 7
      %v871 = vand.u32 %v870, 1
      %vm872 = vcmp.ne.s32.totalorder %v871, 0
      %vm873 = vmxor %vm868, %vm872
      %v874 = vsel %vm873, %v846, %v855
      %v875 = vsel %vm873, %v847, %v862
      %876 = xla_tuple %v874, %v875
      %877 = vst [vmem:[#allocation12] sm:$0xff] %v874
      %878 = vst [vmem:[#allocation14] sm:$0xff] %v875
      %879 = xla_tuple %877, %878
      %880 = xla_tuple [#allocation13], [#allocation15]
      %v881 = vld [vmem:[#allocation13] sm:$0xff]
      %v882 = vld [vmem:[#allocation15] sm:$0xff]
      %883 = xla_tuple %v881, %v882
      %v885 = vunpack.c.l.s4 839939668
      %v886 = vunpack.c.0.s8 %v885
      %v887 = vlaneseq
      %v888 = vshrl.u32 %v887, 7
      %v889 = vsub.s32 %v886, %v888
      %v890 = vrot.slane %v881, %v889
      %v892 = vunpack.c.l.s4 839939668
      %v893 = vunpack.c.0.s8 %v892
      %v894 = vlaneseq
      %v895 = vshrl.u32 %v894, 7
      %v896 = vsub.s32 %v893, %v895
      %v897 = vrot.slane %v882, %v896
      %898 = xla_tuple %v890, %v897
      %vm899 = vcmp.gt.s32.totalorder %v881, %v890
      %vm900 = vcmp.eq.s32.totalorder %v881, %v890
      %vm901 = vcmp.lt.s32.totalorder %v882, %v897
      %vm902 = vmand %vm900, %vm901
      %vm903 = vmor %vm899, %vm902
      %v904 = vlaneseq
      %v905 = vshrl.u32 %v904, 7
      %v906 = vand.u32 %v905, 4
      %vm907 = vcmp.ne.s32.totalorder %v906, 0
      %vm908 = vmxor %vm903, %vm907
      %v909 = vsel %vm908, %v881, %v890
      %v910 = vsel %vm908, %v882, %v897
      %911 = xla_tuple %v909, %v910
      %v913 = vunpack.c.l.s4 1417023538
      %v914 = vunpack.c.0.s8 %v913
      %v915 = vlaneseq
      %v916 = vshrl.u32 %v915, 7
      %v917 = vsub.s32 %v914, %v916
      %v918 = vrot.slane %v909, %v917
      %v920 = vunpack.c.l.s4 1417023538
      %v921 = vunpack.c.0.s8 %v920
      %v922 = vlaneseq
      %v923 = vshrl.u32 %v922, 7
      %v924 = vsub.s32 %v921, %v923
      %v925 = vrot.slane %v910, %v924
      %926 = xla_tuple %v918, %v925
      %vm927 = vcmp.gt.s32.totalorder %v909, %v918
      %vm928 = vcmp.eq.s32.totalorder %v909, %v918
      %vm929 = vcmp.lt.s32.totalorder %v910, %v925
      %vm930 = vmand %vm928, %vm929
      %vm931 = vmor %vm927, %vm930
      %v932 = vlaneseq
      %v933 = vshrl.u32 %v932, 7
      %v934 = vand.u32 %v933, 2
      %vm935 = vcmp.ne.s32.totalorder %v934, 0
      %vm936 = vmxor %vm931, %vm935
      %v937 = vsel %vm936, %v909, %v918
      %v938 = vsel %vm936, %v910, %v925
      %939 = xla_tuple %v937, %v938
      %v941 = vunpack.c.l.s4 1732584193
      %v942 = vunpack.c.0.s8 %v941
      %v943 = vlaneseq
      %v944 = vshrl.u32 %v943, 7
      %v945 = vsub.s32 %v942, %v944
      %v946 = vrot.slane %v937, %v945
      %v948 = vunpack.c.l.s4 1732584193
      %v949 = vunpack.c.0.s8 %v948
      %v950 = vlaneseq
      %v951 = vshrl.u32 %v950, 7
      %v952 = vsub.s32 %v949, %v951
      %v953 = vrot.slane %v938, %v952
      %954 = xla_tuple %v946, %v953
      %vm955 = vcmp.gt.s32.totalorder %v937, %v946
      %vm956 = vcmp.eq.s32.totalorder %v937, %v946
      %vm957 = vcmp.lt.s32.totalorder %v938, %v953
      %vm958 = vmand %vm956, %vm957
      %vm959 = vmor %vm955, %vm958
      %v960 = vlaneseq
      %v961 = vshrl.u32 %v960, 7
      %v962 = vand.u32 %v961, 1
      %vm963 = vcmp.ne.s32.totalorder %v962, 0
      %vm964 = vmxor %vm959, %vm963
      %v965 = vsel %vm964, %v937, %v946
      %v966 = vsel %vm964, %v938, %v953
      %967 = xla_tuple %v965, %v966
      %968 = vst [vmem:[#allocation13] sm:$0xff] %v965
      %969 = vst [vmem:[#allocation15] sm:$0xff] %v966
      %970 = xla_tuple %968, %969
      %v971 = vld [vmem:[#allocation13] sm:$0xff]
      %v972 = vld [vmem:[#allocation15] sm:$0xff]
      %973 = xla_tuple %v971, %v972
      %v975 = vunpack.c.l.s4 839939668
      %v976 = vunpack.c.0.s8 %v975
      %v977 = vlaneseq
      %v978 = vshrl.u32 %v977, 7
      %v979 = vsub.s32 %v976, %v978
      %v980 = vrot.slane %v971, %v979
      %v982 = vunpack.c.l.s4 839939668
      %v983 = vunpack.c.0.s8 %v982
      %v984 = vlaneseq
      %v985 = vshrl.u32 %v984, 7
      %v986 = vsub.s32 %v983, %v985
      %v987 = vrot.slane %v972, %v986
      %988 = xla_tuple %v980, %v987
      %vm989 = vcmp.gt.s32.totalorder %v971, %v980
      %vm990 = vcmp.eq.s32.totalorder %v971, %v980
      %vm991 = vcmp.lt.s32.totalorder %v972, %v987
      %vm992 = vmand %vm990, %vm991
      %vm993 = vmor %vm989, %vm992
      %v994 = vlaneseq
      %v995 = vshrl.u32 %v994, 7
      %v996 = vand.u32 %v995, 4
      %vm997 = vcmp.ne.s32.totalorder %v996, 0
      %vm998 = vmxor %vm993, %vm997
      %v999 = vsel %vm998, %v971, %v980
      %v1000 = vsel %vm998, %v972, %v987
      %1001 = xla_tuple %v999, %v1000
      %v1003 = vunpack.c.l.s4 1417023538
      %v1004 = vunpack.c.0.s8 %v1003
      %v1005 = vlaneseq
      %v1006 = vshrl.u32 %v1005, 7
      %v1007 = vsub.s32 %v1004, %v1006
      %v1008 = vrot.slane %v999, %v1007
      %v1010 = vunpack.c.l.s4 1417023538
      %v1011 = vunpack.c.0.s8 %v1010
      %v1012 = vlaneseq
      %v1013 = vshrl.u32 %v1012, 7
      %v1014 = vsub.s32 %v1011, %v1013
      %v1015 = vrot.slane %v1000, %v1014
      %1016 = xla_tuple %v1008, %v1015
      %vm1017 = vcmp.gt.s32.totalorder %v999, %v1008
      %vm1018 = vcmp.eq.s32.totalorder %v999, %v1008
      %vm1019 = vcmp.lt.s32.totalorder %v1000, %v1015
      %vm1020 = vmand %vm1018, %vm1019
      %vm1021 = vmor %vm1017, %vm1020
      %v1022 = vlaneseq
      %v1023 = vshrl.u32 %v1022, 7
      %v1024 = vand.u32 %v1023, 2
      %vm1025 = vcmp.ne.s32.totalorder %v1024, 0
      %vm1026 = vmxor %vm1021, %vm1025
      %v1027 = vsel %vm1026, %v999, %v1008
      %v1028 = vsel %vm1026, %v1000, %v1015
      %1029 = xla_tuple %v1027, %v1028
      %v1031 = vunpack.c.l.s4 1732584193
      %v1032 = vunpack.c.0.s8 %v1031
      %v1033 = vlaneseq
      %v1034 = vshrl.u32 %v1033, 7
      %v1035 = vsub.s32 %v1032, %v1034
      %v1036 = vrot.slane %v1027, %v1035
      %v1038 = vunpack.c.l.s4 1732584193
      %v1039 = vunpack.c.0.s8 %v1038
      %v1040 = vlaneseq
      %v1041 = vshrl.u32 %v1040, 7
      %v1042 = vsub.s32 %v1039, %v1041
      %v1043 = vrot.slane %v1028, %v1042
      %1044 = xla_tuple %v1036, %v1043
      %vm1045 = vcmp.gt.s32.totalorder %v1027, %v1036
      %vm1046 = vcmp.eq.s32.totalorder %v1027, %v1036
      %vm1047 = vcmp.lt.s32.totalorder %v1028, %v1043
      %vm1048 = vmand %vm1046, %vm1047
      %vm1049 = vmor %vm1045, %vm1048
      %v1050 = vlaneseq
      %v1051 = vshrl.u32 %v1050, 7
      %v1052 = vand.u32 %v1051, 1
      %vm1053 = vcmp.ne.s32.totalorder %v1052, 0
      %vm1054 = vmxor %vm1049, %vm1053
      %v1055 = vsel %vm1054, %v1027, %v1036
      %v1056 = vsel %vm1054, %v1028, %v1043
      %1057 = xla_tuple %v1055, %v1056
      %1058 = vst [vmem:[#allocation13] sm:$0xff] %v1055
      %1059 = vst [vmem:[#allocation15] sm:$0xff] %v1056
      %1060 = xla_tuple %1058, %1059
    %v1061 = vld [vmem:[#allocation12] sm:$0xff]
    %vm1062 = vcmp.lt.s32.totalorder %v1061, 0
    %v1063 = vsub.s32 2147483647, %v1061
    %v1064 = vsel %vm1062, %v1063, %v1061
    %1065 = vst [vmem:[#allocation12] sm:$0xff] %v1064
    %v1066 = vld [vmem:[#allocation12] sm:$0xff]
    %1067 = vxpose.xlu0.b32.start.end [1/1] (short) %v1066, 128
    %v1068 = vpop.trf.xlu0
    %v1069 = vpop.trf.xlu0
    %v1070 = vpop.trf.xlu0
    %v1071 = vpop.trf.xlu0
    %v1072 = vpop.trf.xlu0
    %v1073 = vpop.trf.xlu0
    %v1074 = vpop.trf.xlu0
    %v1075 = vpop.trf.xlu0
    %v1076 = vpop.trf.xlu0
    %v1077 = vpop.trf.xlu0
    %v1078 = vpop.trf.xlu0
    %v1079 = vpop.trf.xlu0
    %v1080 = vpop.trf.xlu0
    %v1081 = vpop.trf.xlu0
    %v1082 = vpop.trf.xlu0
    %v1083 = vpop.trf.xlu0
    %1084 = vst [vmem:[#allocation7] sm:$0xff] %v1068
    %v1085 = vld [vmem:[#allocation14] sm:$0xff]
    %1086 = vxpose.xlu0.b32.start.end [1/1] (short) %v1085, 128
    %v1087 = vpop.trf.xlu0
    %v1088 = vpop.trf.xlu0
    %v1089 = vpop.trf.xlu0
    %v1090 = vpop.trf.xlu0
    %v1091 = vpop.trf.xlu0
    %v1092 = vpop.trf.xlu0
    %v1093 = vpop.trf.xlu0
    %v1094 = vpop.trf.xlu0
    %v1095 = vpop.trf.xlu0
    %v1096 = vpop.trf.xlu0
    %v1097 = vpop.trf.xlu0
    %v1098 = vpop.trf.xlu0
    %v1099 = vpop.trf.xlu0
    %v1100 = vpop.trf.xlu0
    %v1101 = vpop.trf.xlu0
    %v1102 = vpop.trf.xlu0
    %1103 = vst [vmem:[#allocation10] sm:$0xff] %v1087
    %s1105 = sshllo.u32 0, 2
    %v1107 = vld [vmem:[#allocation7] sm:%s1105]
    %s1108 = sshllo.u32 0, 2
    %1109 = vst [vmem:[#allocation8] sm:%s1108] %v1107
    %s1111 = sshllo.u32 0, 2
    %v1113 = vld [vmem:[#allocation10] sm:%s1111]
    %s1114 = sshllo.u32 0, 2
    %1115 = vst [vmem:[#allocation11] sm:%s1114] %v1113
    %s1117 = ssub.s32 32, 32
    %1118 = vsyncadd [#allocation9], %s1117
    %s1120 = sshll.u32 [#allocation8], 4
    %s1121 = int_to_ptr.vmem [resolvable:$true] %s1120
    %1123 = dma.vmem_to_hbm [thread:$0]  %s1121, 32, %s1, [#allocation9]
    // Predicated region
    $region40: #{custom-call} parent=1 // pred_check
      _
    $region41: #{custom-call} parent=1 // pred_check_branch
      %1125 = sbr.rel (0) target = $region43
    $region42: #{custom-call} parent=1 // pred_region
      // Predicated region
      $region44: #{custom-call} parent=42 // pred_check
        _
      $region45: #{custom-call} parent=42 // pred_check_branch
        %1127 = sbr.rel target = $region47
      $region46: #{custom-call} parent=42 // pred_region
        // Predicated region
        $region59: #{custom-call} parent=46 // pred_check
          _
        $region60: #{custom-call} parent=46 // pred_check_branch
          %1142 = sbr.rel (0) target = $region62
        $region61: #{custom-call} parent=46 // pred_region
          loop: start=0, step=1, limit=1
          $region63: #{custom-call} parent=61 // loop_pre_header
            _
          $region64: #{custom-call} parent=61 // loop_header
            %s1145 = sphi 0, %s1149
            %p1146 = scmp.ge.s32.totalorder %s1145, 1
            %s1150 = sphi [#allocation11], [#allocation11]
            %s1151 = sphi %s2, %s2
          $region65: #{custom-call} parent=61 // loop_header_branch
            %1148 = sbr.rel (%p1146) target = $region69
          $region66: #{custom-call} parent=61 // loop_body
            %v1152 = vld [vmem:[%s1150] sm:$0x3]
            %1153 = vst [vmem:[%s1151] sm:$0x3] %v1152
          $region67: #{custom-call} parent=61 // loop_footer
            %s1149 = sadd.s32 1, %s1145
          $region68: #{custom-call} parent=61 // loop_footer_branch
            %1144 = sbr.rel target = $region64
          $region69: #{custom-call} parent=61 // loop_exit
            _
        $region62: #{custom-call} parent=46 // pred_fallthru
          _
      $region47: #{custom-call} parent=42 // pred_fallthru
        _
      // Predicated region
      $region48: #{custom-call} parent=42 // pred_check
        _
      $region49: #{custom-call} parent=42 // pred_check_branch
        %1129 = sbr.rel (0) target = $region51
      $region50: #{custom-call} parent=42 // pred_region
        loop: start=0, step=1, limit=1
        $region52: #{custom-call} parent=50 // loop_pre_header
          _
        $region53: #{custom-call} parent=50 // loop_header
          %s1132 = sphi 0, %s1136
          %p1133 = scmp.ge.s32.totalorder %s1132, 1
          %s1137 = sphi [#allocation11], [#allocation11]
          %s1138 = sphi %s2, %s2
        $region54: #{custom-call} parent=50 // loop_header_branch
          %1135 = sbr.rel (%p1133) target = $region58
        $region55: #{custom-call} parent=50 // loop_body
          %v1139 = vld [vmem:[%s1137] sm:$0x3]
          %1140 = vst [vmem:[%s1138] sm:$0x3] %v1139
        $region56: #{custom-call} parent=50 // loop_footer
          %s1136 = sadd.s32 1, %s1132
        $region57: #{custom-call} parent=50 // loop_footer_branch
          %1131 = sbr.rel target = $region53
        $region58: #{custom-call} parent=50 // loop_exit
          _
      $region51: #{custom-call} parent=42 // pred_fallthru
        _
    $region43: #{custom-call} parent=1 // pred_fallthru
      _
    %1154 = vnop
    %1155 = dma.done [#allocation9], 32
    %1156 = vsyncpa [#allocation9], 1

// kernel: entity_rcnn_forward.4
$region0: #{entity_rcnn_forward.4}
  #allocation0 [shape = 'u32[]', space=smem, size = 0x4, offset = 0x4, fixed_abs, tag = 'smem constant byte address 0x4 - core index']
  #allocation1 [shape = 'u32[144,128]{1,0:T(1,128)}', space=vmem, size = 0x12000, scoped, tag = 'internal scratch']
  %s0 = inlined_call_operand.vmem [shape: f32[32,512], index: 0, kind: input, shape index: {}]
  %s1 = inlined_call_operand.vmem [shape: f32[512,896], index: 1, kind: input, shape index: {}]
  %s2 = inlined_call_operand.vmem [shape: f32[32,896], index: 2, kind: output, shape index: {}]
  %s3 = sld [smem:[#allocation0]]
  $region113: #{entity_rcnn_forward.4} parent=0
    _
  %s5 = ssub.s32 1, %s3
  %s6 = scalar_select 0, %s5, %s3
  $region1: #{entity_rcnn_forward.4} parent=0
    #allocation2 [shape = 'u8[524288]{0}', space=vmem, size = 0x80000, scoped, tag = 'input window, operand 1']
    #allocation3 [shape = 'u8[32768]{0}', space=vmem, size = 0x8000, scoped, tag = 'output window, operand 0']
    loop: start=0, step=1, limit=9
    $region2: #{entity_rcnn_forward.4} parent=1 // loop_pre_header
      _
    $region3: #{entity_rcnn_forward.4} parent=1 // loop_header
      %s8 = sphi 0, %s12
      %p9 = scmp.ge.s32.totalorder %s8, 9
      %s16 = sphi 0, %s16
      %s18 = sphi 0, %s16
      %s19 = sphi 0, %s18
      %s33 = sphi 0, %s19
      %s39 = sphi 0, %s41
      %s42 = sphi 0, %s39
      %s43 = sphi 0, %s42
      %s59 = sphi 0, %s43
      %s65 = sphi 0, %s67
      %s68 = sphi 0, %s65
      %s69 = sphi 0, %s68
      %s85 = sphi 0, %s69
    $region4: #{entity_rcnn_forward.4} parent=1 // loop_header_branch
      %11 = sbr.rel (%p9) target = $region8
    $region5: #{entity_rcnn_forward.4} parent=1 // loop_body
      %s13 = ssub.s32 %s8, 1
      %s14 = ssub.s32 %s8, 2
      %s15 = sadd.s32 %s8, 1
      %s17 = sadd.s32 %s16, 1
      %p20 = scmp.eq.s32.totalorder %s8, 6
      %p21 = scmp.ne.s32.totalorder %s16, %s18
      %p22 = scmp.eq.s32.totalorder %s8, 0
      %p23 = por %p21, %p22
      %p24 = scmp.ne.s32.totalorder %s16, %s18
      %p25 = scmp.eq.s32.totalorder %s13, 6
      %p26 = por %p24, %p25
      %p27 = scmp.ne.s32.totalorder %s18, %s19
      %p28 = scmp.eq.s32.totalorder %s13, 0
      %p29 = por %p27, %p28
      %p30 = scmp.ne.s32.totalorder %s18, %s19
      %p31 = scmp.eq.s32.totalorder %s14, 6
      %p32 = por %p30, %p31
      %p34 = scmp.ne.s32.totalorder %s19, %s33
      %p35 = scmp.eq.s32.totalorder %s14, 0
      %p36 = por %p34, %p35
      %s37 = ssub.s32 %s8, %s15
      %p38 = scmp.eq.s32.totalorder %s37, 0
      %s40 = sadd.s32 %s39, 1
      %s41 = scalar_select %p38, %s39, %s40
      %p44 = pneg %p38
      %p45 = scmp.eq.s32.totalorder %s8, 6
      %p46 = por %p44, %p45
      %p47 = scmp.ne.s32.totalorder %s39, %s42
      %p48 = scmp.eq.s32.totalorder %s8, 0
      %p49 = por %p47, %p48
      %p50 = scmp.ne.s32.totalorder %s39, %s42
      %p51 = scmp.eq.s32.totalorder %s13, 6
      %p52 = por %p50, %p51
      %p53 = scmp.ne.s32.totalorder %s42, %s43
      %p54 = scmp.eq.s32.totalorder %s13, 0
      %p55 = por %p53, %p54
      %p56 = scmp.ne.s32.totalorder %s42, %s43
      %p57 = scmp.eq.s32.totalorder %s14, 6
      %p58 = por %p56, %p57
      %p60 = scmp.ne.s32.totalorder %s43, %s59
      %p61 = scmp.eq.s32.totalorder %s14, 0
      %p62 = por %p60, %p61
      %s63 = ssub.s32 %s8, %s15
      %p64 = scmp.eq.s32.totalorder %s63, 0
      %s66 = sadd.s32 %s65, 1
      %s67 = scalar_select %p64, %s65, %s66
      %p70 = pneg %p64
      %p71 = scmp.eq.s32.totalorder %s8, 6
      %p72 = por %p70, %p71
      %p73 = scmp.ne.s32.totalorder %s65, %s68
      %p74 = scmp.eq.s32.totalorder %s8, 0
      %p75 = por %p73, %p74
      %p76 = scmp.ne.s32.totalorder %s65, %s68
      %p77 = scmp.eq.s32.totalorder %s13, 6
      %p78 = por %p76, %p77
      %p79 = scmp.ne.s32.totalorder %s68, %s69
      %p80 = scmp.eq.s32.totalorder %s13, 0
      %p81 = por %p79, %p80
      %p82 = scmp.ne.s32.totalorder %s68, %s69
      %p83 = scmp.eq.s32.totalorder %s14, 6
      %p84 = por %p82, %p83
      %p86 = scmp.ne.s32.totalorder %s69, %s85
      %p87 = scmp.eq.s32.totalorder %s14, 0
      %p88 = por %p86, %p87
      %p89 = scmp.le.s32.totalorder 1, %s8
      %p90 = scmp.lt.s32.totalorder %s8, 8
      %p91 = pnand %p89, %p90
      %p92 = pneg %p91
      // Predicated region
      $region9: #{entity_rcnn_forward.4} parent=5 // pred_check
        _
      $region10: #{entity_rcnn_forward.4} parent=5 // pred_check_branch
        %94 = sbr.rel (%p91) target = $region12
      $region11: #{entity_rcnn_forward.4} parent=5 // pred_region
        %s95 = ssub.s32 %s8, 1
        // Predicated region
        $region13: #{entity_rcnn_forward.4} parent=11 // pred_check
          %p96 = pneg %p29
        $region14: #{entity_rcnn_forward.4} parent=11 // pred_check_branch
          %98 = sbr.rel (%p96) target = $region16
        $region15: #{entity_rcnn_forward.4} parent=11 // pred_region
          _
        $region16: #{entity_rcnn_forward.4} parent=11 // pred_fallthru
          _
      $region12: #{entity_rcnn_forward.4} parent=5 // pred_fallthru
        _
      %p99 = scmp.lt.s32.totalorder %s8, 7
      // Predicated region
      $region17: #{entity_rcnn_forward.4} parent=5 // pred_check
        %p100 = pneg %p99
      $region18: #{entity_rcnn_forward.4} parent=5 // pred_check_branch
        %102 = sbr.rel (%p100) target = $region20
      $region19: #{entity_rcnn_forward.4} parent=5 // pred_region
        // Predicated region
        $region21: #{entity_rcnn_forward.4} parent=19 // pred_check
          %p103 = pneg %p49
        $region22: #{entity_rcnn_forward.4} parent=19 // pred_check_branch
          %105 = sbr.rel (%p103) target = $region24
        $region23: #{entity_rcnn_forward.4} parent=19 // pred_region
          %s106 = sand.u32 %s39, 1
          %s107 = sand.u32 %s39, 1
          %s108 = smul.addr %s107, 512
          %s109 = scalar_lea.vmem [#allocation2], %s108
          %s110 = smul.addr %s8, 8
          %s111 = scalar_lea.vmem %s1, %s110
          // Predicated region
          $region25: #{entity_rcnn_forward.4} parent=23 // pred_check
            _
          $region26: #{entity_rcnn_forward.4} parent=23 // pred_check_branch
            %113 = sbr.rel (0) target = $region28
          $region27: #{entity_rcnn_forward.4} parent=23 // pred_region
            // Predicated region
            $region29: #{entity_rcnn_forward.4} parent=27 // pred_check
              _
            $region30: #{entity_rcnn_forward.4} parent=27 // pred_check_branch
              %115 = sbr.rel (0) target = $region32
            $region31: #{entity_rcnn_forward.4} parent=27 // pred_region
              // Predicated region
              $region44: #{entity_rcnn_forward.4} parent=31 // pred_check
                _
              $region45: #{entity_rcnn_forward.4} parent=31 // pred_check_branch
                %256 = sbr.rel (0) target = $region47
              $region46: #{entity_rcnn_forward.4} parent=31 // pred_region
                loop: start=0, step=1, limit=1
                $region48: #{entity_rcnn_forward.4} parent=46 // loop_pre_header
                  _
                $region49: #{entity_rcnn_forward.4} parent=46 // loop_header
                  %s258 = sphi 0, %s262
                  %p259 = scmp.ge.s32.totalorder %s258, 1
                  %s263 = sphi %s111, %s111
                  %s264 = sphi %s109, %s109
                $region50: #{entity_rcnn_forward.4} parent=46 // loop_header_branch
                  %261 = sbr.rel (%p259) target = $region54
                $region51: #{entity_rcnn_forward.4} parent=46 // loop_body
                  %v265 = vld [vmem:[%s263] sm:$0xff]
                  %266 = vst [vmem:[%s264] sm:$0xff] %v265
                  %v267 = vld [vmem:[%s263 + $0x38] sm:$0xff]
                  %268 = vst [vmem:[%s264 + $0x8] sm:$0xff] %v267
                  %v269 = vld [vmem:[%s263 + $0x70] sm:$0xff]
                  %270 = vst [vmem:[%s264 + $0x10] sm:$0xff] %v269
                  %v271 = vld [vmem:[%s263 + $0xa8] sm:$0xff]
                  %272 = vst [vmem:[%s264 + $0x18] sm:$0xff] %v271
                  %v273 = vld [vmem:[%s263 + $0xe0] sm:$0xff]
                  %274 = vst [vmem:[%s264 + $0x20] sm:$0xff] %v273
                  %v275 = vld [vmem:[%s263 + $0x118] sm:$0xff]
                  %276 = vst [vmem:[%s264 + $0x28] sm:$0xff] %v275
                  %v277 = vld [vmem:[%s263 + $0x150] sm:$0xff]
                  %278 = vst [vmem:[%s264 + $0x30] sm:$0xff] %v277
                  %v279 = vld [vmem:[%s263 + $0x188] sm:$0xff]
                  %280 = vst [vmem:[%s264 + $0x38] sm:$0xff] %v279
                  %v281 = vld [vmem:[%s263 + $0x1c0] sm:$0xff]
                  %282 = vst [vmem:[%s264 + $0x40] sm:$0xff] %v281
                  %v283 = vld [vmem:[%s263 + $0x1f8] sm:$0xff]
                  %284 = vst [vmem:[%s264 + $0x48] sm:$0xff] %v283
                  %v285 = vld [vmem:[%s263 + $0x230] sm:$0xff]
                  %286 = vst [vmem:[%s264 + $0x50] sm:$0xff] %v285
                  %v287 = vld [vmem:[%s263 + $0x268] sm:$0xff]
                  %288 = vst [vmem:[%s264 + $0x58] sm:$0xff] %v287
                  %v289 = vld [vmem:[%s263 + $0x2a0] sm:$0xff]
                  %290 = vst [vmem:[%s264 + $0x60] sm:$0xff] %v289
                  %v291 = vld [vmem:[%s263 + $0x2d8] sm:$0xff]
                  %292 = vst [vmem:[%s264 + $0x68] sm:$0xff] %v291
                  %v293 = vld [vmem:[%s263 + $0x310] sm:$0xff]
                  %294 = vst [vmem:[%s264 + $0x70] sm:$0xff] %v293
                  %v295 = vld [vmem:[%s263 + $0x348] sm:$0xff]
                  %296 = vst [vmem:[%s264 + $0x78] sm:$0xff] %v295
                  %v297 = vld [vmem:[%s263 + $0x380] sm:$0xff]
                  %298 = vst [vmem:[%s264 + $0x80] sm:$0xff] %v297
                  %v299 = vld [vmem:[%s263 + $0x3b8] sm:$0xff]
                  %300 = vst [vmem:[%s264 + $0x88] sm:$0xff] %v299
                  %v301 = vld [vmem:[%s263 + $0x3f0] sm:$0xff]
                  %302 = vst [vmem:[%s264 + $0x90] sm:$0xff] %v301
                  %v303 = vld [vmem:[%s263 + $0x428] sm:$0xff]
                  %304 = vst [vmem:[%s264 + $0x98] sm:$0xff] %v303
                  %v305 = vld [vmem:[%s263 + $0x460] sm:$0xff]
                  %306 = vst [vmem:[%s264 + $0xa0] sm:$0xff] %v305
                  %v307 = vld [vmem:[%s263 + $0x498] sm:$0xff]
                  %308 = vst [vmem:[%s264 + $0xa8] sm:$0xff] %v307
                  %v309 = vld [vmem:[%s263 + $0x4d0] sm:$0xff]
                  %310 = vst [vmem:[%s264 + $0xb0] sm:$0xff] %v309
                  %v311 = vld [vmem:[%s263 + $0x508] sm:$0xff]
                  %312 = vst [vmem:[%s264 + $0xb8] sm:$0xff] %v311
                  %v313 = vld [vmem:[%s263 + $0x540] sm:$0xff]
                  %314 = vst [vmem:[%s264 + $0xc0] sm:$0xff] %v313
                  %v315 = vld [vmem:[%s263 + $0x578] sm:$0xff]
                  %316 = vst [vmem:[%s264 + $0xc8] sm:$0xff] %v315
                  %v317 = vld [vmem:[%s263 + $0x5b0] sm:$0xff]
                  %318 = vst [vmem:[%s264 + $0xd0] sm:$0xff] %v317
                  %v319 = vld [vmem:[%s263 + $0x5e8] sm:$0xff]
                  %320 = vst [vmem:[%s264 + $0xd8] sm:$0xff] %v319
                  %v321 = vld [vmem:[%s263 + $0x620] sm:$0xff]
                  %322 = vst [vmem:[%s264 + $0xe0] sm:$0xff] %v321
                  %v323 = vld [vmem:[%s263 + $0x658] sm:$0xff]
                  %324 = vst [vmem:[%s264 + $0xe8] sm:$0xff] %v323
                  %v325 = vld [vmem:[%s263 + $0x690] sm:$0xff]
                  %326 = vst [vmem:[%s264 + $0xf0] sm:$0xff] %v325
                  %v327 = vld [vmem:[%s263 + $0x6c8] sm:$0xff]
                  %328 = vst [vmem:[%s264 + $0xf8] sm:$0xff] %v327
                  %v329 = vld [vmem:[%s263 + $0x700] sm:$0xff]
                  %330 = vst [vmem:[%s264 + $0x100] sm:$0xff] %v329
                  %v331 = vld [vmem:[%s263 + $0x738] sm:$0xff]
                  %332 = vst [vmem:[%s264 + $0x108] sm:$0xff] %v331
                  %v333 = vld [vmem:[%s263 + $0x770] sm:$0xff]
                  %334 = vst [vmem:[%s264 + $0x110] sm:$0xff] %v333
                  %v335 = vld [vmem:[%s263 + $0x7a8] sm:$0xff]
                  %336 = vst [vmem:[%s264 + $0x118] sm:$0xff] %v335
                  %v337 = vld [vmem:[%s263 + $0x7e0] sm:$0xff]
                  %338 = vst [vmem:[%s264 + $0x120] sm:$0xff] %v337
                  %v339 = vld [vmem:[%s263 + $0x818] sm:$0xff]
                  %340 = vst [vmem:[%s264 + $0x128] sm:$0xff] %v339
                  %v341 = vld [vmem:[%s263 + $0x850] sm:$0xff]
                  %342 = vst [vmem:[%s264 + $0x130] sm:$0xff] %v341
                  %v343 = vld [vmem:[%s263 + $0x888] sm:$0xff]
                  %344 = vst [vmem:[%s264 + $0x138] sm:$0xff] %v343
                  %v345 = vld [vmem:[%s263 + $0x8c0] sm:$0xff]
                  %346 = vst [vmem:[%s264 + $0x140] sm:$0xff] %v345
                  %v347 = vld [vmem:[%s263 + $0x8f8] sm:$0xff]
                  %348 = vst [vmem:[%s264 + $0x148] sm:$0xff] %v347
                  %v349 = vld [vmem:[%s263 + $0x930] sm:$0xff]
                  %350 = vst [vmem:[%s264 + $0x150] sm:$0xff] %v349
                  %v351 = vld [vmem:[%s263 + $0x968] sm:$0xff]
                  %352 = vst [vmem:[%s264 + $0x158] sm:$0xff] %v351
                  %v353 = vld [vmem:[%s263 + $0x9a0] sm:$0xff]
                  %354 = vst [vmem:[%s264 + $0x160] sm:$0xff] %v353
                  %v355 = vld [vmem:[%s263 + $0x9d8] sm:$0xff]
                  %356 = vst [vmem:[%s264 + $0x168] sm:$0xff] %v355
                  %v357 = vld [vmem:[%s263 + $0xa10] sm:$0xff]
                  %358 = vst [vmem:[%s264 + $0x170] sm:$0xff] %v357
                  %v359 = vld [vmem:[%s263 + $0xa48] sm:$0xff]
                  %360 = vst [vmem:[%s264 + $0x178] sm:$0xff] %v359
                  %v361 = vld [vmem:[%s263 + $0xa80] sm:$0xff]
                  %362 = vst [vmem:[%s264 + $0x180] sm:$0xff] %v361
                  %v363 = vld [vmem:[%s263 + $0xab8] sm:$0xff]
                  %364 = vst [vmem:[%s264 + $0x188] sm:$0xff] %v363
                  %v365 = vld [vmem:[%s263 + $0xaf0] sm:$0xff]
                  %366 = vst [vmem:[%s264 + $0x190] sm:$0xff] %v365
                  %v367 = vld [vmem:[%s263 + $0xb28] sm:$0xff]
                  %368 = vst [vmem:[%s264 + $0x198] sm:$0xff] %v367
                  %v369 = vld [vmem:[%s263 + $0xb60] sm:$0xff]
                  %370 = vst [vmem:[%s264 + $0x1a0] sm:$0xff] %v369
                  %v371 = vld [vmem:[%s263 + $0xb98] sm:$0xff]
                  %372 = vst [vmem:[%s264 + $0x1a8] sm:$0xff] %v371
                  %v373 = vld [vmem:[%s263 + $0xbd0] sm:$0xff]
                  %374 = vst [vmem:[%s264 + $0x1b0] sm:$0xff] %v373
                  %v375 = vld [vmem:[%s263 + $0xc08] sm:$0xff]
                  %376 = vst [vmem:[%s264 + $0x1b8] sm:$0xff] %v375
                  %v377 = vld [vmem:[%s263 + $0xc40] sm:$0xff]
                  %378 = vst [vmem:[%s264 + $0x1c0] sm:$0xff] %v377
                  %v379 = vld [vmem:[%s263 + $0xc78] sm:$0xff]
                  %380 = vst [vmem:[%s264 + $0x1c8] sm:$0xff] %v379
                  %v381 = vld [vmem:[%s263 + $0xcb0] sm:$0xff]
                  %382 = vst [vmem:[%s264 + $0x1d0] sm:$0xff] %v381
                  %v383 = vld [vmem:[%s263 + $0xce8] sm:$0xff]
                  %384 = vst [vmem:[%s264 + $0x1d8] sm:$0xff] %v383
                  %v385 = vld [vmem:[%s263 + $0xd20] sm:$0xff]
                  %386 = vst [vmem:[%s264 + $0x1e0] sm:$0xff] %v385
                  %v387 = vld [vmem:[%s263 + $0xd58] sm:$0xff]
                  %388 = vst [vmem:[%s264 + $0x1e8] sm:$0xff] %v387
                  %v389 = vld [vmem:[%s263 + $0xd90] sm:$0xff]
                  %390 = vst [vmem:[%s264 + $0x1f0] sm:$0xff] %v389
                  %v391 = vld [vmem:[%s263 + $0xdc8] sm:$0xff]
                  %392 = vst [vmem:[%s264 + $0x1f8] sm:$0xff] %v391
                $region52: #{entity_rcnn_forward.4} parent=46 // loop_footer
                  %s262 = sadd.s32 1, %s258
                $region53: #{entity_rcnn_forward.4} parent=46 // loop_footer_branch
                  %257 = sbr.rel target = $region49
                $region54: #{entity_rcnn_forward.4} parent=46 // loop_exit
                  _
              $region47: #{entity_rcnn_forward.4} parent=31 // pred_fallthru
                _
              // Predicated region
              $region55: #{entity_rcnn_forward.4} parent=31 // pred_check
                _
              $region56: #{entity_rcnn_forward.4} parent=31 // pred_check_branch
                %394 = sbr.rel target = $region58
              $region57: #{entity_rcnn_forward.4} parent=31 // pred_region
                _
              $region58: #{entity_rcnn_forward.4} parent=31 // pred_fallthru
                _
            $region32: #{entity_rcnn_forward.4} parent=27 // pred_fallthru
              _
            // Predicated region
            $region33: #{entity_rcnn_forward.4} parent=27 // pred_check
              _
            $region34: #{entity_rcnn_forward.4} parent=27 // pred_check_branch
              %117 = sbr.rel target = $region36
            $region35: #{entity_rcnn_forward.4} parent=27 // pred_region
              loop: start=0, step=1, limit=1
              $region37: #{entity_rcnn_forward.4} parent=35 // loop_pre_header
                _
              $region38: #{entity_rcnn_forward.4} parent=35 // loop_header
                %s120 = sphi 0, %s124
                %p121 = scmp.ge.s32.totalorder %s120, 1
                %s125 = sphi %s111, %s111
                %s126 = sphi %s109, %s109
              $region39: #{entity_rcnn_forward.4} parent=35 // loop_header_branch
                %123 = sbr.rel (%p121) target = $region43
              $region40: #{entity_rcnn_forward.4} parent=35 // loop_body
                %v127 = vld [vmem:[%s125] sm:$0xff]
                %128 = vst [vmem:[%s126] sm:$0xff] %v127
                %v129 = vld [vmem:[%s125 + $0x38] sm:$0xff]
                %130 = vst [vmem:[%s126 + $0x8] sm:$0xff] %v129
                %v131 = vld [vmem:[%s125 + $0x70] sm:$0xff]
                %132 = vst [vmem:[%s126 + $0x10] sm:$0xff] %v131
                %v133 = vld [vmem:[%s125 + $0xa8] sm:$0xff]
                %134 = vst [vmem:[%s126 + $0x18] sm:$0xff] %v133
                %v135 = vld [vmem:[%s125 + $0xe0] sm:$0xff]
                %136 = vst [vmem:[%s126 + $0x20] sm:$0xff] %v135
                %v137 = vld [vmem:[%s125 + $0x118] sm:$0xff]
                %138 = vst [vmem:[%s126 + $0x28] sm:$0xff] %v137
                %v139 = vld [vmem:[%s125 + $0x150] sm:$0xff]
                %140 = vst [vmem:[%s126 + $0x30] sm:$0xff] %v139
                %v141 = vld [vmem:[%s125 + $0x188] sm:$0xff]
                %142 = vst [vmem:[%s126 + $0x38] sm:$0xff] %v141
                %v143 = vld [vmem:[%s125 + $0x1c0] sm:$0xff]
                %144 = vst [vmem:[%s126 + $0x40] sm:$0xff] %v143
                %v145 = vld [vmem:[%s125 + $0x1f8] sm:$0xff]
                %146 = vst [vmem:[%s126 + $0x48] sm:$0xff] %v145
                %v147 = vld [vmem:[%s125 + $0x230] sm:$0xff]
                %148 = vst [vmem:[%s126 + $0x50] sm:$0xff] %v147
                %v149 = vld [vmem:[%s125 + $0x268] sm:$0xff]
                %150 = vst [vmem:[%s126 + $0x58] sm:$0xff] %v149
                %v151 = vld [vmem:[%s125 + $0x2a0] sm:$0xff]
                %152 = vst [vmem:[%s126 + $0x60] sm:$0xff] %v151
                %v153 = vld [vmem:[%s125 + $0x2d8] sm:$0xff]
                %154 = vst [vmem:[%s126 + $0x68] sm:$0xff] %v153
                %v155 = vld [vmem:[%s125 + $0x310] sm:$0xff]
                %156 = vst [vmem:[%s126 + $0x70] sm:$0xff] %v155
                %v157 = vld [vmem:[%s125 + $0x348] sm:$0xff]
                %158 = vst [vmem:[%s126 + $0x78] sm:$0xff] %v157
                %v159 = vld [vmem:[%s125 + $0x380] sm:$0xff]
                %160 = vst [vmem:[%s126 + $0x80] sm:$0xff] %v159
                %v161 = vld [vmem:[%s125 + $0x3b8] sm:$0xff]
                %162 = vst [vmem:[%s126 + $0x88] sm:$0xff] %v161
                %v163 = vld [vmem:[%s125 + $0x3f0] sm:$0xff]
                %164 = vst [vmem:[%s126 + $0x90] sm:$0xff] %v163
                %v165 = vld [vmem:[%s125 + $0x428] sm:$0xff]
                %166 = vst [vmem:[%s126 + $0x98] sm:$0xff] %v165
                %v167 = vld [vmem:[%s125 + $0x460] sm:$0xff]
                %168 = vst [vmem:[%s126 + $0xa0] sm:$0xff] %v167
                %v169 = vld [vmem:[%s125 + $0x498] sm:$0xff]
                %170 = vst [vmem:[%s126 + $0xa8] sm:$0xff] %v169
                %v171 = vld [vmem:[%s125 + $0x4d0] sm:$0xff]
                %172 = vst [vmem:[%s126 + $0xb0] sm:$0xff] %v171
                %v173 = vld [vmem:[%s125 + $0x508] sm:$0xff]
                %174 = vst [vmem:[%s126 + $0xb8] sm:$0xff] %v173
                %v175 = vld [vmem:[%s125 + $0x540] sm:$0xff]
                %176 = vst [vmem:[%s126 + $0xc0] sm:$0xff] %v175
                %v177 = vld [vmem:[%s125 + $0x578] sm:$0xff]
                %178 = vst [vmem:[%s126 + $0xc8] sm:$0xff] %v177
                %v179 = vld [vmem:[%s125 + $0x5b0] sm:$0xff]
                %180 = vst [vmem:[%s126 + $0xd0] sm:$0xff] %v179
                %v181 = vld [vmem:[%s125 + $0x5e8] sm:$0xff]
                %182 = vst [vmem:[%s126 + $0xd8] sm:$0xff] %v181
                %v183 = vld [vmem:[%s125 + $0x620] sm:$0xff]
                %184 = vst [vmem:[%s126 + $0xe0] sm:$0xff] %v183
                %v185 = vld [vmem:[%s125 + $0x658] sm:$0xff]
                %186 = vst [vmem:[%s126 + $0xe8] sm:$0xff] %v185
                %v187 = vld [vmem:[%s125 + $0x690] sm:$0xff]
                %188 = vst [vmem:[%s126 + $0xf0] sm:$0xff] %v187
                %v189 = vld [vmem:[%s125 + $0x6c8] sm:$0xff]
                %190 = vst [vmem:[%s126 + $0xf8] sm:$0xff] %v189
                %v191 = vld [vmem:[%s125 + $0x700] sm:$0xff]
                %192 = vst [vmem:[%s126 + $0x100] sm:$0xff] %v191
                %v193 = vld [vmem:[%s125 + $0x738] sm:$0xff]
                %194 = vst [vmem:[%s126 + $0x108] sm:$0xff] %v193
                %v195 = vld [vmem:[%s125 + $0x770] sm:$0xff]
                %196 = vst [vmem:[%s126 + $0x110] sm:$0xff] %v195
                %v197 = vld [vmem:[%s125 + $0x7a8] sm:$0xff]
                %198 = vst [vmem:[%s126 + $0x118] sm:$0xff] %v197
                %v199 = vld [vmem:[%s125 + $0x7e0] sm:$0xff]
                %200 = vst [vmem:[%s126 + $0x120] sm:$0xff] %v199
                %v201 = vld [vmem:[%s125 + $0x818] sm:$0xff]
                %202 = vst [vmem:[%s126 + $0x128] sm:$0xff] %v201
                %v203 = vld [vmem:[%s125 + $0x850] sm:$0xff]
                %204 = vst [vmem:[%s126 + $0x130] sm:$0xff] %v203
                %v205 = vld [vmem:[%s125 + $0x888] sm:$0xff]
                %206 = vst [vmem:[%s126 + $0x138] sm:$0xff] %v205
                %v207 = vld [vmem:[%s125 + $0x8c0] sm:$0xff]
                %208 = vst [vmem:[%s126 + $0x140] sm:$0xff] %v207
                %v209 = vld [vmem:[%s125 + $0x8f8] sm:$0xff]
                %210 = vst [vmem:[%s126 + $0x148] sm:$0xff] %v209
                %v211 = vld [vmem:[%s125 + $0x930] sm:$0xff]
                %212 = vst [vmem:[%s126 + $0x150] sm:$0xff] %v211
                %v213 = vld [vmem:[%s125 + $0x968] sm:$0xff]
                %214 = vst [vmem:[%s126 + $0x158] sm:$0xff] %v213
                %v215 = vld [vmem:[%s125 + $0x9a0] sm:$0xff]
                %216 = vst [vmem:[%s126 + $0x160] sm:$0xff] %v215
                %v217 = vld [vmem:[%s125 + $0x9d8] sm:$0xff]
                %218 = vst [vmem:[%s126 + $0x168] sm:$0xff] %v217
                %v219 = vld [vmem:[%s125 + $0xa10] sm:$0xff]
                %220 = vst [vmem:[%s126 + $0x170] sm:$0xff] %v219
                %v221 = vld [vmem:[%s125 + $0xa48] sm:$0xff]
                %222 = vst [vmem:[%s126 + $0x178] sm:$0xff] %v221
                %v223 = vld [vmem:[%s125 + $0xa80] sm:$0xff]
                %224 = vst [vmem:[%s126 + $0x180] sm:$0xff] %v223
                %v225 = vld [vmem:[%s125 + $0xab8] sm:$0xff]
                %226 = vst [vmem:[%s126 + $0x188] sm:$0xff] %v225
                %v227 = vld [vmem:[%s125 + $0xaf0] sm:$0xff]
                %228 = vst [vmem:[%s126 + $0x190] sm:$0xff] %v227
                %v229 = vld [vmem:[%s125 + $0xb28] sm:$0xff]
                %230 = vst [vmem:[%s126 + $0x198] sm:$0xff] %v229
                %v231 = vld [vmem:[%s125 + $0xb60] sm:$0xff]
                %232 = vst [vmem:[%s126 + $0x1a0] sm:$0xff] %v231
                %v233 = vld [vmem:[%s125 + $0xb98] sm:$0xff]
                %234 = vst [vmem:[%s126 + $0x1a8] sm:$0xff] %v233
                %v235 = vld [vmem:[%s125 + $0xbd0] sm:$0xff]
                %236 = vst [vmem:[%s126 + $0x1b0] sm:$0xff] %v235
                %v237 = vld [vmem:[%s125 + $0xc08] sm:$0xff]
                %238 = vst [vmem:[%s126 + $0x1b8] sm:$0xff] %v237
                %v239 = vld [vmem:[%s125 + $0xc40] sm:$0xff]
                %240 = vst [vmem:[%s126 + $0x1c0] sm:$0xff] %v239
                %v241 = vld [vmem:[%s125 + $0xc78] sm:$0xff]
                %242 = vst [vmem:[%s126 + $0x1c8] sm:$0xff] %v241
                %v243 = vld [vmem:[%s125 + $0xcb0] sm:$0xff]
                %244 = vst [vmem:[%s126 + $0x1d0] sm:$0xff] %v243
                %v245 = vld [vmem:[%s125 + $0xce8] sm:$0xff]
                %246 = vst [vmem:[%s126 + $0x1d8] sm:$0xff] %v245
                %v247 = vld [vmem:[%s125 + $0xd20] sm:$0xff]
                %248 = vst [vmem:[%s126 + $0x1e0] sm:$0xff] %v247
                %v249 = vld [vmem:[%s125 + $0xd58] sm:$0xff]
                %250 = vst [vmem:[%s126 + $0x1e8] sm:$0xff] %v249
                %v251 = vld [vmem:[%s125 + $0xd90] sm:$0xff]
                %252 = vst [vmem:[%s126 + $0x1f0] sm:$0xff] %v251
                %v253 = vld [vmem:[%s125 + $0xdc8] sm:$0xff]
                %254 = vst [vmem:[%s126 + $0x1f8] sm:$0xff] %v253
              $region41: #{entity_rcnn_forward.4} parent=35 // loop_footer
                %s124 = sadd.s32 1, %s120
              $region42: #{entity_rcnn_forward.4} parent=35 // loop_footer_branch
                %119 = sbr.rel target = $region38
              $region43: #{entity_rcnn_forward.4} parent=35 // loop_exit
                _
            $region36: #{entity_rcnn_forward.4} parent=27 // pred_fallthru
              _
          $region28: #{entity_rcnn_forward.4} parent=23 // pred_fallthru
            _
          %395 = vnop
        $region24: #{entity_rcnn_forward.4} parent=19 // pred_fallthru
          _
      $region20: #{entity_rcnn_forward.4} parent=5 // pred_fallthru
        _
      %p396 = scmp.le.s32.totalorder 1, %s8
      %p397 = scmp.lt.s32.totalorder %s8, 8
      %p398 = pnand %p396, %p397
      %p399 = pneg %p398
      // Predicated region
      $region59: #{entity_rcnn_forward.4} parent=5 // pred_check
        _
      $region60: #{entity_rcnn_forward.4} parent=5 // pred_check_branch
        %401 = sbr.rel (%p398) target = $region62
      $region61: #{entity_rcnn_forward.4} parent=5 // pred_region
        %s402 = ssub.s32 %s8, 1
        %s403 = sand.u32 %s42, 1
        %s404 = sand.u32 %s42, 1
        %s405 = smul.addr %s404, 512
        %s406 = scalar_lea.vmem [#allocation2], %s405
        // Predicated region
        $region63: #{entity_rcnn_forward.4} parent=61 // pred_check
          %p407 = pneg %p55
        $region64: #{entity_rcnn_forward.4} parent=61 // pred_check_branch
          %409 = sbr.rel (%p407) target = $region66
        $region65: #{entity_rcnn_forward.4} parent=61 // pred_region
          _
        $region66: #{entity_rcnn_forward.4} parent=61 // pred_fallthru
          _
        %p410 = pneg %p29
        %p411 = pneg %p26
        %s412 = sand.u32 %s42, 1
        %s413 = sand.u32 %s42, 1
        %s414 = smul.addr %s413, 512
        %s415 = scalar_lea.vmem [#allocation2], %s414
        %p416 = pneg %p55
        %p417 = pneg %p52
        %p418 = pneg %p81
        %p419 = pneg %p78
        %s420 = sand.u32 %s68, 1
        %s421 = sand.u32 %s68, 1
        %s422 = smul.addr %s421, 32
        %s423 = scalar_lea.vmem [#allocation3], %s422
        %v424 = vld [vmem:[%s0] sm:$0xff]
        %v425 = vld [vmem:[%s0 + $0x8] sm:$0xff]
        %v426 = vld [vmem:[%s0 + $0x10] sm:$0xff]
        %v427 = vld [vmem:[%s0 + $0x18] sm:$0xff]
        %v428 = vld [vmem:[%s0 + $0x20] sm:$0xff]
        %v429 = vld [vmem:[%s0 + $0x28] sm:$0xff]
        %v430 = vld [vmem:[%s0 + $0x30] sm:$0xff]
        %v431 = vld [vmem:[%s0 + $0x38] sm:$0xff]
        %v432 = vld [vmem:[%s0 + $0x40] sm:$0xff]
        %v433 = vld [vmem:[%s0 + $0x48] sm:$0xff]
        %v434 = vld [vmem:[%s0 + $0x50] sm:$0xff]
        %v435 = vld [vmem:[%s0 + $0x58] sm:$0xff]
        %v436 = vld [vmem:[%s0 + $0x60] sm:$0xff]
        %v437 = vld [vmem:[%s0 + $0x68] sm:$0xff]
        %v438 = vld [vmem:[%s0 + $0x70] sm:$0xff]
        %v439 = vld [vmem:[%s0 + $0x78] sm:$0xff]
        %v440 = vld [vmem:[%s406] sm:$0xff]
        %v441 = vld [vmem:[%s406 + $0x8] sm:$0xff]
        %v442 = vld [vmem:[%s406 + $0x10] sm:$0xff]
        %v443 = vld [vmem:[%s406 + $0x18] sm:$0xff]
        %v444 = vld [vmem:[%s406 + $0x20] sm:$0xff]
        %v445 = vld [vmem:[%s406 + $0x28] sm:$0xff]
        %v446 = vld [vmem:[%s406 + $0x30] sm:$0xff]
        %v447 = vld [vmem:[%s406 + $0x38] sm:$0xff]
        %v448 = vld [vmem:[%s406 + $0x40] sm:$0xff]
        %v449 = vld [vmem:[%s406 + $0x48] sm:$0xff]
        %v450 = vld [vmem:[%s406 + $0x50] sm:$0xff]
        %v451 = vld [vmem:[%s406 + $0x58] sm:$0xff]
        %v452 = vld [vmem:[%s406 + $0x60] sm:$0xff]
        %v453 = vld [vmem:[%s406 + $0x68] sm:$0xff]
        %v454 = vld [vmem:[%s406 + $0x70] sm:$0xff]
        %v455 = vld [vmem:[%s406 + $0x78] sm:$0xff]
        %v456 = vld [vmem:[%s406 + $0x80] sm:$0xff]
        %v457 = vld [vmem:[%s406 + $0x88] sm:$0xff]
        %v458 = vld [vmem:[%s406 + $0x90] sm:$0xff]
        %v459 = vld [vmem:[%s406 + $0x98] sm:$0xff]
        %v460 = vld [vmem:[%s406 + $0xa0] sm:$0xff]
        %v461 = vld [vmem:[%s406 + $0xa8] sm:$0xff]
        %v462 = vld [vmem:[%s406 + $0xb0] sm:$0xff]
        %v463 = vld [vmem:[%s406 + $0xb8] sm:$0xff]
        %v464 = vld [vmem:[%s406 + $0xc0] sm:$0xff]
        %v465 = vld [vmem:[%s406 + $0xc8] sm:$0xff]
        %v466 = vld [vmem:[%s406 + $0xd0] sm:$0xff]
        %v467 = vld [vmem:[%s406 + $0xd8] sm:$0xff]
        %v468 = vld [vmem:[%s406 + $0xe0] sm:$0xff]
        %v469 = vld [vmem:[%s406 + $0xe8] sm:$0xff]
        %v470 = vld [vmem:[%s406 + $0xf0] sm:$0xff]
        %v471 = vld [vmem:[%s406 + $0xf8] sm:$0xff]
        %v472 = vld [vmem:[%s406 + $0x100] sm:$0xff]
        %v473 = vld [vmem:[%s406 + $0x108] sm:$0xff]
        %v474 = vld [vmem:[%s406 + $0x110] sm:$0xff]
        %v475 = vld [vmem:[%s406 + $0x118] sm:$0xff]
        %v476 = vld [vmem:[%s406 + $0x120] sm:$0xff]
        %v477 = vld [vmem:[%s406 + $0x128] sm:$0xff]
        %v478 = vld [vmem:[%s406 + $0x130] sm:$0xff]
        %v479 = vld [vmem:[%s406 + $0x138] sm:$0xff]
        %v480 = vld [vmem:[%s406 + $0x140] sm:$0xff]
        %v481 = vld [vmem:[%s406 + $0x148] sm:$0xff]
        %v482 = vld [vmem:[%s406 + $0x150] sm:$0xff]
        %v483 = vld [vmem:[%s406 + $0x158] sm:$0xff]
        %v484 = vld [vmem:[%s406 + $0x160] sm:$0xff]
        %v485 = vld [vmem:[%s406 + $0x168] sm:$0xff]
        %v486 = vld [vmem:[%s406 + $0x170] sm:$0xff]
        %v487 = vld [vmem:[%s406 + $0x178] sm:$0xff]
        %v488 = vld [vmem:[%s406 + $0x180] sm:$0xff]
        %v489 = vld [vmem:[%s406 + $0x188] sm:$0xff]
        %v490 = vld [vmem:[%s406 + $0x190] sm:$0xff]
        %v491 = vld [vmem:[%s406 + $0x198] sm:$0xff]
        %v492 = vld [vmem:[%s406 + $0x1a0] sm:$0xff]
        %v493 = vld [vmem:[%s406 + $0x1a8] sm:$0xff]
        %v494 = vld [vmem:[%s406 + $0x1b0] sm:$0xff]
        %v495 = vld [vmem:[%s406 + $0x1b8] sm:$0xff]
        %v496 = vld [vmem:[%s406 + $0x1c0] sm:$0xff]
        %v497 = vld [vmem:[%s406 + $0x1c8] sm:$0xff]
        %v498 = vld [vmem:[%s406 + $0x1d0] sm:$0xff]
        %v499 = vld [vmem:[%s406 + $0x1d8] sm:$0xff]
        %v500 = vld [vmem:[%s406 + $0x1e0] sm:$0xff]
        %v501 = vld [vmem:[%s406 + $0x1e8] sm:$0xff]
        %v502 = vld [vmem:[%s406 + $0x1f0] sm:$0xff]
        %v503 = vld [vmem:[%s406 + $0x1f8] sm:$0xff]
        %504 = vmatprep.subr.mxu0 0.0
        %505 = vmatpush1.msra.mxu0 %v440
        %506 = vmatprep.subr.mxu0 0.0
        %507 = vmatpush1.msra.mxu0 %v441
        %508 = vmatprep.subr.mxu0 0.0
        %509 = vmatpush1.msra.mxu0 %v442
        %510 = vmatprep.subr.mxu0 0.0
        %511 = vmatpush1.msra.mxu0 %v443
        %512 = vmatprep.subr.mxu0 0.0
        %513 = vmatpush1.msra.mxu0 %v444
        %514 = vmatprep.subr.mxu0 0.0
        %515 = vmatpush1.msra.mxu0 %v445
        %516 = vmatprep.subr.mxu0 0.0
        %517 = vmatpush1.msra.mxu0 %v446
        %518 = vmatprep.subr.mxu0 0.0
        %519 = vmatpush1.msra.mxu0 %v447
        %520 = vmatprep.subr.mxu0 0.0
        %521 = vmatpush1.msra.mxu0 %v448
        %522 = vmatprep.subr.mxu0 0.0
        %523 = vmatpush1.msra.mxu0 %v449
        %524 = vmatprep.subr.mxu0 0.0
        %525 = vmatpush1.msra.mxu0 %v450
        %526 = vmatprep.subr.mxu0 0.0
        %527 = vmatpush1.msra.mxu0 %v451
        %528 = vmatprep.subr.mxu0 0.0
        %529 = vmatpush1.msra.mxu0 %v452
        %530 = vmatprep.subr.mxu0 0.0
        %531 = vmatpush1.msra.mxu0 %v453
        %532 = vmatprep.subr.mxu0 0.0
        %533 = vmatpush1.msra.mxu0 %v454
        %534 = vmatprep.subr.mxu0 0.0
        %535 = vmatpush1.msra.mxu0 %v455
        %536 = vmatprep.subr.mxu0 0.0
        %537 = vmatpush1.msra.mxu0 %v456
        %538 = vmatprep.subr.mxu0 0.0
        %539 = vmatpush1.msra.mxu0 %v457
        %540 = vmatprep.subr.mxu0 0.0
        %541 = vmatpush1.msra.mxu0 %v458
        %542 = vmatprep.subr.mxu0 0.0
        %543 = vmatpush1.msra.mxu0 %v459
        %544 = vmatprep.subr.mxu0 0.0
        %545 = vmatpush1.msra.mxu0 %v460
        %546 = vmatprep.subr.mxu0 0.0
        %547 = vmatpush1.msra.mxu0 %v461
        %548 = vmatprep.subr.mxu0 0.0
        %549 = vmatpush1.msra.mxu0 %v462
        %550 = vmatprep.subr.mxu0 0.0
        %551 = vmatpush1.msra.mxu0 %v463
        %552 = vmatprep.subr.mxu0 0.0
        %553 = vmatpush1.msra.mxu0 %v464
        %554 = vmatprep.subr.mxu0 0.0
        %555 = vmatpush1.msra.mxu0 %v465
        %556 = vmatprep.subr.mxu0 0.0
        %557 = vmatpush1.msra.mxu0 %v466
        %558 = vmatprep.subr.mxu0 0.0
        %559 = vmatpush1.msra.mxu0 %v467
        %560 = vmatprep.subr.mxu0 0.0
        %561 = vmatpush1.msra.mxu0 %v468
        %562 = vmatprep.subr.mxu0 0.0
        %563 = vmatpush1.msra.mxu0 %v469
        %564 = vmatprep.subr.mxu0 0.0
        %565 = vmatpush1.msra.mxu0 %v470
        %566 = vmatprep.subr.mxu0 0.0
        %567 = vmatpush1.msra.mxu0 %v471
        %568 = vmatprep.mubr.f32.mxu0 %v425
        %569 = vmatmul.mubr.f32.gmra.mrb[0].mxu0 %v424
        %v570 = vpop.f32.mrb[0].mxu0
        %v571 = vadd.f32 0.0, %v570
        %v572 = vpop.f32.mrb[0].mxu0
        %573 = vmatprep.mubr.f32.mxu0 %v429
        %574 = vmatmul.mubr.f32.gmra.mrb[0].mxu0 %v428
        %v575 = vpop.f32.mrb[0].mxu0
        %v576 = vadd.f32 0.0, %v575
        %v577 = vpop.f32.mrb[0].mxu0
        %578 = vmatprep.mubr.f32.mxu0 %v433
        %579 = vmatmul.mubr.f32.gmra.mrb[0].mxu0 %v432
        %v580 = vpop.f32.mrb[0].mxu0
        %v581 = vadd.f32 0.0, %v580
        %v582 = vpop.f32.mrb[0].mxu0
        %583 = vmatprep.mubr.f32.mxu0 %v437
        %584 = vmatmul.mubr.f32.gmra.mrb[0].mxu0 %v436
        %v585 = vpop.f32.mrb[0].mxu0
        %v586 = vadd.f32 0.0, %v585
        %v587 = vpop.f32.mrb[0].mxu0
        %588 = vdwg.mxu0
        %589 = vmatprep.subr.mxu0 0.0
        %590 = vmatpush1.msra.mxu0 %v472
        %591 = vmatprep.subr.mxu0 0.0
        %592 = vmatpush1.msra.mxu0 %v473
        %593 = vmatprep.subr.mxu0 0.0
        %594 = vmatpush1.msra.mxu0 %v474
        %595 = vmatprep.subr.mxu0 0.0
        %596 = vmatpush1.msra.mxu0 %v475
        %597 = vmatprep.subr.mxu0 0.0
        %598 = vmatpush1.msra.mxu0 %v476
        %599 = vmatprep.subr.mxu0 0.0
        %600 = vmatpush1.msra.mxu0 %v477
        %601 = vmatprep.subr.mxu0 0.0
        %602 = vmatpush1.msra.mxu0 %v478
        %603 = vmatprep.subr.mxu0 0.0
        %604 = vmatpush1.msra.mxu0 %v479
        %605 = vmatprep.subr.mxu0 0.0
        %606 = vmatpush1.msra.mxu0 %v480
        %607 = vmatprep.subr.mxu0 0.0
        %608 = vmatpush1.msra.mxu0 %v481
        %609 = vmatprep.subr.mxu0 0.0
        %610 = vmatpush1.msra.mxu0 %v482
        %611 = vmatprep.subr.mxu0 0.0
        %612 = vmatpush1.msra.mxu0 %v483
        %613 = vmatprep.subr.mxu0 0.0
        %614 = vmatpush1.msra.mxu0 %v484
        %615 = vmatprep.subr.mxu0 0.0
        %616 = vmatpush1.msra.mxu0 %v485
        %617 = vmatprep.subr.mxu0 0.0
        %618 = vmatpush1.msra.mxu0 %v486
        %619 = vmatprep.subr.mxu0 0.0
        %620 = vmatpush1.msra.mxu0 %v487
        %621 = vmatprep.subr.mxu0 0.0
        %622 = vmatpush1.msra.mxu0 %v488
        %623 = vmatprep.subr.mxu0 0.0
        %624 = vmatpush1.msra.mxu0 %v489
        %625 = vmatprep.subr.mxu0 0.0
        %626 = vmatpush1.msra.mxu0 %v490
        %627 = vmatprep.subr.mxu0 0.0
        %628 = vmatpush1.msra.mxu0 %v491
        %629 = vmatprep.subr.mxu0 0.0
        %630 = vmatpush1.msra.mxu0 %v492
        %631 = vmatprep.subr.mxu0 0.0
        %632 = vmatpush1.msra.mxu0 %v493
        %633 = vmatprep.subr.mxu0 0.0
        %634 = vmatpush1.msra.mxu0 %v494
        %635 = vmatprep.subr.mxu0 0.0
        %636 = vmatpush1.msra.mxu0 %v495
        %637 = vmatprep.subr.mxu0 0.0
        %638 = vmatpush1.msra.mxu0 %v496
        %639 = vmatprep.subr.mxu0 0.0
        %640 = vmatpush1.msra.mxu0 %v497
        %641 = vmatprep.subr.mxu0 0.0
        %642 = vmatpush1.msra.mxu0 %v498
        %643 = vmatprep.subr.mxu0 0.0
        %644 = vmatpush1.msra.mxu0 %v499
        %645 = vmatprep.subr.mxu0 0.0
        %646 = vmatpush1.msra.mxu0 %v500
        %647 = vmatprep.subr.mxu0 0.0
        %648 = vmatpush1.msra.mxu0 %v501
        %649 = vmatprep.subr.mxu0 0.0
        %650 = vmatpush1.msra.mxu0 %v502
        %651 = vmatprep.subr.mxu0 0.0
        %652 = vmatpush1.msra.mxu0 %v503
        %653 = vmatprep.mubr.f32.mxu0 %v427
        %654 = vmatmul.mubr.f32.gmra.mrb[0].mxu0 %v426
        %v655 = vpop.f32.mrb[0].mxu0
        %v656 = vadd.f32 %v571, %v655
        %v657 = vpop.f32.mrb[0].mxu0
        %658 = vmatprep.mubr.f32.mxu0 %v431
        %659 = vmatmul.mubr.f32.gmra.mrb[0].mxu0 %v430
        %v660 = vpop.f32.mrb[0].mxu0
        %v661 = vadd.f32 %v576, %v660
        %v662 = vpop.f32.mrb[0].mxu0
        %663 = vmatprep.mubr.f32.mxu0 %v435
        %664 = vmatmul.mubr.f32.gmra.mrb[0].mxu0 %v434
        %v665 = vpop.f32.mrb[0].mxu0
        %v666 = vadd.f32 %v581, %v665
        %v667 = vpop.f32.mrb[0].mxu0
        %668 = vmatprep.mubr.f32.mxu0 %v439
        %669 = vmatmul.mubr.f32.gmra.mrb[0].mxu0 %v438
        %v670 = vpop.f32.mrb[0].mxu0
        %v671 = vadd.f32 %v586, %v670
        %v672 = vpop.f32.mrb[0].mxu0
        %673 = vdwg.mxu0
        %674 = vst [vmem:[%s423] sm:$0xff] %v656
        %675 = vst [vmem:[%s423 + $0x8] sm:$0xff] %v661
        %676 = vst [vmem:[%s423 + $0x10] sm:$0xff] %v666
        %677 = vst [vmem:[%s423 + $0x18] sm:$0xff] %v671
        %s678 = sand.u32 %s68, 1
        %s679 = sand.u32 %s68, 1
        %s680 = smul.addr %s679, 32
        %s681 = scalar_lea.vmem [#allocation3], %s680
        // Predicated region
        $region67: #{entity_rcnn_forward.4} parent=61 // pred_check
          %p682 = pneg %p78
        $region68: #{entity_rcnn_forward.4} parent=61 // pred_check_branch
          %684 = sbr.rel (%p682) target = $region70
        $region69: #{entity_rcnn_forward.4} parent=61 // pred_region
          %s685 = smul.addr %s13, 8
          %s686 = scalar_lea.vmem %s2, %s685
          // Predicated region
          $region71: #{entity_rcnn_forward.4} parent=69 // pred_check
            _
          $region72: #{entity_rcnn_forward.4} parent=69 // pred_check_branch
            %688 = sbr.rel (0) target = $region74
          $region73: #{entity_rcnn_forward.4} parent=69 // pred_region
            // Predicated region
            $region75: #{entity_rcnn_forward.4} parent=73 // pred_check
              _
            $region76: #{entity_rcnn_forward.4} parent=73 // pred_check_branch
              %690 = sbr.rel (0) target = $region78
            $region77: #{entity_rcnn_forward.4} parent=73 // pred_region
              // Predicated region
              $region90: #{entity_rcnn_forward.4} parent=77 // pred_check
                _
              $region91: #{entity_rcnn_forward.4} parent=77 // pred_check_branch
                %711 = sbr.rel (0) target = $region93
              $region92: #{entity_rcnn_forward.4} parent=77 // pred_region
                loop: start=0, step=1, limit=1
                $region94: #{entity_rcnn_forward.4} parent=92 // loop_pre_header
                  _
                $region95: #{entity_rcnn_forward.4} parent=92 // loop_header
                  %s713 = sphi 0, %s717
                  %p714 = scmp.ge.s32.totalorder %s713, 1
                  %s718 = sphi %s681, %s681
                  %s719 = sphi %s686, %s686
                $region96: #{entity_rcnn_forward.4} parent=92 // loop_header_branch
                  %716 = sbr.rel (%p714) target = $region100
                $region97: #{entity_rcnn_forward.4} parent=92 // loop_body
                  %v720 = vld [vmem:[%s718] sm:$0xff]
                  %721 = vst [vmem:[%s719] sm:$0xff] %v720
                  %v722 = vld [vmem:[%s718 + $0x8] sm:$0xff]
                  %723 = vst [vmem:[%s719 + $0x38] sm:$0xff] %v722
                  %v724 = vld [vmem:[%s718 + $0x10] sm:$0xff]
                  %725 = vst [vmem:[%s719 + $0x70] sm:$0xff] %v724
                  %v726 = vld [vmem:[%s718 + $0x18] sm:$0xff]
                  %727 = vst [vmem:[%s719 + $0xa8] sm:$0xff] %v726
                $region98: #{entity_rcnn_forward.4} parent=92 // loop_footer
                  %s717 = sadd.s32 1, %s713
                $region99: #{entity_rcnn_forward.4} parent=92 // loop_footer_branch
                  %712 = sbr.rel target = $region95
                $region100: #{entity_rcnn_forward.4} parent=92 // loop_exit
                  _
              $region93: #{entity_rcnn_forward.4} parent=77 // pred_fallthru
                _
              // Predicated region
              $region101: #{entity_rcnn_forward.4} parent=77 // pred_check
                _
              $region102: #{entity_rcnn_forward.4} parent=77 // pred_check_branch
                %729 = sbr.rel target = $region104
              $region103: #{entity_rcnn_forward.4} parent=77 // pred_region
                _
              $region104: #{entity_rcnn_forward.4} parent=77 // pred_fallthru
                _
            $region78: #{entity_rcnn_forward.4} parent=73 // pred_fallthru
              _
            // Predicated region
            $region79: #{entity_rcnn_forward.4} parent=73 // pred_check
              _
            $region80: #{entity_rcnn_forward.4} parent=73 // pred_check_branch
              %692 = sbr.rel target = $region82
            $region81: #{entity_rcnn_forward.4} parent=73 // pred_region
              loop: start=0, step=1, limit=1
              $region83: #{entity_rcnn_forward.4} parent=81 // loop_pre_header
                _
              $region84: #{entity_rcnn_forward.4} parent=81 // loop_header
                %s695 = sphi 0, %s699
                %p696 = scmp.ge.s32.totalorder %s695, 1
                %s700 = sphi %s681, %s681
                %s701 = sphi %s686, %s686
              $region85: #{entity_rcnn_forward.4} parent=81 // loop_header_branch
                %698 = sbr.rel (%p696) target = $region89
              $region86: #{entity_rcnn_forward.4} parent=81 // loop_body
                %v702 = vld [vmem:[%s700] sm:$0xff]
                %703 = vst [vmem:[%s701] sm:$0xff] %v702
                %v704 = vld [vmem:[%s700 + $0x8] sm:$0xff]
                %705 = vst [vmem:[%s701 + $0x38] sm:$0xff] %v704
                %v706 = vld [vmem:[%s700 + $0x10] sm:$0xff]
                %707 = vst [vmem:[%s701 + $0x70] sm:$0xff] %v706
                %v708 = vld [vmem:[%s700 + $0x18] sm:$0xff]
                %709 = vst [vmem:[%s701 + $0xa8] sm:$0xff] %v708
              $region87: #{entity_rcnn_forward.4} parent=81 // loop_footer
                %s699 = sadd.s32 1, %s695
              $region88: #{entity_rcnn_forward.4} parent=81 // loop_footer_branch
                %694 = sbr.rel target = $region84
              $region89: #{entity_rcnn_forward.4} parent=81 // loop_exit
                _
            $region82: #{entity_rcnn_forward.4} parent=73 // pred_fallthru
              _
          $region74: #{entity_rcnn_forward.4} parent=69 // pred_fallthru
            _
          %730 = vnop
        $region70: #{entity_rcnn_forward.4} parent=61 // pred_fallthru
          _
      $region62: #{entity_rcnn_forward.4} parent=5 // pred_fallthru
        _
      %p731 = scmp.le.s32.totalorder 2, %s8
      // Predicated region
      $region105: #{entity_rcnn_forward.4} parent=5 // pred_check
        %p732 = pneg %p731
      $region106: #{entity_rcnn_forward.4} parent=5 // pred_check_branch
        %734 = sbr.rel (%p732) target = $region108
      $region107: #{entity_rcnn_forward.4} parent=5 // pred_region
        %s735 = ssub.s32 %s8, 2
        // Predicated region
        $region109: #{entity_rcnn_forward.4} parent=107 // pred_check
          %p736 = pneg %p84
        $region110: #{entity_rcnn_forward.4} parent=107 // pred_check_branch
          %738 = sbr.rel (%p736) target = $region112
        $region111: #{entity_rcnn_forward.4} parent=107 // pred_region
          %s739 = sand.u32 %s69, 1
          %s740 = sand.u32 %s69, 1
          %s741 = smul.addr %s740, 32
          %s742 = scalar_lea.vmem [#allocation3], %s741
        $region112: #{entity_rcnn_forward.4} parent=107 // pred_fallthru
          _
      $region108: #{entity_rcnn_forward.4} parent=5 // pred_fallthru
        _
    $region6: #{entity_rcnn_forward.4} parent=1 // loop_footer
      %s12 = sadd.s32 1, %s8
    $region7: #{entity_rcnn_forward.4} parent=1 // loop_footer_branch
      %7 = sbr.rel target = $region3
    $region8: #{entity_rcnn_forward.4} parent=1 // loop_exit
      _

// kernel: entity_rcnn_forward.5
$region0: #{entity_rcnn_forward.5}
  #allocation0 [shape = 'u32[]', space=smem, size = 0x4, offset = 0x4, fixed_abs, tag = 'smem constant byte address 0x4 - core index']
  #allocation1 [shape = 'u32[144,128]{1,0:T(1,128)}', space=vmem, size = 0x12000, scoped, tag = 'internal scratch']
  %s0 = inlined_call_operand.vmem [shape: f32[16,1568], index: 0, kind: input, shape index: {}]
  %s1 = inlined_call_operand.vmem [shape: f32[1568,128], index: 1, kind: input, shape index: {}]
  %s2 = inlined_call_operand.vmem [shape: f32[1,128], index: 2, kind: input, shape index: {}]
  %s3 = inlined_call_operand.vmem [shape: f32[128,128], index: 3, kind: input, shape index: {}]
  %s4 = inlined_call_operand.vmem [shape: f32[1,128], index: 4, kind: input, shape index: {}]
  %s5 = inlined_call_operand.vmem [shape: f32[128,128], index: 5, kind: input, shape index: {}]
  %s6 = inlined_call_operand.vmem [shape: f32[1,128], index: 6, kind: input, shape index: {}]
  %s7 = inlined_call_operand.hbm [shape: f32[16,128], index: 7, kind: output, shape index: {0}]
  %s8 = inlined_call_operand.vmem [shape: f32[16,128], index: 8, kind: output, shape index: {1}]
  %9 = xla_tuple %s7, %s8
  %s10 = sld [smem:[#allocation0]]
  $region46: #{entity_rcnn_forward.5} parent=0
    _
  %s12 = ssub.s32 1, %s10
  %s13 = scalar_select 0, %s12, %s10
  $region1: #{entity_rcnn_forward.5} parent=0
    #allocation2 [shape = 'u8[8192]{0}', space=vmem, size = 0x2000, scoped, tag = 'output window, operand 0, single buffered']
    #allocation3 [shape = 's32[1]{0}', space=sflag, size = 0x4, scoped, tag = 'scoped memory for entity_rcnn_forward.5']
    %14 = vsyncpa [#allocation3], 0
    // Predicated region
    $region2: #{entity_rcnn_forward.5} parent=1 // pred_check
      _
    $region3: #{entity_rcnn_forward.5} parent=1 // pred_check_branch
      %16 = sbr.rel (0) target = $region5
    $region4: #{entity_rcnn_forward.5} parent=1 // pred_region
      _
    $region5: #{entity_rcnn_forward.5} parent=1 // pred_fallthru
      _
    // Predicated region
    $region6: #{entity_rcnn_forward.5} parent=1 // pred_check
      _
    $region7: #{entity_rcnn_forward.5} parent=1 // pred_check_branch
      %18 = sbr.rel (0) target = $region9
    $region8: #{entity_rcnn_forward.5} parent=1 // pred_region
      _
    $region9: #{entity_rcnn_forward.5} parent=1 // pred_fallthru
      _
    // Predicated region
    $region10: #{entity_rcnn_forward.5} parent=1 // pred_check
      _
    $region11: #{entity_rcnn_forward.5} parent=1 // pred_check_branch
      %20 = sbr.rel (0) target = $region13
    $region12: #{entity_rcnn_forward.5} parent=1 // pred_region
      _
    $region13: #{entity_rcnn_forward.5} parent=1 // pred_fallthru
      _
    // Predicated region
    $region14: #{entity_rcnn_forward.5} parent=1 // pred_check
      _
    $region15: #{entity_rcnn_forward.5} parent=1 // pred_check_branch
      %22 = sbr.rel (0) target = $region17
    $region16: #{entity_rcnn_forward.5} parent=1 // pred_region
      _
    $region17: #{entity_rcnn_forward.5} parent=1 // pred_fallthru
      _
    // Predicated region
    $region18: #{entity_rcnn_forward.5} parent=1 // pred_check
      _
    $region19: #{entity_rcnn_forward.5} parent=1 // pred_check_branch
      %24 = sbr.rel (0) target = $region21
    $region20: #{entity_rcnn_forward.5} parent=1 // pred_region
      _
    $region21: #{entity_rcnn_forward.5} parent=1 // pred_fallthru
      _
    // Predicated region
    $region22: #{entity_rcnn_forward.5} parent=1 // pred_check
      _
    $region23: #{entity_rcnn_forward.5} parent=1 // pred_check_branch
      %26 = sbr.rel (0) target = $region25
    $region24: #{entity_rcnn_forward.5} parent=1 // pred_region
      _
    $region25: #{entity_rcnn_forward.5} parent=1 // pred_fallthru
      _
    // Predicated region
    $region26: #{entity_rcnn_forward.5} parent=1 // pred_check
      _
    $region27: #{entity_rcnn_forward.5} parent=1 // pred_check_branch
      %28 = sbr.rel (0) target = $region29
    $region28: #{entity_rcnn_forward.5} parent=1 // pred_region
      _
    $region29: #{entity_rcnn_forward.5} parent=1 // pred_fallthru
      _
    %v29 = vld [vmem:[%s0] sm:$0xff]
    %v30 = vld [vmem:[%s0 + $0x8] sm:$0xff]
    %v31 = vld [vmem:[%s0 + $0x10] sm:$0xff]
    %v32 = vld [vmem:[%s0 + $0x18] sm:$0xff]
    %v33 = vld [vmem:[%s0 + $0x20] sm:$0xff]
    %v34 = vld [vmem:[%s0 + $0x28] sm:$0xff]
    %v35 = vld [vmem:[%s0 + $0x30] sm:$0xff]
    %v36 = vld [vmem:[%s0 + $0x38] sm:$0xff]
    %v37 = vld [vmem:[%s0 + $0x40] sm:$0xff]
    %v38 = vld [vmem:[%s0 + $0x48] sm:$0xff]
    %v39 = vld [vmem:[%s0 + $0x50] sm:$0xff]
    %v40 = vld [vmem:[%s0 + $0x58] sm:$0xff]
    %v41 = vld [vmem:[%s0 + $0x60] sm:$0xff]
    %v42 = vld [vmem:[%s0 + $0x68] sm:$0xff]
    %v43 = vld [vmem:[%s0 + $0x70] sm:$0xff]
    %v44 = vld [vmem:[%s0 + $0x78] sm:$0xff]
    %v45 = vld [vmem:[%s0 + $0x80] sm:$0xff]
    %v46 = vld [vmem:[%s0 + $0x88] sm:$0xff]
    %v47 = vld [vmem:[%s0 + $0x90] sm:$0xff]
    %v48 = vld [vmem:[%s0 + $0x98] sm:$0xff]
    %v49 = vld [vmem:[%s0 + $0xa0] sm:$0xff]
    %v50 = vld [vmem:[%s0 + $0xa8] sm:$0xff]
    %v51 = vld [vmem:[%s0 + $0xb0] sm:$0xff]
    %v52 = vld [vmem:[%s0 + $0xb8] sm:$0xff]
    %v53 = vld [vmem:[%s0 + $0xc0] sm:$0xff]
    %v54 = vld [vmem:[%s0 + $0xc8] sm:$0xff]
    %v55 = vld [vmem:[%s1] sm:$0xff]
    %v56 = vld [vmem:[%s1 + $0x8] sm:$0xff]
    %v57 = vld [vmem:[%s1 + $0x10] sm:$0xff]
    %v58 = vld [vmem:[%s1 + $0x18] sm:$0xff]
    %v59 = vld [vmem:[%s1 + $0x20] sm:$0xff]
    %v60 = vld [vmem:[%s1 + $0x28] sm:$0xff]
    %v61 = vld [vmem:[%s1 + $0x30] sm:$0xff]
    %v62 = vld [vmem:[%s1 + $0x38] sm:$0xff]
    %v63 = vld [vmem:[%s1 + $0x40] sm:$0xff]
    %v64 = vld [vmem:[%s1 + $0x48] sm:$0xff]
    %v65 = vld [vmem:[%s1 + $0x50] sm:$0xff]
    %v66 = vld [vmem:[%s1 + $0x58] sm:$0xff]
    %v67 = vld [vmem:[%s1 + $0x60] sm:$0xff]
    %v68 = vld [vmem:[%s1 + $0x68] sm:$0xff]
    %v69 = vld [vmem:[%s1 + $0x70] sm:$0xff]
    %v70 = vld [vmem:[%s1 + $0x78] sm:$0xff]
    %v71 = vld [vmem:[%s1 + $0x80] sm:$0xff]
    %v72 = vld [vmem:[%s1 + $0x88] sm:$0xff]
    %v73 = vld [vmem:[%s1 + $0x90] sm:$0xff]
    %v74 = vld [vmem:[%s1 + $0x98] sm:$0xff]
    %v75 = vld [vmem:[%s1 + $0xa0] sm:$0xff]
    %v76 = vld [vmem:[%s1 + $0xa8] sm:$0xff]
    %v77 = vld [vmem:[%s1 + $0xb0] sm:$0xff]
    %v78 = vld [vmem:[%s1 + $0xb8] sm:$0xff]
    %v79 = vld [vmem:[%s1 + $0xc0] sm:$0xff]
    %v80 = vld [vmem:[%s1 + $0xc8] sm:$0xff]
    %v81 = vld [vmem:[%s1 + $0xd0] sm:$0xff]
    %v82 = vld [vmem:[%s1 + $0xd8] sm:$0xff]
    %v83 = vld [vmem:[%s1 + $0xe0] sm:$0xff]
    %v84 = vld [vmem:[%s1 + $0xe8] sm:$0xff]
    %v85 = vld [vmem:[%s1 + $0xf0] sm:$0xff]
    %v86 = vld [vmem:[%s1 + $0xf8] sm:$0xff]
    %v87 = vld [vmem:[%s1 + $0x100] sm:$0xff]
    %v88 = vld [vmem:[%s1 + $0x108] sm:$0xff]
    %v89 = vld [vmem:[%s1 + $0x110] sm:$0xff]
    %v90 = vld [vmem:[%s1 + $0x118] sm:$0xff]
    %v91 = vld [vmem:[%s1 + $0x120] sm:$0xff]
    %v92 = vld [vmem:[%s1 + $0x128] sm:$0xff]
    %v93 = vld [vmem:[%s1 + $0x130] sm:$0xff]
    %v94 = vld [vmem:[%s1 + $0x138] sm:$0xff]
    %v95 = vld [vmem:[%s1 + $0x140] sm:$0xff]
    %v96 = vld [vmem:[%s1 + $0x148] sm:$0xff]
    %v97 = vld [vmem:[%s1 + $0x150] sm:$0xff]
    %v98 = vld [vmem:[%s1 + $0x158] sm:$0xff]
    %v99 = vld [vmem:[%s1 + $0x160] sm:$0xff]
    %v100 = vld [vmem:[%s1 + $0x168] sm:$0xff]
    %v101 = vld [vmem:[%s1 + $0x170] sm:$0xff]
    %v102 = vld [vmem:[%s1 + $0x178] sm:$0xff]
    %v103 = vld [vmem:[%s1 + $0x180] sm:$0xff]
    %v104 = vld [vmem:[%s1 + $0x188] sm:$0xff]
    %v105 = vld [vmem:[%s1 + $0x190] sm:$0xff]
    %v106 = vld [vmem:[%s1 + $0x198] sm:$0xff]
    %v107 = vld [vmem:[%s1 + $0x1a0] sm:$0xff]
    %v108 = vld [vmem:[%s1 + $0x1a8] sm:$0xff]
    %v109 = vld [vmem:[%s1 + $0x1b0] sm:$0xff]
    %v110 = vld [vmem:[%s1 + $0x1b8] sm:$0xff]
    %v111 = vld [vmem:[%s1 + $0x1c0] sm:$0xff]
    %v112 = vld [vmem:[%s1 + $0x1c8] sm:$0xff]
    %v113 = vld [vmem:[%s1 + $0x1d0] sm:$0xff]
    %v114 = vld [vmem:[%s1 + $0x1d8] sm:$0xff]
    %v115 = vld [vmem:[%s1 + $0x1e0] sm:$0xff]
    %v116 = vld [vmem:[%s1 + $0x1e8] sm:$0xff]
    %v117 = vld [vmem:[%s1 + $0x1f0] sm:$0xff]
    %v118 = vld [vmem:[%s1 + $0x1f8] sm:$0xff]
    %v119 = vld [vmem:[%s1 + $0x200] sm:$0xff]
    %v120 = vld [vmem:[%s1 + $0x208] sm:$0xff]
    %v121 = vld [vmem:[%s1 + $0x210] sm:$0xff]
    %v122 = vld [vmem:[%s1 + $0x218] sm:$0xff]
    %v123 = vld [vmem:[%s1 + $0x220] sm:$0xff]
    %v124 = vld [vmem:[%s1 + $0x228] sm:$0xff]
    %v125 = vld [vmem:[%s1 + $0x230] sm:$0xff]
    %v126 = vld [vmem:[%s1 + $0x238] sm:$0xff]
    %v127 = vld [vmem:[%s1 + $0x240] sm:$0xff]
    %v128 = vld [vmem:[%s1 + $0x248] sm:$0xff]
    %v129 = vld [vmem:[%s1 + $0x250] sm:$0xff]
    %v130 = vld [vmem:[%s1 + $0x258] sm:$0xff]
    %v131 = vld [vmem:[%s1 + $0x260] sm:$0xff]
    %v132 = vld [vmem:[%s1 + $0x268] sm:$0xff]
    %v133 = vld [vmem:[%s1 + $0x270] sm:$0xff]
    %v134 = vld [vmem:[%s1 + $0x278] sm:$0xff]
    %v135 = vld [vmem:[%s1 + $0x280] sm:$0xff]
    %v136 = vld [vmem:[%s1 + $0x288] sm:$0xff]
    %v137 = vld [vmem:[%s1 + $0x290] sm:$0xff]
    %v138 = vld [vmem:[%s1 + $0x298] sm:$0xff]
    %v139 = vld [vmem:[%s1 + $0x2a0] sm:$0xff]
    %v140 = vld [vmem:[%s1 + $0x2a8] sm:$0xff]
    %v141 = vld [vmem:[%s1 + $0x2b0] sm:$0xff]
    %v142 = vld [vmem:[%s1 + $0x2b8] sm:$0xff]
    %v143 = vld [vmem:[%s1 + $0x2c0] sm:$0xff]
    %v144 = vld [vmem:[%s1 + $0x2c8] sm:$0xff]
    %v145 = vld [vmem:[%s1 + $0x2d0] sm:$0xff]
    %v146 = vld [vmem:[%s1 + $0x2d8] sm:$0xff]
    %v147 = vld [vmem:[%s1 + $0x2e0] sm:$0xff]
    %v148 = vld [vmem:[%s1 + $0x2e8] sm:$0xff]
    %v149 = vld [vmem:[%s1 + $0x2f0] sm:$0xff]
    %v150 = vld [vmem:[%s1 + $0x2f8] sm:$0xff]
    %v151 = vld [vmem:[%s1 + $0x300] sm:$0xff]
    %v152 = vld [vmem:[%s1 + $0x308] sm:$0xff]
    %v153 = vld [vmem:[%s1 + $0x310] sm:$0xff]
    %v154 = vld [vmem:[%s1 + $0x318] sm:$0xff]
    %v155 = vld [vmem:[%s1 + $0x320] sm:$0xff]
    %v156 = vld [vmem:[%s1 + $0x328] sm:$0xff]
    %v157 = vld [vmem:[%s1 + $0x330] sm:$0xff]
    %v158 = vld [vmem:[%s1 + $0x338] sm:$0xff]
    %v159 = vld [vmem:[%s1 + $0x340] sm:$0xff]
    %v160 = vld [vmem:[%s1 + $0x348] sm:$0xff]
    %v161 = vld [vmem:[%s1 + $0x350] sm:$0xff]
    %v162 = vld [vmem:[%s1 + $0x358] sm:$0xff]
    %v163 = vld [vmem:[%s1 + $0x360] sm:$0xff]
    %v164 = vld [vmem:[%s1 + $0x368] sm:$0xff]
    %v165 = vld [vmem:[%s1 + $0x370] sm:$0xff]
    %v166 = vld [vmem:[%s1 + $0x378] sm:$0xff]
    %v167 = vld [vmem:[%s1 + $0x380] sm:$0xff]
    %v168 = vld [vmem:[%s1 + $0x388] sm:$0xff]
    %v169 = vld [vmem:[%s1 + $0x390] sm:$0xff]
    %v170 = vld [vmem:[%s1 + $0x398] sm:$0xff]
    %v171 = vld [vmem:[%s1 + $0x3a0] sm:$0xff]
    %v172 = vld [vmem:[%s1 + $0x3a8] sm:$0xff]
    %v173 = vld [vmem:[%s1 + $0x3b0] sm:$0xff]
    %v174 = vld [vmem:[%s1 + $0x3b8] sm:$0xff]
    %v175 = vld [vmem:[%s1 + $0x3c0] sm:$0xff]
    %v176 = vld [vmem:[%s1 + $0x3c8] sm:$0xff]
    %v177 = vld [vmem:[%s1 + $0x3d0] sm:$0xff]
    %v178 = vld [vmem:[%s1 + $0x3d8] sm:$0xff]
    %v179 = vld [vmem:[%s1 + $0x3e0] sm:$0xff]
    %v180 = vld [vmem:[%s1 + $0x3e8] sm:$0xff]
    %v181 = vld [vmem:[%s1 + $0x3f0] sm:$0xff]
    %v182 = vld [vmem:[%s1 + $0x3f8] sm:$0xff]
    %v183 = vld [vmem:[%s1 + $0x400] sm:$0xff]
    %v184 = vld [vmem:[%s1 + $0x408] sm:$0xff]
    %v185 = vld [vmem:[%s1 + $0x410] sm:$0xff]
    %v186 = vld [vmem:[%s1 + $0x418] sm:$0xff]
    %v187 = vld [vmem:[%s1 + $0x420] sm:$0xff]
    %v188 = vld [vmem:[%s1 + $0x428] sm:$0xff]
    %v189 = vld [vmem:[%s1 + $0x430] sm:$0xff]
    %v190 = vld [vmem:[%s1 + $0x438] sm:$0xff]
    %v191 = vld [vmem:[%s1 + $0x440] sm:$0xff]
    %v192 = vld [vmem:[%s1 + $0x448] sm:$0xff]
    %v193 = vld [vmem:[%s1 + $0x450] sm:$0xff]
    %v194 = vld [vmem:[%s1 + $0x458] sm:$0xff]
    %v195 = vld [vmem:[%s1 + $0x460] sm:$0xff]
    %v196 = vld [vmem:[%s1 + $0x468] sm:$0xff]
    %v197 = vld [vmem:[%s1 + $0x470] sm:$0xff]
    %v198 = vld [vmem:[%s1 + $0x478] sm:$0xff]
    %v199 = vld [vmem:[%s1 + $0x480] sm:$0xff]
    %v200 = vld [vmem:[%s1 + $0x488] sm:$0xff]
    %v201 = vld [vmem:[%s1 + $0x490] sm:$0xff]
    %v202 = vld [vmem:[%s1 + $0x498] sm:$0xff]
    %v203 = vld [vmem:[%s1 + $0x4a0] sm:$0xff]
    %v204 = vld [vmem:[%s1 + $0x4a8] sm:$0xff]
    %v205 = vld [vmem:[%s1 + $0x4b0] sm:$0xff]
    %v206 = vld [vmem:[%s1 + $0x4b8] sm:$0xff]
    %v207 = vld [vmem:[%s1 + $0x4c0] sm:$0xff]
    %v208 = vld [vmem:[%s1 + $0x4c8] sm:$0xff]
    %v209 = vld [vmem:[%s1 + $0x4d0] sm:$0xff]
    %v210 = vld [vmem:[%s1 + $0x4d8] sm:$0xff]
    %v211 = vld [vmem:[%s1 + $0x4e0] sm:$0xff]
    %v212 = vld [vmem:[%s1 + $0x4e8] sm:$0xff]
    %v213 = vld [vmem:[%s1 + $0x4f0] sm:$0xff]
    %v214 = vld [vmem:[%s1 + $0x4f8] sm:$0xff]
    %v215 = vld [vmem:[%s1 + $0x500] sm:$0xff]
    %v216 = vld [vmem:[%s1 + $0x508] sm:$0xff]
    %v217 = vld [vmem:[%s1 + $0x510] sm:$0xff]
    %v218 = vld [vmem:[%s1 + $0x518] sm:$0xff]
    %v219 = vld [vmem:[%s1 + $0x520] sm:$0xff]
    %v220 = vld [vmem:[%s1 + $0x528] sm:$0xff]
    %v221 = vld [vmem:[%s1 + $0x530] sm:$0xff]
    %v222 = vld [vmem:[%s1 + $0x538] sm:$0xff]
    %v223 = vld [vmem:[%s1 + $0x540] sm:$0xff]
    %v224 = vld [vmem:[%s1 + $0x548] sm:$0xff]
    %v225 = vld [vmem:[%s1 + $0x550] sm:$0xff]
    %v226 = vld [vmem:[%s1 + $0x558] sm:$0xff]
    %v227 = vld [vmem:[%s1 + $0x560] sm:$0xff]
    %v228 = vld [vmem:[%s1 + $0x568] sm:$0xff]
    %v229 = vld [vmem:[%s1 + $0x570] sm:$0xff]
    %v230 = vld [vmem:[%s1 + $0x578] sm:$0xff]
    %v231 = vld [vmem:[%s1 + $0x580] sm:$0xff]
    %v232 = vld [vmem:[%s1 + $0x588] sm:$0xff]
    %v233 = vld [vmem:[%s1 + $0x590] sm:$0xff]
    %v234 = vld [vmem:[%s1 + $0x598] sm:$0xff]
    %v235 = vld [vmem:[%s1 + $0x5a0] sm:$0xff]
    %v236 = vld [vmem:[%s1 + $0x5a8] sm:$0xff]
    %v237 = vld [vmem:[%s1 + $0x5b0] sm:$0xff]
    %v238 = vld [vmem:[%s1 + $0x5b8] sm:$0xff]
    %v239 = vld [vmem:[%s1 + $0x5c0] sm:$0xff]
    %v240 = vld [vmem:[%s1 + $0x5c8] sm:$0xff]
    %v241 = vld [vmem:[%s1 + $0x5d0] sm:$0xff]
    %v242 = vld [vmem:[%s1 + $0x5d8] sm:$0xff]
    %v243 = vld [vmem:[%s1 + $0x5e0] sm:$0xff]
    %v244 = vld [vmem:[%s1 + $0x5e8] sm:$0xff]
    %v245 = vld [vmem:[%s1 + $0x5f0] sm:$0xff]
    %v246 = vld [vmem:[%s1 + $0x5f8] sm:$0xff]
    %v247 = vld [vmem:[%s1 + $0x600] sm:$0xff]
    %v248 = vld [vmem:[%s1 + $0x608] sm:$0xff]
    %v249 = vld [vmem:[%s1 + $0x610] sm:$0xff]
    %v250 = vld [vmem:[%s1 + $0x618] sm:$0xff]
    %v251 = vld [vmem:[%s2] sm:$0x1]
    %v253 = vlaneseq
    %v254 = vshrl.u32 %v253, 7
    %v255 = vsub.s32 0, %v254
    %v256 = vrot.slane %v251, %v255
    %vm258 = vcmask 261120
    %v260 = vsel %vm258, %v41, 0
    %v263 = vsel %vm258, %v54, 0
    %265 = vmatprep.subr.mxu0 0.0
    %266 = vmatpush1.msra.mxu0 %v55
    %267 = vmatprep.subr.mxu0 0.0
    %268 = vmatpush1.msra.mxu0 %v56
    %269 = vmatprep.subr.mxu0 0.0
    %270 = vmatpush1.msra.mxu0 %v57
    %271 = vmatprep.subr.mxu0 0.0
    %272 = vmatpush1.msra.mxu0 %v58
    %273 = vmatprep.subr.mxu0 0.0
    %274 = vmatpush1.msra.mxu0 %v59
    %275 = vmatprep.subr.mxu0 0.0
    %276 = vmatpush1.msra.mxu0 %v60
    %277 = vmatprep.subr.mxu0 0.0
    %278 = vmatpush1.msra.mxu0 %v61
    %279 = vmatprep.subr.mxu0 0.0
    %280 = vmatpush1.msra.mxu0 %v62
    %281 = vmatprep.subr.mxu0 0.0
    %282 = vmatpush1.msra.mxu0 %v63
    %283 = vmatprep.subr.mxu0 0.0
    %284 = vmatpush1.msra.mxu0 %v64
    %285 = vmatprep.subr.mxu0 0.0
    %286 = vmatpush1.msra.mxu0 %v65
    %287 = vmatprep.subr.mxu0 0.0
    %288 = vmatpush1.msra.mxu0 %v66
    %289 = vmatprep.subr.mxu0 0.0
    %290 = vmatpush1.msra.mxu0 %v67
    %291 = vmatprep.subr.mxu0 0.0
    %292 = vmatpush1.msra.mxu0 %v68
    %293 = vmatprep.subr.mxu0 0.0
    %294 = vmatpush1.msra.mxu0 %v69
    %295 = vmatprep.subr.mxu0 0.0
    %296 = vmatpush1.msra.mxu0 %v70
    %297 = vmatprep.subr.mxu0 0.0
    %298 = vmatpush1.msra.mxu0 %v71
    %299 = vmatprep.subr.mxu0 0.0
    %300 = vmatpush1.msra.mxu0 %v72
    %301 = vmatprep.subr.mxu0 0.0
    %302 = vmatpush1.msra.mxu0 %v73
    %303 = vmatprep.subr.mxu0 0.0
    %304 = vmatpush1.msra.mxu0 %v74
    %305 = vmatprep.subr.mxu0 0.0
    %306 = vmatpush1.msra.mxu0 %v75
    %307 = vmatprep.subr.mxu0 0.0
    %308 = vmatpush1.msra.mxu0 %v76
    %309 = vmatprep.subr.mxu0 0.0
    %310 = vmatpush1.msra.mxu0 %v77
    %311 = vmatprep.subr.mxu0 0.0
    %312 = vmatpush1.msra.mxu0 %v78
    %313 = vmatprep.subr.mxu0 0.0
    %314 = vmatpush1.msra.mxu0 %v79
    %315 = vmatprep.subr.mxu0 0.0
    %316 = vmatpush1.msra.mxu0 %v80
    %317 = vmatprep.subr.mxu0 0.0
    %318 = vmatpush1.msra.mxu0 %v81
    %319 = vmatprep.subr.mxu0 0.0
    %320 = vmatpush1.msra.mxu0 %v82
    %321 = vmatprep.subr.mxu0 0.0
    %322 = vmatpush1.msra.mxu0 %v83
    %323 = vmatprep.subr.mxu0 0.0
    %324 = vmatpush1.msra.mxu0 %v84
    %325 = vmatprep.subr.mxu0 0.0
    %326 = vmatpush1.msra.mxu0 %v85
    %327 = vmatprep.subr.mxu0 0.0
    %328 = vmatpush1.msra.mxu0 %v86
    %329 = vmatprep.mubr.f32.mxu0 %v30
    %330 = vmatmul.mubr.f32.gmra.mrb[0].mxu0 %v29
    %v331 = vpop.f32.mrb[0].mxu0
    %v332 = vadd.f32 %v256, %v331
    %v333 = vpop.f32.mrb[0].mxu0
    %334 = vmatprep.mubr.f32.mxu0 %v43
    %335 = vmatmul.mubr.f32.gmra.mrb[0].mxu0 %v42
    %v336 = vpop.f32.mrb[0].mxu0
    %v337 = vadd.f32 %v256, %v336
    %v338 = vpop.f32.mrb[0].mxu0
    %339 = vdwg.mxu0
    %340 = vmatprep.subr.mxu0 0.0
    %341 = vmatpush1.msra.mxu0 %v87
    %342 = vmatprep.subr.mxu0 0.0
    %343 = vmatpush1.msra.mxu0 %v88
    %344 = vmatprep.subr.mxu0 0.0
    %345 = vmatpush1.msra.mxu0 %v89
    %346 = vmatprep.subr.mxu0 0.0
    %347 = vmatpush1.msra.mxu0 %v90
    %348 = vmatprep.subr.mxu0 0.0
    %349 = vmatpush1.msra.mxu0 %v91
    %350 = vmatprep.subr.mxu0 0.0
    %351 = vmatpush1.msra.mxu0 %v92
    %352 = vmatprep.subr.mxu0 0.0
    %353 = vmatpush1.msra.mxu0 %v93
    %354 = vmatprep.subr.mxu0 0.0
    %355 = vmatpush1.msra.mxu0 %v94
    %356 = vmatprep.subr.mxu0 0.0
    %357 = vmatpush1.msra.mxu0 %v95
    %358 = vmatprep.subr.mxu0 0.0
    %359 = vmatpush1.msra.mxu0 %v96
    %360 = vmatprep.subr.mxu0 0.0
    %361 = vmatpush1.msra.mxu0 %v97
    %362 = vmatprep.subr.mxu0 0.0
    %363 = vmatpush1.msra.mxu0 %v98
    %364 = vmatprep.subr.mxu0 0.0
    %365 = vmatpush1.msra.mxu0 %v99
    %366 = vmatprep.subr.mxu0 0.0
    %367 = vmatpush1.msra.mxu0 %v100
    %368 = vmatprep.subr.mxu0 0.0
    %369 = vmatpush1.msra.mxu0 %v101
    %370 = vmatprep.subr.mxu0 0.0
    %371 = vmatpush1.msra.mxu0 %v102
    %372 = vmatprep.subr.mxu0 0.0
    %373 = vmatpush1.msra.mxu0 %v103
    %374 = vmatprep.subr.mxu0 0.0
    %375 = vmatpush1.msra.mxu0 %v104
    %376 = vmatprep.subr.mxu0 0.0
    %377 = vmatpush1.msra.mxu0 %v105
    %378 = vmatprep.subr.mxu0 0.0
    %379 = vmatpush1.msra.mxu0 %v106
    %380 = vmatprep.subr.mxu0 0.0
    %381 = vmatpush1.msra.mxu0 %v107
    %382 = vmatprep.subr.mxu0 0.0
    %383 = vmatpush1.msra.mxu0 %v108
    %384 = vmatprep.subr.mxu0 0.0
    %385 = vmatpush1.msra.mxu0 %v109
    %386 = vmatprep.subr.mxu0 0.0
    %387 = vmatpush1.msra.mxu0 %v110
    %388 = vmatprep.subr.mxu0 0.0
    %389 = vmatpush1.msra.mxu0 %v111
    %390 = vmatprep.subr.mxu0 0.0
    %391 = vmatpush1.msra.mxu0 %v112
    %392 = vmatprep.subr.mxu0 0.0
    %393 = vmatpush1.msra.mxu0 %v113
    %394 = vmatprep.subr.mxu0 0.0
    %395 = vmatpush1.msra.mxu0 %v114
    %396 = vmatprep.subr.mxu0 0.0
    %397 = vmatpush1.msra.mxu0 %v115
    %398 = vmatprep.subr.mxu0 0.0
    %399 = vmatpush1.msra.mxu0 %v116
    %400 = vmatprep.subr.mxu0 0.0
    %401 = vmatpush1.msra.mxu0 %v117
    %402 = vmatprep.subr.mxu0 0.0
    %403 = vmatpush1.msra.mxu0 %v118
    %404 = vmatprep.mubr.f32.mxu0 %v32
    %405 = vmatmul.mubr.f32.gmra.mrb[0].mxu0 %v31
    %v406 = vpop.f32.mrb[0].mxu0
    %v407 = vadd.f32 %v332, %v406
    %v408 = vpop.f32.mrb[0].mxu0
    %409 = vmatprep.mubr.f32.mxu0 %v45
    %410 = vmatmul.mubr.f32.gmra.mrb[0].mxu0 %v44
    %v411 = vpop.f32.mrb[0].mxu0
    %v412 = vadd.f32 %v337, %v411
    %v413 = vpop.f32.mrb[0].mxu0
    %414 = vdwg.mxu0
    %415 = vmatprep.subr.mxu0 0.0
    %416 = vmatpush1.msra.mxu0 %v119
    %417 = vmatprep.subr.mxu0 0.0
    %418 = vmatpush1.msra.mxu0 %v120
    %419 = vmatprep.subr.mxu0 0.0
    %420 = vmatpush1.msra.mxu0 %v121
    %421 = vmatprep.subr.mxu0 0.0
    %422 = vmatpush1.msra.mxu0 %v122
    %423 = vmatprep.subr.mxu0 0.0
    %424 = vmatpush1.msra.mxu0 %v123
    %425 = vmatprep.subr.mxu0 0.0
    %426 = vmatpush1.msra.mxu0 %v124
    %427 = vmatprep.subr.mxu0 0.0
    %428 = vmatpush1.msra.mxu0 %v125
    %429 = vmatprep.subr.mxu0 0.0
    %430 = vmatpush1.msra.mxu0 %v126
    %431 = vmatprep.subr.mxu0 0.0
    %432 = vmatpush1.msra.mxu0 %v127
    %433 = vmatprep.subr.mxu0 0.0
    %434 = vmatpush1.msra.mxu0 %v128
    %435 = vmatprep.subr.mxu0 0.0
    %436 = vmatpush1.msra.mxu0 %v129
    %437 = vmatprep.subr.mxu0 0.0
    %438 = vmatpush1.msra.mxu0 %v130
    %439 = vmatprep.subr.mxu0 0.0
    %440 = vmatpush1.msra.mxu0 %v131
    %441 = vmatprep.subr.mxu0 0.0
    %442 = vmatpush1.msra.mxu0 %v132
    %443 = vmatprep.subr.mxu0 0.0
    %444 = vmatpush1.msra.mxu0 %v133
    %445 = vmatprep.subr.mxu0 0.0
    %446 = vmatpush1.msra.mxu0 %v134
    %447 = vmatprep.subr.mxu0 0.0
    %448 = vmatpush1.msra.mxu0 %v135
    %449 = vmatprep.subr.mxu0 0.0
    %450 = vmatpush1.msra.mxu0 %v136
    %451 = vmatprep.subr.mxu0 0.0
    %452 = vmatpush1.msra.mxu0 %v137
    %453 = vmatprep.subr.mxu0 0.0
    %454 = vmatpush1.msra.mxu0 %v138
    %455 = vmatprep.subr.mxu0 0.0
    %456 = vmatpush1.msra.mxu0 %v139
    %457 = vmatprep.subr.mxu0 0.0
    %458 = vmatpush1.msra.mxu0 %v140
    %459 = vmatprep.subr.mxu0 0.0
    %460 = vmatpush1.msra.mxu0 %v141
    %461 = vmatprep.subr.mxu0 0.0
    %462 = vmatpush1.msra.mxu0 %v142
    %463 = vmatprep.subr.mxu0 0.0
    %464 = vmatpush1.msra.mxu0 %v143
    %465 = vmatprep.subr.mxu0 0.0
    %466 = vmatpush1.msra.mxu0 %v144
    %467 = vmatprep.subr.mxu0 0.0
    %468 = vmatpush1.msra.mxu0 %v145
    %469 = vmatprep.subr.mxu0 0.0
    %470 = vmatpush1.msra.mxu0 %v146
    %471 = vmatprep.subr.mxu0 0.0
    %472 = vmatpush1.msra.mxu0 %v147
    %473 = vmatprep.subr.mxu0 0.0
    %474 = vmatpush1.msra.mxu0 %v148
    %475 = vmatprep.subr.mxu0 0.0
    %476 = vmatpush1.msra.mxu0 %v149
    %477 = vmatprep.subr.mxu0 0.0
    %478 = vmatpush1.msra.mxu0 %v150
    %479 = vmatprep.mubr.f32.mxu0 %v34
    %480 = vmatmul.mubr.f32.gmra.mrb[0].mxu0 %v33
    %v481 = vpop.f32.mrb[0].mxu0
    %v482 = vadd.f32 %v407, %v481
    %v483 = vpop.f32.mrb[0].mxu0
    %484 = vmatprep.mubr.f32.mxu0 %v47
    %485 = vmatmul.mubr.f32.gmra.mrb[0].mxu0 %v46
    %v486 = vpop.f32.mrb[0].mxu0
    %v487 = vadd.f32 %v412, %v486
    %v488 = vpop.f32.mrb[0].mxu0
    %489 = vdwg.mxu0
    %490 = vmatprep.subr.mxu0 0.0
    %491 = vmatpush1.msra.mxu0 %v151
    %492 = vmatprep.subr.mxu0 0.0
    %493 = vmatpush1.msra.mxu0 %v152
    %494 = vmatprep.subr.mxu0 0.0
    %495 = vmatpush1.msra.mxu0 %v153
    %496 = vmatprep.subr.mxu0 0.0
    %497 = vmatpush1.msra.mxu0 %v154
    %498 = vmatprep.subr.mxu0 0.0
    %499 = vmatpush1.msra.mxu0 %v155
    %500 = vmatprep.subr.mxu0 0.0
    %501 = vmatpush1.msra.mxu0 %v156
    %502 = vmatprep.subr.mxu0 0.0
    %503 = vmatpush1.msra.mxu0 %v157
    %504 = vmatprep.subr.mxu0 0.0
    %505 = vmatpush1.msra.mxu0 %v158
    %506 = vmatprep.subr.mxu0 0.0
    %507 = vmatpush1.msra.mxu0 %v159
    %508 = vmatprep.subr.mxu0 0.0
    %509 = vmatpush1.msra.mxu0 %v160
    %510 = vmatprep.subr.mxu0 0.0
    %511 = vmatpush1.msra.mxu0 %v161
    %512 = vmatprep.subr.mxu0 0.0
    %513 = vmatpush1.msra.mxu0 %v162
    %514 = vmatprep.subr.mxu0 0.0
    %515 = vmatpush1.msra.mxu0 %v163
    %516 = vmatprep.subr.mxu0 0.0
    %517 = vmatpush1.msra.mxu0 %v164
    %518 = vmatprep.subr.mxu0 0.0
    %519 = vmatpush1.msra.mxu0 %v165
    %520 = vmatprep.subr.mxu0 0.0
    %521 = vmatpush1.msra.mxu0 %v166
    %522 = vmatprep.subr.mxu0 0.0
    %523 = vmatpush1.msra.mxu0 %v167
    %524 = vmatprep.subr.mxu0 0.0
    %525 = vmatpush1.msra.mxu0 %v168
    %526 = vmatprep.subr.mxu0 0.0
    %527 = vmatpush1.msra.mxu0 %v169
    %528 = vmatprep.subr.mxu0 0.0
    %529 = vmatpush1.msra.mxu0 %v170
    %530 = vmatprep.subr.mxu0 0.0
    %531 = vmatpush1.msra.mxu0 %v171
    %532 = vmatprep.subr.mxu0 0.0
    %533 = vmatpush1.msra.mxu0 %v172
    %534 = vmatprep.subr.mxu0 0.0
    %535 = vmatpush1.msra.mxu0 %v173
    %536 = vmatprep.subr.mxu0 0.0
    %537 = vmatpush1.msra.mxu0 %v174
    %538 = vmatprep.subr.mxu0 0.0
    %539 = vmatpush1.msra.mxu0 %v175
    %540 = vmatprep.subr.mxu0 0.0
    %541 = vmatpush1.msra.mxu0 %v176
    %542 = vmatprep.subr.mxu0 0.0
    %543 = vmatpush1.msra.mxu0 %v177
    %544 = vmatprep.subr.mxu0 0.0
    %545 = vmatpush1.msra.mxu0 %v178
    %546 = vmatprep.subr.mxu0 0.0
    %547 = vmatpush1.msra.mxu0 %v179
    %548 = vmatprep.subr.mxu0 0.0
    %549 = vmatpush1.msra.mxu0 %v180
    %550 = vmatprep.subr.mxu0 0.0
    %551 = vmatpush1.msra.mxu0 %v181
    %552 = vmatprep.subr.mxu0 0.0
    %553 = vmatpush1.msra.mxu0 %v182
    %554 = vmatprep.mubr.f32.mxu0 %v36
    %555 = vmatmul.mubr.f32.gmra.mrb[0].mxu0 %v35
    %v556 = vpop.f32.mrb[0].mxu0
    %v557 = vadd.f32 %v482, %v556
    %v558 = vpop.f32.mrb[0].mxu0
    %559 = vmatprep.mubr.f32.mxu0 %v49
    %560 = vmatmul.mubr.f32.gmra.mrb[0].mxu0 %v48
    %v561 = vpop.f32.mrb[0].mxu0
    %v562 = vadd.f32 %v487, %v561
    %v563 = vpop.f32.mrb[0].mxu0
    %564 = vdwg.mxu0
    %565 = vmatprep.subr.mxu0 0.0
    %566 = vmatpush1.msra.mxu0 %v183
    %567 = vmatprep.subr.mxu0 0.0
    %568 = vmatpush1.msra.mxu0 %v184
    %569 = vmatprep.subr.mxu0 0.0
    %570 = vmatpush1.msra.mxu0 %v185
    %571 = vmatprep.subr.mxu0 0.0
    %572 = vmatpush1.msra.mxu0 %v186
    %573 = vmatprep.subr.mxu0 0.0
    %574 = vmatpush1.msra.mxu0 %v187
    %575 = vmatprep.subr.mxu0 0.0
    %576 = vmatpush1.msra.mxu0 %v188
    %577 = vmatprep.subr.mxu0 0.0
    %578 = vmatpush1.msra.mxu0 %v189
    %579 = vmatprep.subr.mxu0 0.0
    %580 = vmatpush1.msra.mxu0 %v190
    %581 = vmatprep.subr.mxu0 0.0
    %582 = vmatpush1.msra.mxu0 %v191
    %583 = vmatprep.subr.mxu0 0.0
    %584 = vmatpush1.msra.mxu0 %v192
    %585 = vmatprep.subr.mxu0 0.0
    %586 = vmatpush1.msra.mxu0 %v193
    %587 = vmatprep.subr.mxu0 0.0
    %588 = vmatpush1.msra.mxu0 %v194
    %589 = vmatprep.subr.mxu0 0.0
    %590 = vmatpush1.msra.mxu0 %v195
    %591 = vmatprep.subr.mxu0 0.0
    %592 = vmatpush1.msra.mxu0 %v196
    %593 = vmatprep.subr.mxu0 0.0
    %594 = vmatpush1.msra.mxu0 %v197
    %595 = vmatprep.subr.mxu0 0.0
    %596 = vmatpush1.msra.mxu0 %v198
    %597 = vmatprep.subr.mxu0 0.0
    %598 = vmatpush1.msra.mxu0 %v199
    %599 = vmatprep.subr.mxu0 0.0
    %600 = vmatpush1.msra.mxu0 %v200
    %601 = vmatprep.subr.mxu0 0.0
    %602 = vmatpush1.msra.mxu0 %v201
    %603 = vmatprep.subr.mxu0 0.0
    %604 = vmatpush1.msra.mxu0 %v202
    %605 = vmatprep.subr.mxu0 0.0
    %606 = vmatpush1.msra.mxu0 %v203
    %607 = vmatprep.subr.mxu0 0.0
    %608 = vmatpush1.msra.mxu0 %v204
    %609 = vmatprep.subr.mxu0 0.0
    %610 = vmatpush1.msra.mxu0 %v205
    %611 = vmatprep.subr.mxu0 0.0
    %612 = vmatpush1.msra.mxu0 %v206
    %613 = vmatprep.subr.mxu0 0.0
    %614 = vmatpush1.msra.mxu0 %v207
    %615 = vmatprep.subr.mxu0 0.0
    %616 = vmatpush1.msra.mxu0 %v208
    %617 = vmatprep.subr.mxu0 0.0
    %618 = vmatpush1.msra.mxu0 %v209
    %619 = vmatprep.subr.mxu0 0.0
    %620 = vmatpush1.msra.mxu0 %v210
    %621 = vmatprep.subr.mxu0 0.0
    %622 = vmatpush1.msra.mxu0 %v211
    %623 = vmatprep.subr.mxu0 0.0
    %624 = vmatpush1.msra.mxu0 %v212
    %625 = vmatprep.subr.mxu0 0.0
    %626 = vmatpush1.msra.mxu0 %v213
    %627 = vmatprep.subr.mxu0 0.0
    %628 = vmatpush1.msra.mxu0 %v214
    %629 = vmatprep.mubr.f32.mxu0 %v38
    %630 = vmatmul.mubr.f32.gmra.mrb[0].mxu0 %v37
    %v631 = vpop.f32.mrb[0].mxu0
    %v632 = vadd.f32 %v557, %v631
    %v633 = vpop.f32.mrb[0].mxu0
    %634 = vmatprep.mubr.f32.mxu0 %v51
    %635 = vmatmul.mubr.f32.gmra.mrb[0].mxu0 %v50
    %v636 = vpop.f32.mrb[0].mxu0
    %v637 = vadd.f32 %v562, %v636
    %v638 = vpop.f32.mrb[0].mxu0
    %639 = vdwg.mxu0
    %640 = vmatprep.subr.mxu0 0.0
    %641 = vmatpush1.msra.mxu0 %v215
    %642 = vmatprep.subr.mxu0 0.0
    %643 = vmatpush1.msra.mxu0 %v216
    %644 = vmatprep.subr.mxu0 0.0
    %645 = vmatpush1.msra.mxu0 %v217
    %646 = vmatprep.subr.mxu0 0.0
    %647 = vmatpush1.msra.mxu0 %v218
    %648 = vmatprep.subr.mxu0 0.0
    %649 = vmatpush1.msra.mxu0 %v219
    %650 = vmatprep.subr.mxu0 0.0
    %651 = vmatpush1.msra.mxu0 %v220
    %652 = vmatprep.subr.mxu0 0.0
    %653 = vmatpush1.msra.mxu0 %v221
    %654 = vmatprep.subr.mxu0 0.0
    %655 = vmatpush1.msra.mxu0 %v222
    %656 = vmatprep.subr.mxu0 0.0
    %657 = vmatpush1.msra.mxu0 %v223
    %658 = vmatprep.subr.mxu0 0.0
    %659 = vmatpush1.msra.mxu0 %v224
    %660 = vmatprep.subr.mxu0 0.0
    %661 = vmatpush1.msra.mxu0 %v225
    %662 = vmatprep.subr.mxu0 0.0
    %663 = vmatpush1.msra.mxu0 %v226
    %664 = vmatprep.subr.mxu0 0.0
    %665 = vmatpush1.msra.mxu0 %v227
    %666 = vmatprep.subr.mxu0 0.0
    %667 = vmatpush1.msra.mxu0 %v228
    %668 = vmatprep.subr.mxu0 0.0
    %669 = vmatpush1.msra.mxu0 %v229
    %670 = vmatprep.subr.mxu0 0.0
    %671 = vmatpush1.msra.mxu0 %v230
    %672 = vmatprep.subr.mxu0 0.0
    %673 = vmatpush1.msra.mxu0 %v231
    %674 = vmatprep.subr.mxu0 0.0
    %675 = vmatpush1.msra.mxu0 %v232
    %676 = vmatprep.subr.mxu0 0.0
    %677 = vmatpush1.msra.mxu0 %v233
    %678 = vmatprep.subr.mxu0 0.0
    %679 = vmatpush1.msra.mxu0 %v234
    %680 = vmatprep.subr.mxu0 0.0
    %681 = vmatpush1.msra.mxu0 %v235
    %682 = vmatprep.subr.mxu0 0.0
    %683 = vmatpush1.msra.mxu0 %v236
    %684 = vmatprep.subr.mxu0 0.0
    %685 = vmatpush1.msra.mxu0 %v237
    %686 = vmatprep.subr.mxu0 0.0
    %687 = vmatpush1.msra.mxu0 %v238
    %688 = vmatprep.subr.mxu0 0.0
    %689 = vmatpush1.msra.mxu0 %v239
    %690 = vmatprep.subr.mxu0 0.0
    %691 = vmatpush1.msra.mxu0 %v240
    %692 = vmatprep.subr.mxu0 0.0
    %693 = vmatpush1.msra.mxu0 %v241
    %694 = vmatprep.subr.mxu0 0.0
    %695 = vmatpush1.msra.mxu0 %v242
    %696 = vmatprep.subr.mxu0 0.0
    %697 = vmatpush1.msra.mxu0 %v243
    %698 = vmatprep.subr.mxu0 0.0
    %699 = vmatpush1.msra.mxu0 %v244
    %700 = vmatprep.subr.mxu0 0.0
    %701 = vmatpush1.msra.mxu0 %v245
    %702 = vmatprep.subr.mxu0 0.0
    %703 = vmatpush1.msra.mxu0 %v246
    %704 = vmatprep.mubr.f32.mxu0 %v40
    %705 = vmatmul.mubr.f32.gmra.mrb[0].mxu0 %v39
    %v706 = vpop.f32.mrb[0].mxu0
    %v707 = vadd.f32 %v632, %v706
    %v708 = vpop.f32.mrb[0].mxu0
    %709 = vmatprep.mubr.f32.mxu0 %v53
    %710 = vmatmul.mubr.f32.gmra.mrb[0].mxu0 %v52
    %v711 = vpop.f32.mrb[0].mxu0
    %v712 = vadd.f32 %v637, %v711
    %v713 = vpop.f32.mrb[0].mxu0
    %714 = vdwg.mxu0
    %715 = vmatprep.subr.mxu0 0.0
    %716 = vmatpush1.msra.mxu0 %v247
    %717 = vmatprep.subr.mxu0 0.0
    %718 = vmatpush1.msra.mxu0 %v248
    %719 = vmatprep.subr.mxu0 0.0
    %720 = vmatpush1.msra.mxu0 %v249
    %721 = vmatprep.subr.mxu0 0.0
    %722 = vmatpush1.msra.mxu0 %v250
    %723 = vmatprep.subr.mxu0 0.0
    %724 = vmatpush1.msra.mxu0 0.0
    %725 = vmatprep.subr.mxu0 0.0
    %726 = vmatpush1.msra.mxu0 0.0
    %727 = vmatprep.subr.mxu0 0.0
    %728 = vmatpush1.msra.mxu0 0.0
    %729 = vmatprep.subr.mxu0 0.0
    %730 = vmatpush1.msra.mxu0 0.0
    %731 = vmatprep.subr.mxu0 0.0
    %732 = vmatpush1.msra.mxu0 0.0
    %733 = vmatprep.subr.mxu0 0.0
    %734 = vmatpush1.msra.mxu0 0.0
    %735 = vmatprep.subr.mxu0 0.0
    %736 = vmatpush1.msra.mxu0 0.0
    %737 = vmatprep.subr.mxu0 0.0
    %738 = vmatpush1.msra.mxu0 0.0
    %739 = vmatprep.subr.mxu0 0.0
    %740 = vmatpush1.msra.mxu0 0.0
    %741 = vmatprep.subr.mxu0 0.0
    %742 = vmatpush1.msra.mxu0 0.0
    %743 = vmatprep.subr.mxu0 0.0
    %744 = vmatpush1.msra.mxu0 0.0
    %745 = vmatprep.subr.mxu0 0.0
    %746 = vmatpush1.msra.mxu0 0.0
    %747 = vmatprep.subr.mxu0 0.0
    %748 = vmatpush1.msra.mxu0 0.0
    %749 = vmatprep.subr.mxu0 0.0
    %750 = vmatpush1.msra.mxu0 0.0
    %751 = vmatprep.subr.mxu0 0.0
    %752 = vmatpush1.msra.mxu0 0.0
    %753 = vmatprep.subr.mxu0 0.0
    %754 = vmatpush1.msra.mxu0 0.0
    %755 = vmatprep.subr.mxu0 0.0
    %756 = vmatpush1.msra.mxu0 0.0
    %757 = vmatprep.subr.mxu0 0.0
    %758 = vmatpush1.msra.mxu0 0.0
    %759 = vmatprep.subr.mxu0 0.0
    %760 = vmatpush1.msra.mxu0 0.0
    %761 = vmatprep.subr.mxu0 0.0
    %762 = vmatpush1.msra.mxu0 0.0
    %763 = vmatprep.subr.mxu0 0.0
    %764 = vmatpush1.msra.mxu0 0.0
    %765 = vmatprep.subr.mxu0 0.0
    %766 = vmatpush1.msra.mxu0 0.0
    %767 = vmatprep.subr.mxu0 0.0
    %768 = vmatpush1.msra.mxu0 0.0
    %769 = vmatprep.subr.mxu0 0.0
    %770 = vmatpush1.msra.mxu0 0.0
    %771 = vmatprep.subr.mxu0 0.0
    %772 = vmatpush1.msra.mxu0 0.0
    %773 = vmatprep.subr.mxu0 0.0
    %774 = vmatpush1.msra.mxu0 0.0
    %775 = vmatprep.subr.mxu0 0.0
    %776 = vmatpush1.msra.mxu0 0.0
    %777 = vmatprep.subr.mxu0 0.0
    %778 = vmatpush1.msra.mxu0 0.0
    %779 = vmatprep.mubr.f32.mxu0 0.0
    %780 = vmatmul.mubr.f32.gmra.mrb[0].mxu0 %v260
    %v781 = vpop.f32.mrb[0].mxu0
    %v782 = vadd.f32 %v707, %v781
    %v783 = vpop.f32.mrb[0].mxu0
    %784 = vmatprep.mubr.f32.mxu0 0.0
    %785 = vmatmul.mubr.f32.gmra.mrb[0].mxu0 %v263
    %v786 = vpop.f32.mrb[0].mxu0
    %v787 = vadd.f32 %v712, %v786
    %v788 = vpop.f32.mrb[0].mxu0
    %789 = vdwg.mxu0
    %v790 = vmax.f32 %v782, 0.0
    %v791 = vmax.f32 %v787, 0.0
    %v792 = vld [vmem:[%s3] sm:$0xff]
    %v793 = vld [vmem:[%s3 + $0x8] sm:$0xff]
    %v794 = vld [vmem:[%s3 + $0x10] sm:$0xff]
    %v795 = vld [vmem:[%s3 + $0x18] sm:$0xff]
    %v796 = vld [vmem:[%s3 + $0x20] sm:$0xff]
    %v797 = vld [vmem:[%s3 + $0x28] sm:$0xff]
    %v798 = vld [vmem:[%s3 + $0x30] sm:$0xff]
    %v799 = vld [vmem:[%s3 + $0x38] sm:$0xff]
    %v800 = vld [vmem:[%s3 + $0x40] sm:$0xff]
    %v801 = vld [vmem:[%s3 + $0x48] sm:$0xff]
    %v802 = vld [vmem:[%s3 + $0x50] sm:$0xff]
    %v803 = vld [vmem:[%s3 + $0x58] sm:$0xff]
    %v804 = vld [vmem:[%s3 + $0x60] sm:$0xff]
    %v805 = vld [vmem:[%s3 + $0x68] sm:$0xff]
    %v806 = vld [vmem:[%s3 + $0x70] sm:$0xff]
    %v807 = vld [vmem:[%s3 + $0x78] sm:$0xff]
    %v808 = vld [vmem:[%s4] sm:$0x1]
    %v810 = vlaneseq
    %v811 = vshrl.u32 %v810, 7
    %v812 = vsub.s32 0, %v811
    %v813 = vrot.slane %v808, %v812
    %815 = vmatprep.subr.mxu0 0.0
    %816 = vmatpush1.msra.mxu0 %v792
    %817 = vmatprep.subr.mxu0 0.0
    %818 = vmatpush1.msra.mxu0 %v793
    %819 = vmatprep.subr.mxu0 0.0
    %820 = vmatpush1.msra.mxu0 %v794
    %821 = vmatprep.subr.mxu0 0.0
    %822 = vmatpush1.msra.mxu0 %v795
    %823 = vmatprep.subr.mxu0 0.0
    %824 = vmatpush1.msra.mxu0 %v796
    %825 = vmatprep.subr.mxu0 0.0
    %826 = vmatpush1.msra.mxu0 %v797
    %827 = vmatprep.subr.mxu0 0.0
    %828 = vmatpush1.msra.mxu0 %v798
    %829 = vmatprep.subr.mxu0 0.0
    %830 = vmatpush1.msra.mxu0 %v799
    %831 = vmatprep.subr.mxu0 0.0
    %832 = vmatpush1.msra.mxu0 %v800
    %833 = vmatprep.subr.mxu0 0.0
    %834 = vmatpush1.msra.mxu0 %v801
    %835 = vmatprep.subr.mxu0 0.0
    %836 = vmatpush1.msra.mxu0 %v802
    %837 = vmatprep.subr.mxu0 0.0
    %838 = vmatpush1.msra.mxu0 %v803
    %839 = vmatprep.subr.mxu0 0.0
    %840 = vmatpush1.msra.mxu0 %v804
    %841 = vmatprep.subr.mxu0 0.0
    %842 = vmatpush1.msra.mxu0 %v805
    %843 = vmatprep.subr.mxu0 0.0
    %844 = vmatpush1.msra.mxu0 %v806
    %845 = vmatprep.subr.mxu0 0.0
    %846 = vmatpush1.msra.mxu0 %v807
    %847 = vmatprep.subr.mxu0 0.0
    %848 = vmatpush1.msra.mxu0 0.0
    %849 = vmatprep.subr.mxu0 0.0
    %850 = vmatpush1.msra.mxu0 0.0
    %851 = vmatprep.subr.mxu0 0.0
    %852 = vmatpush1.msra.mxu0 0.0
    %853 = vmatprep.subr.mxu0 0.0
    %854 = vmatpush1.msra.mxu0 0.0
    %855 = vmatprep.subr.mxu0 0.0
    %856 = vmatpush1.msra.mxu0 0.0
    %857 = vmatprep.subr.mxu0 0.0
    %858 = vmatpush1.msra.mxu0 0.0
    %859 = vmatprep.subr.mxu0 0.0
    %860 = vmatpush1.msra.mxu0 0.0
    %861 = vmatprep.subr.mxu0 0.0
    %862 = vmatpush1.msra.mxu0 0.0
    %863 = vmatprep.subr.mxu0 0.0
    %864 = vmatpush1.msra.mxu0 0.0
    %865 = vmatprep.subr.mxu0 0.0
    %866 = vmatpush1.msra.mxu0 0.0
    %867 = vmatprep.subr.mxu0 0.0
    %868 = vmatpush1.msra.mxu0 0.0
    %869 = vmatprep.subr.mxu0 0.0
    %870 = vmatpush1.msra.mxu0 0.0
    %871 = vmatprep.subr.mxu0 0.0
    %872 = vmatpush1.msra.mxu0 0.0
    %873 = vmatprep.subr.mxu0 0.0
    %874 = vmatpush1.msra.mxu0 0.0
    %875 = vmatprep.subr.mxu0 0.0
    %876 = vmatpush1.msra.mxu0 0.0
    %877 = vmatprep.subr.mxu0 0.0
    %878 = vmatpush1.msra.mxu0 0.0
    %879 = vmatprep.mubr.f32.mxu0 0.0
    %880 = vmatmul.mubr.f32.gmra.mrb[0].mxu0 %v790
    %v881 = vpop.f32.mrb[0].mxu0
    %v882 = vadd.f32 %v813, %v881
    %v883 = vpop.f32.mrb[0].mxu0
    %884 = vmatprep.mubr.f32.mxu0 0.0
    %885 = vmatmul.mubr.f32.gmra.mrb[0].mxu0 %v791
    %v886 = vpop.f32.mrb[0].mxu0
    %v887 = vadd.f32 %v813, %v886
    %v888 = vpop.f32.mrb[0].mxu0
    %889 = vdwg.mxu0
    %v890 = vmax.f32 %v882, 0.0
    %v891 = vmax.f32 %v887, 0.0
    %892 = vst [vmem:[#allocation2] sm:$0xff] %v890
    %893 = vst [vmem:[#allocation2 + $0x8] sm:$0xff] %v891
    %v894 = vld [vmem:[%s5] sm:$0xff]
    %v895 = vld [vmem:[%s5 + $0x8] sm:$0xff]
    %v896 = vld [vmem:[%s5 + $0x10] sm:$0xff]
    %v897 = vld [vmem:[%s5 + $0x18] sm:$0xff]
    %v898 = vld [vmem:[%s5 + $0x20] sm:$0xff]
    %v899 = vld [vmem:[%s5 + $0x28] sm:$0xff]
    %v900 = vld [vmem:[%s5 + $0x30] sm:$0xff]
    %v901 = vld [vmem:[%s5 + $0x38] sm:$0xff]
    %v902 = vld [vmem:[%s5 + $0x40] sm:$0xff]
    %v903 = vld [vmem:[%s5 + $0x48] sm:$0xff]
    %v904 = vld [vmem:[%s5 + $0x50] sm:$0xff]
    %v905 = vld [vmem:[%s5 + $0x58] sm:$0xff]
    %v906 = vld [vmem:[%s5 + $0x60] sm:$0xff]
    %v907 = vld [vmem:[%s5 + $0x68] sm:$0xff]
    %v908 = vld [vmem:[%s5 + $0x70] sm:$0xff]
    %v909 = vld [vmem:[%s5 + $0x78] sm:$0xff]
    %v910 = vld [vmem:[%s6] sm:$0x1]
    %v912 = vlaneseq
    %v913 = vshrl.u32 %v912, 7
    %v914 = vsub.s32 0, %v913
    %v915 = vrot.slane %v910, %v914
    %917 = vmatprep.subr.mxu0 0.0
    %918 = vmatpush1.msra.mxu0 %v894
    %919 = vmatprep.subr.mxu0 0.0
    %920 = vmatpush1.msra.mxu0 %v895
    %921 = vmatprep.subr.mxu0 0.0
    %922 = vmatpush1.msra.mxu0 %v896
    %923 = vmatprep.subr.mxu0 0.0
    %924 = vmatpush1.msra.mxu0 %v897
    %925 = vmatprep.subr.mxu0 0.0
    %926 = vmatpush1.msra.mxu0 %v898
    %927 = vmatprep.subr.mxu0 0.0
    %928 = vmatpush1.msra.mxu0 %v899
    %929 = vmatprep.subr.mxu0 0.0
    %930 = vmatpush1.msra.mxu0 %v900
    %931 = vmatprep.subr.mxu0 0.0
    %932 = vmatpush1.msra.mxu0 %v901
    %933 = vmatprep.subr.mxu0 0.0
    %934 = vmatpush1.msra.mxu0 %v902
    %935 = vmatprep.subr.mxu0 0.0
    %936 = vmatpush1.msra.mxu0 %v903
    %937 = vmatprep.subr.mxu0 0.0
    %938 = vmatpush1.msra.mxu0 %v904
    %939 = vmatprep.subr.mxu0 0.0
    %940 = vmatpush1.msra.mxu0 %v905
    %941 = vmatprep.subr.mxu0 0.0
    %942 = vmatpush1.msra.mxu0 %v906
    %943 = vmatprep.subr.mxu0 0.0
    %944 = vmatpush1.msra.mxu0 %v907
    %945 = vmatprep.subr.mxu0 0.0
    %946 = vmatpush1.msra.mxu0 %v908
    %947 = vmatprep.subr.mxu0 0.0
    %948 = vmatpush1.msra.mxu0 %v909
    %949 = vmatprep.subr.mxu0 0.0
    %950 = vmatpush1.msra.mxu0 0.0
    %951 = vmatprep.subr.mxu0 0.0
    %952 = vmatpush1.msra.mxu0 0.0
    %953 = vmatprep.subr.mxu0 0.0
    %954 = vmatpush1.msra.mxu0 0.0
    %955 = vmatprep.subr.mxu0 0.0
    %956 = vmatpush1.msra.mxu0 0.0
    %957 = vmatprep.subr.mxu0 0.0
    %958 = vmatpush1.msra.mxu0 0.0
    %959 = vmatprep.subr.mxu0 0.0
    %960 = vmatpush1.msra.mxu0 0.0
    %961 = vmatprep.subr.mxu0 0.0
    %962 = vmatpush1.msra.mxu0 0.0
    %963 = vmatprep.subr.mxu0 0.0
    %964 = vmatpush1.msra.mxu0 0.0
    %965 = vmatprep.subr.mxu0 0.0
    %966 = vmatpush1.msra.mxu0 0.0
    %967 = vmatprep.subr.mxu0 0.0
    %968 = vmatpush1.msra.mxu0 0.0
    %969 = vmatprep.subr.mxu0 0.0
    %970 = vmatpush1.msra.mxu0 0.0
    %971 = vmatprep.subr.mxu0 0.0
    %972 = vmatpush1.msra.mxu0 0.0
    %973 = vmatprep.subr.mxu0 0.0
    %974 = vmatpush1.msra.mxu0 0.0
    %975 = vmatprep.subr.mxu0 0.0
    %976 = vmatpush1.msra.mxu0 0.0
    %977 = vmatprep.subr.mxu0 0.0
    %978 = vmatpush1.msra.mxu0 0.0
    %979 = vmatprep.subr.mxu0 0.0
    %980 = vmatpush1.msra.mxu0 0.0
    %981 = vmatprep.mubr.f32.mxu0 0.0
    %982 = vmatmul.mubr.f32.gmra.mrb[0].mxu0 %v890
    %v983 = vpop.f32.mrb[0].mxu0
    %v984 = vadd.f32 %v915, %v983
    %v985 = vpop.f32.mrb[0].mxu0
    %986 = vmatprep.mubr.f32.mxu0 0.0
    %987 = vmatmul.mubr.f32.gmra.mrb[0].mxu0 %v891
    %v988 = vpop.f32.mrb[0].mxu0
    %v989 = vadd.f32 %v915, %v988
    %v990 = vpop.f32.mrb[0].mxu0
    %991 = vdwg.mxu0
    %992 = vst [vmem:[%s8] sm:$0xff] %v984
    %993 = vst [vmem:[%s8 + $0x8] sm:$0xff] %v989
    // Predicated region
    $region30: #{entity_rcnn_forward.5} parent=1 // pred_check
      _
    $region31: #{entity_rcnn_forward.5} parent=1 // pred_check_branch
      %995 = sbr.rel (0) target = $region33
    $region32: #{entity_rcnn_forward.5} parent=1 // pred_region
      %s997 = ssub.s32 256, 256
      %998 = vsyncadd [#allocation3], %s997
      %s999 = sshll.u32 [#allocation2], 4
      %s1000 = int_to_ptr.vmem [resolvable:$true] %s999
      %1005 = dma.vmem_to_hbm [thread:$0]  %s1000, 256, %s7, [#allocation3], 128, 128, 8
    $region33: #{entity_rcnn_forward.5} parent=1 // pred_fallthru
      _
    // Predicated region
    $region34: #{entity_rcnn_forward.5} parent=1 // pred_check
      _
    $region35: #{entity_rcnn_forward.5} parent=1 // pred_check_branch
      %1007 = sbr.rel (0) target = $region37
    $region36: #{entity_rcnn_forward.5} parent=1 // pred_region
      _
    $region37: #{entity_rcnn_forward.5} parent=1 // pred_fallthru
      _
    // Predicated region
    $region38: #{entity_rcnn_forward.5} parent=1 // pred_check
      _
    $region39: #{entity_rcnn_forward.5} parent=1 // pred_check_branch
      %1009 = sbr.rel (0) target = $region41
    $region40: #{entity_rcnn_forward.5} parent=1 // pred_region
      %1010 = dma.done [#allocation3], 256
    $region41: #{entity_rcnn_forward.5} parent=1 // pred_fallthru
      _
    // Predicated region
    $region42: #{entity_rcnn_forward.5} parent=1 // pred_check
      _
    $region43: #{entity_rcnn_forward.5} parent=1 // pred_check_branch
      %1012 = sbr.rel (0) target = $region45
    $region44: #{entity_rcnn_forward.5} parent=1 // pred_region
      _
    $region45: #{entity_rcnn_forward.5} parent=1 // pred_fallthru
      _
    %1013 = vsyncpa [#allocation3], 1

</llo_original>
